<compile_context>
chip_gen: v7x
topology: tpu7x:2x2x1
jax: 0.10.0
libtpu: 0.0.40
codegen_flags: <defaults>
</compile_context>

<pallas_src>
import functools
import math

import jax
import jax.numpy as jnp
from jax.experimental import pallas as pl
from jax.experimental.pallas import tpu as pltpu


# ---------------------------------------------------------------------------
# Fused encoder kernel: one grid step == one batch element, full forward pass.
# All activations are channel-first (C, L).
# ---------------------------------------------------------------------------
def _encoder_kernel(x_ref, mrow_ref, mlog_ref,
                    w_in_ref, b_in_ref,
                    ffw_ref, ffb_ref,
                    wqkv_ref, bqkv_ref,
                    wo_ref, bo_ref,
                    w1_ref, b1_ref,
                    w_out_ref, b_out_ref,
                    out_ref, feat_ref,
                    *, dilations, cq, alpha, att_dtype):
    f32 = jnp.float32
    x = x_ref[0]            # (C_in, L)
    m_row = mrow_ref[0]     # (1, L)  padding mask (broadcast over channels / queries)
    m_log = mlog_ref[0]     # (1, L)  precomputed log(mask + 1e-6)
    L = x.shape[1]
    scale = 1.0 / math.sqrt(cq)

    # Column index for the dilated-conv boundary masks (constant-folded per layer).
    col = jax.lax.broadcasted_iota(jnp.int32, (1, L), 1)

    # conv_1x1 input projection: (C, C_in) @ (C_in, L)
    feat = jnp.dot(w_in_ref[...], x, preferred_element_type=f32) + b_in_ref[...]

    for i, d in enumerate(dilations):          # static Python loop (num_layers)
        # ---- ConvFeedForward: dilated conv1d k=3, padding=d, dilation=d, ReLU ----
        # taps at l-d / l / l+d with zero padding: lane roll + constant boundary mask.
        x_l = jnp.where(col >= d, pltpu.roll(feat, shift=d, axis=1), 0.0)
        x_r = jnp.where(col < L - d, pltpu.roll(feat, shift=L - d, axis=1), 0.0)
        ff = jnp.dot(ffw_ref[i, 0], x_l, preferred_element_type=f32)
        ff = ff + jnp.dot(ffw_ref[i, 1], feat, preferred_element_type=f32)
        ff = ff + jnp.dot(ffw_ref[i, 2], x_r, preferred_element_type=f32)
        ff = jnp.maximum(ff + ffb_ref[i], 0.0)

        # ---- InstanceNorm1d (affine=False), stats over L per channel, eps=1e-5 ----
        # one-pass statistics: lane reduces, var = E[x^2] - mean^2.
        mean = jnp.mean(ff, axis=1, keepdims=True)
        ex2 = jnp.mean(ff * ff, axis=1, keepdims=True)
        nrm = (ff - mean) * jax.lax.rsqrt(ex2 - mean * mean + 1e-5)

        # ---- fused Q|K|V projection: one MXU pass, (cqkv, C) @ (C, L) ----
        qkv = jnp.dot(wqkv_ref[i], nrm, preferred_element_type=f32) + bqkv_ref[i]
        q = qkv[:cq].astype(att_dtype)          # (cq, L)
        k = qkv[cq:2 * cq].astype(att_dtype)    # (cq, L)
        v = qkv[2 * cq:].astype(att_dtype)      # (cv, L)

        # ---- scalar-dot attention with additive log padding mask ----
        # energy[qi, ki] = sum_c q[c, qi] * k[c, ki]
        energy = jax.lax.dot_general(q, k, (((0,), (0,)), ((), ())),
                                     preferred_element_type=f32) * scale
        att = energy + m_log
        att = att - jnp.max(att, axis=-1, keepdims=True)
        p = jnp.exp(att)
        p = p * pl.reciprocal(jnp.sum(p, axis=-1, keepdims=True), approx=True)
        p = p * m_row
        # att_v[c, qi] = sum_k v[c, k] * p[qi, k]
        att_v = jax.lax.dot_general(v, p.astype(att_dtype),
                                    (((1,), (1,)), ((), ())),
                                    preferred_element_type=f32)     # (cv, L)

        # ---- conv_out on relu(att_v), masked ----
        att_out = (jnp.dot(wo_ref[i], jnp.maximum(att_v, 0.0),
                           preferred_element_type=f32) + bo_ref[i]) * m_row

        # ---- AttModule tail: residual 1x1 conv + mask ----
        h = alpha * att_out + ff
        feat = (feat + jnp.dot(w1_ref[i], h, preferred_element_type=f32)
                + b1_ref[i]) * m_row

    feat_ref[0] = feat                                               # (C, L) lane-dense
    out_ref[0] = (jnp.dot(w_out_ref[...], feat, preferred_element_type=f32)
                  + b_out_ref[...]) * m_row                          # (ncls, L) lane-dense


# ---------------------------------------------------------------------------
# Encoder forward (single fused pallas_call). Inputs/outputs in PyTorch NCL layout.
# ---------------------------------------------------------------------------
def encoder_forward(params, x_ncl, mask_ncl, alpha, att_dtype=jnp.float32):
    # TODO(synk): Dropout2d / Dropout are identity in eval mode; training-mode dropout not implemented.
    x = x_ncl.astype(jnp.float32)                                 # (B, C_in, L)
    B, C_in, L = x.shape
    m_row = mask_ncl.astype(jnp.float32)                          # (B, 1, L)
    m_log = jnp.log(m_row + 1e-6)                                 # precompute once

    layers = params["layers"]
    dilations = tuple(int(l["dilation"]) for l in layers)
    C = params["w_in"].shape[1]
    ncls = params["w_out"].shape[1]
    cq = layers[0]["wq"].shape[1]
    cv = layers[0]["wv"].shape[1]
    cqkv = 2 * cq + cv

    # Stack per-layer weights (transposed to channel-first (Cout, Cin)) so they are
    # DMA'd into VMEM once (constant index maps) and stay resident across the grid.
    ffw = jnp.stack([jnp.transpose(l["ff_w"], (0, 2, 1)) for l in layers])        # (NL,3,C,C)
    ffb = jnp.stack([l["ff_b"].reshape(C, 1) for l in layers])                    # (NL,C,1)
    wqkv = jnp.stack([jnp.concatenate([l["wq"], l["wk"], l["wv"]], axis=1).T
                      for l in layers])                                            # (NL,cqkv,C)
    bqkv = jnp.stack([jnp.concatenate([l["bq"], l["bk"], l["bv"]]).reshape(cqkv, 1)
                      for l in layers])                                            # (NL,cqkv,1)
    wo = jnp.stack([l["wo"].T for l in layers])                                    # (NL,C,cv)
    bo = jnp.stack([l["bo"].reshape(C, 1) for l in layers])                        # (NL,C,1)
    w1 = jnp.stack([l["w1"].T for l in layers])                                    # (NL,C,C)
    b1 = jnp.stack([l["b1"].reshape(C, 1) for l in layers])                        # (NL,C,1)
    w_in = params["w_in"].T                                                        # (C, C_in)
    b_in = params["b_in"].reshape(C, 1)
    w_out = params["w_out"].T                                                      # (ncls, C)
    b_out = params["b_out"].reshape(ncls, 1)

    def rep(a):               # replicated (weights): fetched once, stays VMEM-resident
        nd = a.ndim
        return pl.BlockSpec(a.shape, lambda b, _nd=nd: (0,) * _nd)

    def per_b(shape):         # per-batch block
        nd = len(shape)
        return pl.BlockSpec((1,) + tuple(shape[1:]),
                            lambda b, _nd=nd: (b,) + (0,) * (_nd - 1))

    kernel = functools.partial(_encoder_kernel, dilations=dilations, cq=cq,
                               alpha=float(alpha), att_dtype=att_dtype)

    # TODO(synk): for long sequences, block the attention over keys (online softmax),
    # add a query-tile "parallel" grid axis (v7x megacore occupancy) and raise
    # vmem_limit_bytes; at these sizes the whole per-batch problem fits in VMEM.
    out, feat = pl.pallas_call(
        kernel,
        out_shape=(jax.ShapeDtypeStruct((B, ncls, L), jnp.float32),
                   jax.ShapeDtypeStruct((B, C, L), jnp.float32)),
        grid=(B,),
        in_specs=[per_b(x.shape), per_b(m_row.shape), per_b(m_log.shape),
                  rep(w_in), rep(b_in),
                  rep(ffw), rep(ffb),
                  rep(wqkv), rep(bqkv),
                  rep(wo), rep(bo),
                  rep(w1), rep(b1),
                  rep(w_out), rep(b_out)],
        out_specs=(per_b((B, ncls, L)), per_b((B, C, L))),
        compiler_params=pltpu.CompilerParams(dimension_semantics=("parallel",)),
    )(x, m_row, m_log, w_in, b_in, ffw, ffb, wqkv, bqkv, wo, bo, w1, b1, w_out, b_out)

    return out, feat          # already in PyTorch (B, ncls, L) / (B, C, L) layout


# ---------------------------------------------------------------------------
# Pure-JAX reference (channel-last math) for a correctness check.
# ---------------------------------------------------------------------------
def reference_forward(params, x_ncl, mask_ncl, alpha):
    x = jnp.transpose(x_ncl, (0, 2, 1))
    m_col = jnp.transpose(mask_ncl, (0, 2, 1))
    m_row = mask_ncl

    def pw(t, w, b):
        return t @ w + b

    feat = pw(x, params["w_in"], params["b_in"])
    for layer in params["layers"]:
        d = layer["dilation"]
        B, L, C = feat.shape
        zeros = jnp.zeros((B, d, C), feat.dtype)
        x_left = jnp.concatenate([zeros, feat[:, : L - d]], axis=1)
        x_right = jnp.concatenate([feat[:, d:], zeros], axis=1)
        ff = (jnp.einsum("blc,cd->bld", x_left, layer["ff_w"][0])
              + jnp.einsum("blc,cd->bld", feat, layer["ff_w"][1])
              + jnp.einsum("blc,cd->bld", x_right, layer["ff_w"][2])
              + layer["ff_b"])
        ff = jnp.maximum(ff, 0.0)
        mean = jnp.mean(ff, axis=1, keepdims=True)
        var = jnp.mean((ff - mean) ** 2, axis=1, keepdims=True)
        nrm = (ff - mean) * jax.lax.rsqrt(var + 1e-5)
        q = pw(nrm, layer["wq"], layer["bq"])
        k = pw(nrm, layer["wk"], layer["bk"])
        v = pw(nrm, layer["wv"], layer["bv"])
        energy = jnp.einsum("bic,bjc->bij", q, k) / math.sqrt(q.shape[-1])
        att = energy + jnp.log(m_row + 1e-6)
        att = jax.nn.softmax(att, axis=-1)
        att = att * m_row
        out = jnp.einsum("bij,bjc->bic", att, v)
        att_out = pw(jnp.maximum(out, 0.0), layer["wo"], layer["bo"]) * m_col
        h = alpha * att_out + ff
        feat = (feat + pw(h, layer["w1"], layer["b1"])) * m_col
    out = pw(feat, params["w_out"], params["b_out"]) * m_col
    return jnp.transpose(out, (0, 2, 1)), jnp.transpose(feat, (0, 2, 1))


# ---------------------------------------------------------------------------
# Deterministic parameter init (shapes follow Encoder.__init__; channel-last storage)
# ---------------------------------------------------------------------------
def init_params(key, num_layers, r1, r2, num_f_maps, input_dim, num_classes):
    def nrm(k, shape, scale=0.1):
        return scale * jax.random.normal(k, shape, jnp.float32)

    keys = jax.random.split(key, 4 + num_layers)
    C = num_f_maps
    params = {
        "w_in": nrm(keys[0], (input_dim, C)),
        "b_in": nrm(keys[1], (C,)),
        "w_out": nrm(keys[2], (C, num_classes)),
        "b_out": nrm(keys[3], (num_classes,)),
        "layers": [],
    }
    for i in range(num_layers):
        lk = jax.random.split(keys[4 + i], 12)
        params["layers"].append(dict(
            dilation=2 ** i,
            ff_w=nrm(lk[0], (3, C, C)), ff_b=nrm(lk[1], (C,)),
            wq=nrm(lk[2], (C, C // r1)), bq=nrm(lk[3], (C // r1,)),
            wk=nrm(lk[4], (C, C // r1)), bk=nrm(lk[5], (C // r1,)),
            wv=nrm(lk[6], (C, C // r2)), bv=nrm(lk[7], (C // r2,)),
            wo=nrm(lk[8], (C // r2, C)), bo=nrm(lk[9], (C,)),
            w1=nrm(lk[10], (C, C)), b1=nrm(lk[11], (C,)),
        ))
    return params


if __name__ == "__main__":
    # Encoder(num_layers=2, r1=2, r2=2, num_f_maps=32, input_dim=8,
    #         num_classes=6, channel_masking_rate=0.0, att_type='normal_att', alpha=0.8)
    B, C_in, L = 2, 8, 128
    num_layers, r1, r2, num_f_maps, num_classes = 2, 2, 2, 32, 6
    alpha = 0.8

    key = jax.random.PRNGKey(0)
    kx, kp = jax.random.split(key)
    x_ncl = jax.random.normal(kx, (B, C_in, L), jnp.float32)        # (N, C, L)
    mask_ncl = jnp.ones((B, 1, L), jnp.float32)
    mask_ncl = mask_ncl.at[1, :, 96:].set(0.0)                      # ragged 2nd sequence

    params = init_params(kp, num_layers, r1, r2, num_f_maps, C_in, num_classes)

    # f32 attention path (exact)
    out_ncl, feat_ncl = encoder_forward(params, x_ncl, mask_ncl, alpha)
    jax.block_until_ready((out_ncl, feat_ncl))

    ref_out, ref_feat = reference_forward(params, x_ncl, mask_ncl, alpha)
    assert out_ncl.shape == (B, num_classes, L) and feat_ncl.shape == (B, num_f_maps, L)
    assert jnp.allclose(out_ncl, ref_out, rtol=2e-3, atol=2e-3)
    assert jnp.allclose(feat_ncl, ref_feat, rtol=2e-3, atol=2e-3)

    # bf16 matmul-boundary attention (MXU-native on v5e/v6e/v7x); looser tolerance.
    out_bf, feat_bf = encoder_forward(params, x_ncl, mask_ncl, alpha,
                                      att_dtype=jnp.bfloat16)
    jax.block_until_ready((out_bf, feat_bf))
    assert jnp.allclose(out_bf, ref_out, rtol=3e-2, atol=3e-2)
    assert jnp.allclose(feat_bf, ref_feat, rtol=3e-2, atol=3e-2)

    print("KERNEL_OK")
</pallas_src>

<mosaic_0001>
module attributes {stable_mosaic.version = 11 : i64} {
  func.func @_encoder_kernel(%arg0: i32, %arg1: memref<1x8x128xf32, #tpu.memory_space<vmem>>, %arg2: memref<1x1x128xf32, #tpu.memory_space<vmem>>, %arg3: memref<1x1x128xf32, #tpu.memory_space<vmem>>, %arg4: memref<32x8xf32, #tpu.memory_space<vmem>>, %arg5: memref<32x1xf32, #tpu.memory_space<vmem>>, %arg6: memref<2x3x32x32xf32, #tpu.memory_space<vmem>>, %arg7: memref<2x32x1xf32, #tpu.memory_space<vmem>>, %arg8: memref<2x48x32xf32, #tpu.memory_space<vmem>>, %arg9: memref<2x48x1xf32, #tpu.memory_space<vmem>>, %arg10: memref<2x32x16xf32, #tpu.memory_space<vmem>>, %arg11: memref<2x32x1xf32, #tpu.memory_space<vmem>>, %arg12: memref<2x32x32xf32, #tpu.memory_space<vmem>>, %arg13: memref<2x32x1xf32, #tpu.memory_space<vmem>>, %arg14: memref<6x32xf32, #tpu.memory_space<vmem>>, %arg15: memref<6x1xf32, #tpu.memory_space<vmem>>, %arg16: memref<1x6x128xf32, #tpu.memory_space<vmem>>, %arg17: memref<1x32x128xf32, #tpu.memory_space<vmem>>) attributes {dimension_semantics = [#tpu.dimension_semantics<parallel>], iteration_bounds = array<i64: 2>, scalar_prefetch = 0 : i64, scratch_operands = 0 : i64, tpu.core_type = #tpu.core_type<tc>, window_params = [{transform_indices = @transform_0, window_bounds = array<i64: 1, 8, 128>}, {transform_indices = @transform_1, window_bounds = array<i64: 1, 1, 128>}, {transform_indices = @transform_2, window_bounds = array<i64: 1, 1, 128>}, {pipeline_mode = #tpu.pipeline_mode<synchronous>, transform_indices = @transform_3, window_bounds = array<i64: 32, 8>}, {pipeline_mode = #tpu.pipeline_mode<synchronous>, transform_indices = @transform_4, window_bounds = array<i64: 32, 1>}, {pipeline_mode = #tpu.pipeline_mode<synchronous>, transform_indices = @transform_5, window_bounds = array<i64: 2, 3, 32, 32>}, {pipeline_mode = #tpu.pipeline_mode<synchronous>, transform_indices = @transform_6, window_bounds = array<i64: 2, 32, 1>}, {pipeline_mode = #tpu.pipeline_mode<synchronous>, transform_indices = @transform_7, window_bounds = array<i64: 2, 48, 32>}, {pipeline_mode = #tpu.pipeline_mode<synchronous>, transform_indices = @transform_8, window_bounds = array<i64: 2, 48, 1>}, {pipeline_mode = #tpu.pipeline_mode<synchronous>, transform_indices = @transform_9, window_bounds = array<i64: 2, 32, 16>}, {pipeline_mode = #tpu.pipeline_mode<synchronous>, transform_indices = @transform_10, window_bounds = array<i64: 2, 32, 1>}, {pipeline_mode = #tpu.pipeline_mode<synchronous>, transform_indices = @transform_11, window_bounds = array<i64: 2, 32, 32>}, {pipeline_mode = #tpu.pipeline_mode<synchronous>, transform_indices = @transform_12, window_bounds = array<i64: 2, 32, 1>}, {pipeline_mode = #tpu.pipeline_mode<synchronous>, transform_indices = @transform_13, window_bounds = array<i64: 6, 32>}, {pipeline_mode = #tpu.pipeline_mode<synchronous>, transform_indices = @transform_14, window_bounds = array<i64: 6, 1>}, {transform_indices = @transform_15, window_bounds = array<i64: 1, 6, 128>}, {transform_indices = @transform_16, window_bounds = array<i64: 1, 32, 128>}]} {
    %c0 = arith.constant 0 : index
    %c0_0 = arith.constant 0 : index
    %c0_1 = arith.constant 0 : index
    %0 = vector.load %arg1[%c0, %c0_0, %c0_1] : memref<1x8x128xf32, #tpu.memory_space<vmem>>, vector<1x8x128xf32>
    %1 = vector.shape_cast %0 : vector<1x8x128xf32> to vector<8x128xf32>
    %c0_2 = arith.constant 0 : index
    %c0_3 = arith.constant 0 : index
    %c0_4 = arith.constant 0 : index
    %2 = vector.load %arg2[%c0_2, %c0_3, %c0_4] : memref<1x1x128xf32, #tpu.memory_space<vmem>>, vector<1x1x128xf32>
    %3 = vector.shape_cast %2 : vector<1x1x128xf32> to vector<1x128xf32>
    %c0_5 = arith.constant 0 : index
    %c0_6 = arith.constant 0 : index
    %c0_7 = arith.constant 0 : index
    %4 = vector.load %arg3[%c0_5, %c0_6, %c0_7] : memref<1x1x128xf32, #tpu.memory_space<vmem>>, vector<1x1x128xf32>
    %5 = vector.shape_cast %4 : vector<1x1x128xf32> to vector<1x128xf32>
    %6 = tpu.iota {dimensions = array<i32: 1>} : vector<1x128xi32>
    %c0_8 = arith.constant 0 : index
    %c0_9 = arith.constant 0 : index
    %7 = vector.load %arg4[%c0_8, %c0_9] : memref<32x8xf32, #tpu.memory_space<vmem>>, vector<32x8xf32>
    %cst = arith.constant dense<0.000000e+00> : vector<32x128xf32>
    %8 = tpu.matmul %7, %1, %cst {dimension_numbers = #tpu.dot_dimension_numbers<[1], [0], [0], [1], [0, 0, 1, 1], [], []>} : vector<32x8xf32>, vector<8x128xf32>, vector<32x128xf32> -> vector<32x128xf32>
    %c0_10 = arith.constant 0 : index
    %c0_11 = arith.constant 0 : index
    %9 = vector.load %arg5[%c0_10, %c0_11] : memref<32x1xf32, #tpu.memory_space<vmem>>, vector<32x1xf32>
    %10 = vector.broadcast %9 : vector<32x1xf32> to vector<32x128xf32>
    %11 = arith.addf %8, %10 : vector<32x128xf32>
    %c1_i32 = arith.constant 1 : i32
    %12 = vector.broadcast %c1_i32 : i32 to vector<1x128xi32>
    %13 = arith.cmpi sge, %6, %12 : vector<1x128xi32>
    %c1_i32_12 = arith.constant 1 : i32
    %14 = tpu.dynamic_rotate %11 by %c1_i32_12 dim 1 : vector<32x128xf32>, i32 -> vector<32x128xf32>
    %cst_13 = arith.constant 0.000000e+00 : f32
    %15 = vector.shape_cast %13 : vector<1x128xi1> to vector<1x128xi1>
    %16 = vector.broadcast %15 : vector<1x128xi1> to vector<32x128xi1>
    %17 = vector.broadcast %cst_13 : f32 to vector<32x128xf32>
    %18 = arith.select %16, %14, %17 : vector<32x128xi1>, vector<32x128xf32>
    %c127_i32 = arith.constant 127 : i32
    %19 = vector.broadcast %c127_i32 : i32 to vector<1x128xi32>
    %20 = arith.cmpi slt, %6, %19 : vector<1x128xi32>
    %c127_i32_14 = arith.constant 127 : i32
    %21 = tpu.dynamic_rotate %11 by %c127_i32_14 dim 1 : vector<32x128xf32>, i32 -> vector<32x128xf32>
    %cst_15 = arith.constant 0.000000e+00 : f32
    %22 = vector.shape_cast %20 : vector<1x128xi1> to vector<1x128xi1>
    %23 = vector.broadcast %22 : vector<1x128xi1> to vector<32x128xi1>
    %24 = vector.broadcast %cst_15 : f32 to vector<32x128xf32>
    %25 = arith.select %23, %21, %24 : vector<32x128xi1>, vector<32x128xf32>
    %c0_16 = arith.constant 0 : index
    %c0_17 = arith.constant 0 : index
    %c0_18 = arith.constant 0 : index
    %c0_19 = arith.constant 0 : index
    %26 = vector.load %arg6[%c0_16, %c0_17, %c0_18, %c0_19] : memref<2x3x32x32xf32, #tpu.memory_space<vmem>>, vector<1x1x32x32xf32>
    %27 = vector.shape_cast %26 : vector<1x1x32x32xf32> to vector<32x32xf32>
    %cst_20 = arith.constant dense<0.000000e+00> : vector<32x128xf32>
    %28 = tpu.matmul %27, %18, %cst_20 {dimension_numbers = #tpu.dot_dimension_numbers<[1], [0], [0], [1], [0, 0, 1, 1], [], []>} : vector<32x32xf32>, vector<32x128xf32>, vector<32x128xf32> -> vector<32x128xf32>
    %c0_21 = arith.constant 0 : index
    %c1 = arith.constant 1 : index
    %c0_22 = arith.constant 0 : index
    %c0_23 = arith.constant 0 : index
    %29 = vector.load %arg6[%c0_21, %c1, %c0_22, %c0_23] : memref<2x3x32x32xf32, #tpu.memory_space<vmem>>, vector<1x1x32x32xf32>
    %30 = vector.shape_cast %29 : vector<1x1x32x32xf32> to vector<32x32xf32>
    %cst_24 = arith.constant dense<0.000000e+00> : vector<32x128xf32>
    %31 = tpu.matmul %30, %11, %cst_24 {dimension_numbers = #tpu.dot_dimension_numbers<[1], [0], [0], [1], [0, 0, 1, 1], [], []>} : vector<32x32xf32>, vector<32x128xf32>, vector<32x128xf32> -> vector<32x128xf32>
    %32 = arith.addf %28, %31 : vector<32x128xf32>
    %c0_25 = arith.constant 0 : index
    %c2 = arith.constant 2 : index
    %c0_26 = arith.constant 0 : index
    %c0_27 = arith.constant 0 : index
    %33 = vector.load %arg6[%c0_25, %c2, %c0_26, %c0_27] : memref<2x3x32x32xf32, #tpu.memory_space<vmem>>, vector<1x1x32x32xf32>
    %34 = vector.shape_cast %33 : vector<1x1x32x32xf32> to vector<32x32xf32>
    %cst_28 = arith.constant dense<0.000000e+00> : vector<32x128xf32>
    %35 = tpu.matmul %34, %25, %cst_28 {dimension_numbers = #tpu.dot_dimension_numbers<[1], [0], [0], [1], [0, 0, 1, 1], [], []>} : vector<32x32xf32>, vector<32x128xf32>, vector<32x128xf32> -> vector<32x128xf32>
    %36 = arith.addf %32, %35 : vector<32x128xf32>
    %c0_29 = arith.constant 0 : index
    %c0_30 = arith.constant 0 : index
    %c0_31 = arith.constant 0 : index
    %37 = vector.load %arg7[%c0_29, %c0_30, %c0_31] : memref<2x32x1xf32, #tpu.memory_space<vmem>>, vector<1x32x1xf32>
    %38 = vector.shape_cast %37 : vector<1x32x1xf32> to vector<32x1xf32>
    %39 = vector.broadcast %38 : vector<32x1xf32> to vector<32x128xf32>
    %40 = arith.addf %36, %39 : vector<32x128xf32>
    %cst_32 = arith.constant 0.000000e+00 : f32
    %41 = vector.broadcast %cst_32 : f32 to vector<32x128xf32>
    %42 = arith.maximumf %40, %41 : vector<32x128xf32>
    %cst_33 = arith.constant dense<0.000000e+00> : vector<32xf32>
    %43 = vector.multi_reduction <add>, %42, %cst_33 [1] : vector<32x128xf32> to vector<32xf32>
    %44 = vector.shape_cast %43 : vector<32xf32> to vector<32x1xf32>
    %cst_34 = arith.constant 1.280000e+02 : f32
    %45 = vector.broadcast %cst_34 : f32 to vector<32x1xf32>
    %46 = arith.divf %44, %45 : vector<32x1xf32>
    %47 = arith.mulf %42, %42 : vector<32x128xf32>
    %cst_35 = arith.constant dense<0.000000e+00> : vector<32xf32>
    %48 = vector.multi_reduction <add>, %47, %cst_35 [1] : vector<32x128xf32> to vector<32xf32>
    %49 = vector.shape_cast %48 : vector<32xf32> to vector<32x1xf32>
    %cst_36 = arith.constant 1.280000e+02 : f32
    %50 = vector.broadcast %cst_36 : f32 to vector<32x1xf32>
    %51 = arith.divf %49, %50 : vector<32x1xf32>
    %52 = vector.broadcast %46 : vector<32x1xf32> to vector<32x128xf32>
    %53 = arith.subf %42, %52 : vector<32x128xf32>
    %54 = arith.mulf %46, %46 : vector<32x1xf32>
    %55 = arith.subf %51, %54 : vector<32x1xf32>
    %cst_37 = arith.constant 9.99999974E-6 : f32
    %56 = vector.broadcast %cst_37 : f32 to vector<32x1xf32>
    %57 = arith.addf %55, %56 : vector<32x1xf32>
    %58 = math.rsqrt %57 : vector<32x1xf32>
    %59 = vector.broadcast %58 : vector<32x1xf32> to vector<32x128xf32>
    %60 = arith.mulf %53, %59 : vector<32x128xf32>
    %c0_38 = arith.constant 0 : index
    %c0_39 = arith.constant 0 : index
    %c0_40 = arith.constant 0 : index
    %61 = vector.load %arg8[%c0_38, %c0_39, %c0_40] : memref<2x48x32xf32, #tpu.memory_space<vmem>>, vector<1x48x32xf32>
    %62 = vector.shape_cast %61 : vector<1x48x32xf32> to vector<48x32xf32>
    %cst_41 = arith.constant dense<0.000000e+00> : vector<48x128xf32>
    %63 = tpu.matmul %62, %60, %cst_41 {dimension_numbers = #tpu.dot_dimension_numbers<[1], [0], [0], [1], [0, 0, 1, 1], [], []>} : vector<48x32xf32>, vector<32x128xf32>, vector<48x128xf32> -> vector<48x128xf32>
    %c0_42 = arith.constant 0 : index
    %c0_43 = arith.constant 0 : index
    %c0_44 = arith.constant 0 : index
    %64 = vector.load %arg9[%c0_42, %c0_43, %c0_44] : memref<2x48x1xf32, #tpu.memory_space<vmem>>, vector<1x48x1xf32>
    %65 = vector.shape_cast %64 : vector<1x48x1xf32> to vector<48x1xf32>
    %66 = vector.broadcast %65 : vector<48x1xf32> to vector<48x128xf32>
    %67 = arith.addf %63, %66 : vector<48x128xf32>
    %68 = vector.extract_strided_slice %67 {offsets = [0, 0], sizes = [16, 128], strides = [1, 1]} : vector<48x128xf32> to vector<16x128xf32>
    %69 = vector.extract_strided_slice %67 {offsets = [16, 0], sizes = [16, 128], strides = [1, 1]} : vector<48x128xf32> to vector<16x128xf32>
    %70 = vector.extract_strided_slice %67 {offsets = [32, 0], sizes = [16, 128], strides = [1, 1]} : vector<48x128xf32> to vector<16x128xf32>
    %cst_45 = arith.constant dense<0.000000e+00> : vector<128x128xf32>
    %71 = tpu.matmul %68, %69, %cst_45 {dimension_numbers = #tpu.dot_dimension_numbers<[0], [0], [1], [1], [0, 1, 1, 1], [], []>} : vector<16x128xf32>, vector<16x128xf32>, vector<128x128xf32> -> vector<128x128xf32>
    %cst_46 = arith.constant 2.500000e-01 : f32
    %72 = vector.broadcast %cst_46 : f32 to vector<128x128xf32>
    %73 = arith.mulf %71, %72 : vector<128x128xf32>
    %74 = vector.broadcast %5 : vector<1x128xf32> to vector<128x128xf32>
    %75 = arith.addf %73, %74 : vector<128x128xf32>
    %cst_47 = arith.constant dense<0xFF800000> : vector<128xf32>
    %76 = vector.multi_reduction <maximumf>, %75, %cst_47 [1] : vector<128x128xf32> to vector<128xf32>
    %77 = vector.shape_cast %76 : vector<128xf32> to vector<128x1xf32>
    %78 = vector.broadcast %77 : vector<128x1xf32> to vector<128x128xf32>
    %79 = arith.subf %75, %78 : vector<128x128xf32>
    %80 = math.exp %79 : vector<128x128xf32>
    %cst_48 = arith.constant dense<0.000000e+00> : vector<128xf32>
    %81 = vector.multi_reduction <add>, %80, %cst_48 [1] : vector<128x128xf32> to vector<128xf32>
    %82 = vector.shape_cast %81 : vector<128xf32> to vector<128x1xf32>
    %83 = tpu.reciprocal %82 {approx = true} : vector<128x1xf32> -> vector<128x1xf32>
    %84 = vector.broadcast %83 : vector<128x1xf32> to vector<128x128xf32>
    %85 = arith.mulf %80, %84 : vector<128x128xf32>
    %86 = vector.broadcast %3 : vector<1x128xf32> to vector<128x128xf32>
    %87 = arith.mulf %85, %86 : vector<128x128xf32>
    %cst_49 = arith.constant dense<0.000000e+00> : vector<16x128xf32>
    %88 = tpu.matmul %70, %87, %cst_49 {dimension_numbers = #tpu.dot_dimension_numbers<[1], [1], [0], [0], [0, 0, 1, 0], [], []>} : vector<16x128xf32>, vector<128x128xf32>, vector<16x128xf32> -> vector<16x128xf32>
    %c0_50 = arith.constant 0 : index
    %c0_51 = arith.constant 0 : index
    %c0_52 = arith.constant 0 : index
    %89 = vector.load %arg10[%c0_50, %c0_51, %c0_52] : memref<2x32x16xf32, #tpu.memory_space<vmem>>, vector<1x32x16xf32>
    %90 = vector.shape_cast %89 : vector<1x32x16xf32> to vector<32x16xf32>
    %cst_53 = arith.constant 0.000000e+00 : f32
    %91 = vector.broadcast %cst_53 : f32 to vector<16x128xf32>
    %92 = arith.maximumf %88, %91 : vector<16x128xf32>
    %cst_54 = arith.constant dense<0.000000e+00> : vector<32x128xf32>
    %93 = tpu.matmul %90, %92, %cst_54 {dimension_numbers = #tpu.dot_dimension_numbers<[1], [0], [0], [1], [0, 0, 1, 1], [], []>} : vector<32x16xf32>, vector<16x128xf32>, vector<32x128xf32> -> vector<32x128xf32>
    %c0_55 = arith.constant 0 : index
    %c0_56 = arith.constant 0 : index
    %c0_57 = arith.constant 0 : index
    %94 = vector.load %arg11[%c0_55, %c0_56, %c0_57] : memref<2x32x1xf32, #tpu.memory_space<vmem>>, vector<1x32x1xf32>
    %95 = vector.shape_cast %94 : vector<1x32x1xf32> to vector<32x1xf32>
    %96 = vector.broadcast %95 : vector<32x1xf32> to vector<32x128xf32>
    %97 = arith.addf %93, %96 : vector<32x128xf32>
    %98 = vector.broadcast %3 : vector<1x128xf32> to vector<32x128xf32>
    %99 = arith.mulf %97, %98 : vector<32x128xf32>
    %cst_58 = arith.constant 8.000000e-01 : f32
    %100 = vector.broadcast %cst_58 : f32 to vector<32x128xf32>
    %101 = arith.mulf %100, %99 : vector<32x128xf32>
    %102 = arith.addf %101, %42 : vector<32x128xf32>
    %c0_59 = arith.constant 0 : index
    %c0_60 = arith.constant 0 : index
    %c0_61 = arith.constant 0 : index
    %103 = vector.load %arg12[%c0_59, %c0_60, %c0_61] : memref<2x32x32xf32, #tpu.memory_space<vmem>>, vector<1x32x32xf32>
    %104 = vector.shape_cast %103 : vector<1x32x32xf32> to vector<32x32xf32>
    %cst_62 = arith.constant dense<0.000000e+00> : vector<32x128xf32>
    %105 = tpu.matmul %104, %102, %cst_62 {dimension_numbers = #tpu.dot_dimension_numbers<[1], [0], [0], [1], [0, 0, 1, 1], [], []>} : vector<32x32xf32>, vector<32x128xf32>, vector<32x128xf32> -> vector<32x128xf32>
    %106 = arith.addf %11, %105 : vector<32x128xf32>
    %c0_63 = arith.constant 0 : index
    %c0_64 = arith.constant 0 : index
    %c0_65 = arith.constant 0 : index
    %107 = vector.load %arg13[%c0_63, %c0_64, %c0_65] : memref<2x32x1xf32, #tpu.memory_space<vmem>>, vector<1x32x1xf32>
    %108 = vector.shape_cast %107 : vector<1x32x1xf32> to vector<32x1xf32>
    %109 = vector.broadcast %108 : vector<32x1xf32> to vector<32x128xf32>
    %110 = arith.addf %106, %109 : vector<32x128xf32>
    %111 = vector.broadcast %3 : vector<1x128xf32> to vector<32x128xf32>
    %112 = arith.mulf %110, %111 : vector<32x128xf32>
    %c2_i32 = arith.constant 2 : i32
    %113 = vector.broadcast %c2_i32 : i32 to vector<1x128xi32>
    %114 = arith.cmpi sge, %6, %113 : vector<1x128xi32>
    %c2_i32_66 = arith.constant 2 : i32
    %115 = tpu.dynamic_rotate %112 by %c2_i32_66 dim 1 : vector<32x128xf32>, i32 -> vector<32x128xf32>
    %cst_67 = arith.constant 0.000000e+00 : f32
    %116 = vector.shape_cast %114 : vector<1x128xi1> to vector<1x128xi1>
    %117 = vector.broadcast %116 : vector<1x128xi1> to vector<32x128xi1>
    %118 = vector.broadcast %cst_67 : f32 to vector<32x128xf32>
    %119 = arith.select %117, %115, %118 : vector<32x128xi1>, vector<32x128xf32>
    %c126_i32 = arith.constant 126 : i32
    %120 = vector.broadcast %c126_i32 : i32 to vector<1x128xi32>
    %121 = arith.cmpi slt, %6, %120 : vector<1x128xi32>
    %c126_i32_68 = arith.constant 126 : i32
    %122 = tpu.dynamic_rotate %112 by %c126_i32_68 dim 1 : vector<32x128xf32>, i32 -> vector<32x128xf32>
    %cst_69 = arith.constant 0.000000e+00 : f32
    %123 = vector.shape_cast %121 : vector<1x128xi1> to vector<1x128xi1>
    %124 = vector.broadcast %123 : vector<1x128xi1> to vector<32x128xi1>
    %125 = vector.broadcast %cst_69 : f32 to vector<32x128xf32>
    %126 = arith.select %124, %122, %125 : vector<32x128xi1>, vector<32x128xf32>
    %c1_70 = arith.constant 1 : index
    %c0_71 = arith.constant 0 : index
    %c0_72 = arith.constant 0 : index
    %c0_73 = arith.constant 0 : index
    %127 = vector.load %arg6[%c1_70, %c0_71, %c0_72, %c0_73] : memref<2x3x32x32xf32, #tpu.memory_space<vmem>>, vector<1x1x32x32xf32>
    %128 = vector.shape_cast %127 : vector<1x1x32x32xf32> to vector<32x32xf32>
    %cst_74 = arith.constant dense<0.000000e+00> : vector<32x128xf32>
    %129 = tpu.matmul %128, %119, %cst_74 {dimension_numbers = #tpu.dot_dimension_numbers<[1], [0], [0], [1], [0, 0, 1, 1], [], []>} : vector<32x32xf32>, vector<32x128xf32>, vector<32x128xf32> -> vector<32x128xf32>
    %c1_75 = arith.constant 1 : index
    %c1_76 = arith.constant 1 : index
    %c0_77 = arith.constant 0 : index
    %c0_78 = arith.constant 0 : index
    %130 = vector.load %arg6[%c1_75, %c1_76, %c0_77, %c0_78] : memref<2x3x32x32xf32, #tpu.memory_space<vmem>>, vector<1x1x32x32xf32>
    %131 = vector.shape_cast %130 : vector<1x1x32x32xf32> to vector<32x32xf32>
    %cst_79 = arith.constant dense<0.000000e+00> : vector<32x128xf32>
    %132 = tpu.matmul %131, %112, %cst_79 {dimension_numbers = #tpu.dot_dimension_numbers<[1], [0], [0], [1], [0, 0, 1, 1], [], []>} : vector<32x32xf32>, vector<32x128xf32>, vector<32x128xf32> -> vector<32x128xf32>
    %133 = arith.addf %129, %132 : vector<32x128xf32>
    %c1_80 = arith.constant 1 : index
    %c2_81 = arith.constant 2 : index
    %c0_82 = arith.constant 0 : index
    %c0_83 = arith.constant 0 : index
    %134 = vector.load %arg6[%c1_80, %c2_81, %c0_82, %c0_83] : memref<2x3x32x32xf32, #tpu.memory_space<vmem>>, vector<1x1x32x32xf32>
    %135 = vector.shape_cast %134 : vector<1x1x32x32xf32> to vector<32x32xf32>
    %cst_84 = arith.constant dense<0.000000e+00> : vector<32x128xf32>
    %136 = tpu.matmul %135, %126, %cst_84 {dimension_numbers = #tpu.dot_dimension_numbers<[1], [0], [0], [1], [0, 0, 1, 1], [], []>} : vector<32x32xf32>, vector<32x128xf32>, vector<32x128xf32> -> vector<32x128xf32>
    %137 = arith.addf %133, %136 : vector<32x128xf32>
    %c1_85 = arith.constant 1 : index
    %c0_86 = arith.constant 0 : index
    %c0_87 = arith.constant 0 : index
    %138 = vector.load %arg7[%c1_85, %c0_86, %c0_87] : memref<2x32x1xf32, #tpu.memory_space<vmem>>, vector<1x32x1xf32>
    %139 = vector.shape_cast %138 : vector<1x32x1xf32> to vector<32x1xf32>
    %140 = vector.broadcast %139 : vector<32x1xf32> to vector<32x128xf32>
    %141 = arith.addf %137, %140 : vector<32x128xf32>
    %cst_88 = arith.constant 0.000000e+00 : f32
    %142 = vector.broadcast %cst_88 : f32 to vector<32x128xf32>
    %143 = arith.maximumf %141, %142 : vector<32x128xf32>
    %cst_89 = arith.constant dense<0.000000e+00> : vector<32xf32>
    %144 = vector.multi_reduction <add>, %143, %cst_89 [1] : vector<32x128xf32> to vector<32xf32>
    %145 = vector.shape_cast %144 : vector<32xf32> to vector<32x1xf32>
    %cst_90 = arith.constant 1.280000e+02 : f32
    %146 = vector.broadcast %cst_90 : f32 to vector<32x1xf32>
    %147 = arith.divf %145, %146 : vector<32x1xf32>
    %148 = arith.mulf %143, %143 : vector<32x128xf32>
    %cst_91 = arith.constant dense<0.000000e+00> : vector<32xf32>
    %149 = vector.multi_reduction <add>, %148, %cst_91 [1] : vector<32x128xf32> to vector<32xf32>
    %150 = vector.shape_cast %149 : vector<32xf32> to vector<32x1xf32>
    %cst_92 = arith.constant 1.280000e+02 : f32
    %151 = vector.broadcast %cst_92 : f32 to vector<32x1xf32>
    %152 = arith.divf %150, %151 : vector<32x1xf32>
    %153 = vector.broadcast %147 : vector<32x1xf32> to vector<32x128xf32>
    %154 = arith.subf %143, %153 : vector<32x128xf32>
    %155 = arith.mulf %147, %147 : vector<32x1xf32>
    %156 = arith.subf %152, %155 : vector<32x1xf32>
    %cst_93 = arith.constant 9.99999974E-6 : f32
    %157 = vector.broadcast %cst_93 : f32 to vector<32x1xf32>
    %158 = arith.addf %156, %157 : vector<32x1xf32>
    %159 = math.rsqrt %158 : vector<32x1xf32>
    %160 = vector.broadcast %159 : vector<32x1xf32> to vector<32x128xf32>
    %161 = arith.mulf %154, %160 : vector<32x128xf32>
    %c1_94 = arith.constant 1 : index
    %c0_95 = arith.constant 0 : index
    %c0_96 = arith.constant 0 : index
    %162 = vector.load %arg8[%c1_94, %c0_95, %c0_96] : memref<2x48x32xf32, #tpu.memory_space<vmem>>, vector<1x48x32xf32>
    %163 = vector.shape_cast %162 : vector<1x48x32xf32> to vector<48x32xf32>
    %cst_97 = arith.constant dense<0.000000e+00> : vector<48x128xf32>
    %164 = tpu.matmul %163, %161, %cst_97 {dimension_numbers = #tpu.dot_dimension_numbers<[1], [0], [0], [1], [0, 0, 1, 1], [], []>} : vector<48x32xf32>, vector<32x128xf32>, vector<48x128xf32> -> vector<48x128xf32>
    %c1_98 = arith.constant 1 : index
    %c0_99 = arith.constant 0 : index
    %c0_100 = arith.constant 0 : index
    %165 = vector.load %arg9[%c1_98, %c0_99, %c0_100] : memref<2x48x1xf32, #tpu.memory_space<vmem>>, vector<1x48x1xf32>
    %166 = vector.shape_cast %165 : vector<1x48x1xf32> to vector<48x1xf32>
    %167 = vector.broadcast %166 : vector<48x1xf32> to vector<48x128xf32>
    %168 = arith.addf %164, %167 : vector<48x128xf32>
    %169 = vector.extract_strided_slice %168 {offsets = [0, 0], sizes = [16, 128], strides = [1, 1]} : vector<48x128xf32> to vector<16x128xf32>
    %170 = vector.extract_strided_slice %168 {offsets = [16, 0], sizes = [16, 128], strides = [1, 1]} : vector<48x128xf32> to vector<16x128xf32>
    %171 = vector.extract_strided_slice %168 {offsets = [32, 0], sizes = [16, 128], strides = [1, 1]} : vector<48x128xf32> to vector<16x128xf32>
    %cst_101 = arith.constant dense<0.000000e+00> : vector<128x128xf32>
    %172 = tpu.matmul %169, %170, %cst_101 {dimension_numbers = #tpu.dot_dimension_numbers<[0], [0], [1], [1], [0, 1, 1, 1], [], []>} : vector<16x128xf32>, vector<16x128xf32>, vector<128x128xf32> -> vector<128x128xf32>
    %cst_102 = arith.constant 2.500000e-01 : f32
    %173 = vector.broadcast %cst_102 : f32 to vector<128x128xf32>
    %174 = arith.mulf %172, %173 : vector<128x128xf32>
    %175 = vector.broadcast %5 : vector<1x128xf32> to vector<128x128xf32>
    %176 = arith.addf %174, %175 : vector<128x128xf32>
    %cst_103 = arith.constant dense<0xFF800000> : vector<128xf32>
    %177 = vector.multi_reduction <maximumf>, %176, %cst_103 [1] : vector<128x128xf32> to vector<128xf32>
    %178 = vector.shape_cast %177 : vector<128xf32> to vector<128x1xf32>
    %179 = vector.broadcast %178 : vector<128x1xf32> to vector<128x128xf32>
    %180 = arith.subf %176, %179 : vector<128x128xf32>
    %181 = math.exp %180 : vector<128x128xf32>
    %cst_104 = arith.constant dense<0.000000e+00> : vector<128xf32>
    %182 = vector.multi_reduction <add>, %181, %cst_104 [1] : vector<128x128xf32> to vector<128xf32>
    %183 = vector.shape_cast %182 : vector<128xf32> to vector<128x1xf32>
    %184 = tpu.reciprocal %183 {approx = true} : vector<128x1xf32> -> vector<128x1xf32>
    %185 = vector.broadcast %184 : vector<128x1xf32> to vector<128x128xf32>
    %186 = arith.mulf %181, %185 : vector<128x128xf32>
    %187 = vector.broadcast %3 : vector<1x128xf32> to vector<128x128xf32>
    %188 = arith.mulf %186, %187 : vector<128x128xf32>
    %cst_105 = arith.constant dense<0.000000e+00> : vector<16x128xf32>
    %189 = tpu.matmul %171, %188, %cst_105 {dimension_numbers = #tpu.dot_dimension_numbers<[1], [1], [0], [0], [0, 0, 1, 0], [], []>} : vector<16x128xf32>, vector<128x128xf32>, vector<16x128xf32> -> vector<16x128xf32>
    %c1_106 = arith.constant 1 : index
    %c0_107 = arith.constant 0 : index
    %c0_108 = arith.constant 0 : index
    %190 = vector.load %arg10[%c1_106, %c0_107, %c0_108] : memref<2x32x16xf32, #tpu.memory_space<vmem>>, vector<1x32x16xf32>
    %191 = vector.shape_cast %190 : vector<1x32x16xf32> to vector<32x16xf32>
    %cst_109 = arith.constant 0.000000e+00 : f32
    %192 = vector.broadcast %cst_109 : f32 to vector<16x128xf32>
    %193 = arith.maximumf %189, %192 : vector<16x128xf32>
    %cst_110 = arith.constant dense<0.000000e+00> : vector<32x128xf32>
    %194 = tpu.matmul %191, %193, %cst_110 {dimension_numbers = #tpu.dot_dimension_numbers<[1], [0], [0], [1], [0, 0, 1, 1], [], []>} : vector<32x16xf32>, vector<16x128xf32>, vector<32x128xf32> -> vector<32x128xf32>
    %c1_111 = arith.constant 1 : index
    %c0_112 = arith.constant 0 : index
    %c0_113 = arith.constant 0 : index
    %195 = vector.load %arg11[%c1_111, %c0_112, %c0_113] : memref<2x32x1xf32, #tpu.memory_space<vmem>>, vector<1x32x1xf32>
    %196 = vector.shape_cast %195 : vector<1x32x1xf32> to vector<32x1xf32>
    %197 = vector.broadcast %196 : vector<32x1xf32> to vector<32x128xf32>
    %198 = arith.addf %194, %197 : vector<32x128xf32>
    %199 = vector.broadcast %3 : vector<1x128xf32> to vector<32x128xf32>
    %200 = arith.mulf %198, %199 : vector<32x128xf32>
    %cst_114 = arith.constant 8.000000e-01 : f32
    %201 = vector.broadcast %cst_114 : f32 to vector<32x128xf32>
    %202 = arith.mulf %201, %200 : vector<32x128xf32>
    %203 = arith.addf %202, %143 : vector<32x128xf32>
    %c1_115 = arith.constant 1 : index
    %c0_116 = arith.constant 0 : index
    %c0_117 = arith.constant 0 : index
    %204 = vector.load %arg12[%c1_115, %c0_116, %c0_117] : memref<2x32x32xf32, #tpu.memory_space<vmem>>, vector<1x32x32xf32>
    %205 = vector.shape_cast %204 : vector<1x32x32xf32> to vector<32x32xf32>
    %cst_118 = arith.constant dense<0.000000e+00> : vector<32x128xf32>
    %206 = tpu.matmul %205, %203, %cst_118 {dimension_numbers = #tpu.dot_dimension_numbers<[1], [0], [0], [1], [0, 0, 1, 1], [], []>} : vector<32x32xf32>, vector<32x128xf32>, vector<32x128xf32> -> vector<32x128xf32>
    %207 = arith.addf %112, %206 : vector<32x128xf32>
    %c1_119 = arith.constant 1 : index
    %c0_120 = arith.constant 0 : index
    %c0_121 = arith.constant 0 : index
    %208 = vector.load %arg13[%c1_119, %c0_120, %c0_121] : memref<2x32x1xf32, #tpu.memory_space<vmem>>, vector<1x32x1xf32>
    %209 = vector.shape_cast %208 : vector<1x32x1xf32> to vector<32x1xf32>
    %210 = vector.broadcast %209 : vector<32x1xf32> to vector<32x128xf32>
    %211 = arith.addf %207, %210 : vector<32x128xf32>
    %212 = vector.broadcast %3 : vector<1x128xf32> to vector<32x128xf32>
    %213 = arith.mulf %211, %212 : vector<32x128xf32>
    %c0_122 = arith.constant 0 : index
    %c0_123 = arith.constant 0 : index
    %c0_124 = arith.constant 0 : index
    %214 = vector.load %arg17[%c0_122, %c0_123, %c0_124] : memref<1x32x128xf32, #tpu.memory_space<vmem>>, vector<1x32x128xf32>
    %215 = vector.shape_cast %214 : vector<1x32x128xf32> to vector<32x128xf32>
    %216 = vector.shape_cast %213 : vector<32x128xf32> to vector<1x32x128xf32>
    tpu.vector_store %arg17[%c0_122, %c0_123, %c0_124], %216 {strides = array<i32>} : memref<1x32x128xf32, #tpu.memory_space<vmem>>, vector<1x32x128xf32>,
    %c0_125 = arith.constant 0 : index
    %c0_126 = arith.constant 0 : index
    %217 = vector.load %arg14[%c0_125, %c0_126] : memref<6x32xf32, #tpu.memory_space<vmem>>, vector<6x32xf32>
    %cst_127 = arith.constant dense<0.000000e+00> : vector<6x128xf32>
    %218 = tpu.matmul %217, %213, %cst_127 {dimension_numbers = #tpu.dot_dimension_numbers<[1], [0], [0], [1], [0, 0, 1, 1], [], []>} : vector<6x32xf32>, vector<32x128xf32>, vector<6x128xf32> -> vector<6x128xf32>
    %c0_128 = arith.constant 0 : index
    %c0_129 = arith.constant 0 : index
    %219 = vector.load %arg15[%c0_128, %c0_129] : memref<6x1xf32, #tpu.memory_space<vmem>>, vector<6x1xf32>
    %220 = vector.broadcast %219 : vector<6x1xf32> to vector<6x128xf32>
    %221 = arith.addf %218, %220 : vector<6x128xf32>
    %222 = vector.broadcast %3 : vector<1x128xf32> to vector<6x128xf32>
    %223 = arith.mulf %221, %222 : vector<6x128xf32>
    %c0_130 = arith.constant 0 : index
    %c0_131 = arith.constant 0 : index
    %c0_132 = arith.constant 0 : index
    %224 = vector.load %arg16[%c0_130, %c0_131, %c0_132] : memref<1x6x128xf32, #tpu.memory_space<vmem>>, vector<1x6x128xf32>
    %225 = vector.shape_cast %224 : vector<1x6x128xf32> to vector<6x128xf32>
    %226 = vector.shape_cast %223 : vector<6x128xf32> to vector<1x6x128xf32>
    tpu.vector_store %arg16[%c0_130, %c0_131, %c0_132], %226 {strides = array<i32>} : memref<1x6x128xf32, #tpu.memory_space<vmem>>, vector<1x6x128xf32>,
    return
  }
  func.func @transform_0(%arg0: i32) -> (i32, i32, i32) {
    %c0_i32 = arith.constant 0 : i32
    %c0_i32_0 = arith.constant 0 : i32
    %c0_i32_1 = arith.constant 0 : i32
    return %arg0, %c0_i32, %c0_i32_0 : i32, i32, i32
  }
  func.func @transform_1(%arg0: i32) -> (i32, i32, i32) {
    %c0_i32 = arith.constant 0 : i32
    %c0_i32_0 = arith.constant 0 : i32
    %c0_i32_1 = arith.constant 0 : i32
    return %arg0, %c0_i32, %c0_i32_0 : i32, i32, i32
  }
  func.func @transform_2(%arg0: i32) -> (i32, i32, i32) {
    %c0_i32 = arith.constant 0 : i32
    %c0_i32_0 = arith.constant 0 : i32
    %c0_i32_1 = arith.constant 0 : i32
    return %arg0, %c0_i32, %c0_i32_0 : i32, i32, i32
  }
  func.func @transform_3(%arg0: i32) -> (i32, i32) {
    %c0_i32 = arith.constant 0 : i32
    %c0_i32_0 = arith.constant 0 : i32
    %c0_i32_1 = arith.constant 0 : i32
    return %c0_i32, %c0_i32_0 : i32, i32
  }
  func.func @transform_4(%arg0: i32) -> (i32, i32) {
    %c0_i32 = arith.constant 0 : i32
    %c0_i32_0 = arith.constant 0 : i32
    %c0_i32_1 = arith.constant 0 : i32
    return %c0_i32, %c0_i32_0 : i32, i32
  }
  func.func @transform_5(%arg0: i32) -> (i32, i32, i32, i32) {
    %c0_i32 = arith.constant 0 : i32
    %c0_i32_0 = arith.constant 0 : i32
    %c0_i32_1 = arith.constant 0 : i32
    %c0_i32_2 = arith.constant 0 : i32
    %c0_i32_3 = arith.constant 0 : i32
    return %c0_i32, %c0_i32_0, %c0_i32_1, %c0_i32_2 : i32, i32, i32, i32
  }
  func.func @transform_6(%arg0: i32) -> (i32, i32, i32) {
    %c0_i32 = arith.constant 0 : i32
    %c0_i32_0 = arith.constant 0 : i32
    %c0_i32_1 = arith.constant 0 : i32
    %c0_i32_2 = arith.constant 0 : i32
    return %c0_i32, %c0_i32_0, %c0_i32_1 : i32, i32, i32
  }
  func.func @transform_7(%arg0: i32) -> (i32, i32, i32) {
    %c0_i32 = arith.constant 0 : i32
    %c0_i32_0 = arith.constant 0 : i32
    %c0_i32_1 = arith.constant 0 : i32
    %c0_i32_2 = arith.constant 0 : i32
    return %c0_i32, %c0_i32_0, %c0_i32_1 : i32, i32, i32
  }
  func.func @transform_8(%arg0: i32) -> (i32, i32, i32) {
    %c0_i32 = arith.constant 0 : i32
    %c0_i32_0 = arith.constant 0 : i32
    %c0_i32_1 = arith.constant 0 : i32
    %c0_i32_2 = arith.constant 0 : i32
    return %c0_i32, %c0_i32_0, %c0_i32_1 : i32, i32, i32
  }
  func.func @transform_9(%arg0: i32) -> (i32, i32, i32) {
    %c0_i32 = arith.constant 0 : i32
    %c0_i32_0 = arith.constant 0 : i32
    %c0_i32_1 = arith.constant 0 : i32
    %c0_i32_2 = arith.constant 0 : i32
    return %c0_i32, %c0_i32_0, %c0_i32_1 : i32, i32, i32
  }
  func.func @transform_10(%arg0: i32) -> (i32, i32, i32) {
    %c0_i32 = arith.constant 0 : i32
    %c0_i32_0 = arith.constant 0 : i32
    %c0_i32_1 = arith.constant 0 : i32
    %c0_i32_2 = arith.constant 0 : i32
    return %c0_i32, %c0_i32_0, %c0_i32_1 : i32, i32, i32
  }
  func.func @transform_11(%arg0: i32) -> (i32, i32, i32) {
    %c0_i32 = arith.constant 0 : i32
    %c0_i32_0 = arith.constant 0 : i32
    %c0_i32_1 = arith.constant 0 : i32
    %c0_i32_2 = arith.constant 0 : i32
    return %c0_i32, %c0_i32_0, %c0_i32_1 : i32, i32, i32
  }
  func.func @transform_12(%arg0: i32) -> (i32, i32, i32) {
    %c0_i32 = arith.constant 0 : i32
    %c0_i32_0 = arith.constant 0 : i32
    %c0_i32_1 = arith.constant 0 : i32
    %c0_i32_2 = arith.constant 0 : i32
    return %c0_i32, %c0_i32_0, %c0_i32_1 : i32, i32, i32
  }
  func.func @transform_13(%arg0: i32) -> (i32, i32) {
    %c0_i32 = arith.constant 0 : i32
    %c0_i32_0 = arith.constant 0 : i32
    %c0_i32_1 = arith.constant 0 : i32
    return %c0_i32, %c0_i32_0 : i32, i32
  }
  func.func @transform_14(%arg0: i32) -> (i32, i32) {
    %c0_i32 = arith.constant 0 : i32
    %c0_i32_0 = arith.constant 0 : i32
    %c0_i32_1 = arith.constant 0 : i32
    return %c0_i32, %c0_i32_0 : i32, i32
  }
  func.func @transform_15(%arg0: i32) -> (i32, i32, i32) {
    %c0_i32 = arith.constant 0 : i32
    %c0_i32_0 = arith.constant 0 : i32
    %c0_i32_1 = arith.constant 0 : i32
    return %arg0, %c0_i32, %c0_i32_0 : i32, i32, i32
  }
  func.func @transform_16(%arg0: i32) -> (i32, i32, i32) {
    %c0_i32 = arith.constant 0 : i32
    %c0_i32_0 = arith.constant 0 : i32
    %c0_i32_1 = arith.constant 0 : i32
    return %arg0, %c0_i32, %c0_i32_0 : i32, i32, i32
  }
}

</mosaic_0001>

<llo_original>
// kernel: tpu_custom_call.1
$region0: #{tpu_custom_call.1}
  #allocation0 [shape = 'u32[]', space=smem, size = 0x4, offset = 0x4, fixed_abs, tag = 'smem constant byte address 0x4 - core index']
  #allocation1 [shape = 'u32[144,128]{1,0:T(1,128)}', space=vmem, size = 0x12000, scoped, tag = 'internal scratch']
  %s0 = inlined_call_operand.vmem [shape: f32[2,8,128], index: 0, kind: input, shape index: {}]
  %s1 = inlined_call_operand.vmem [shape: f32[2,1,128], index: 1, kind: input, shape index: {}]
  %s2 = inlined_call_operand.vmem [shape: f32[2,1,128], index: 2, kind: input, shape index: {}]
  %s3 = inlined_call_operand.vmem [shape: f32[32,8], index: 3, kind: input, shape index: {}]
  %s4 = inlined_call_operand.vmem [shape: f32[32,1], index: 4, kind: input, shape index: {}]
  %s5 = inlined_call_operand.vmem [shape: f32[2,3,32,32], index: 5, kind: input, shape index: {}]
  %s6 = inlined_call_operand.vmem [shape: f32[2,32,1], index: 6, kind: input, shape index: {}]
  %s7 = inlined_call_operand.vmem [shape: f32[2,48,32], index: 7, kind: input, shape index: {}]
  %s8 = inlined_call_operand.vmem [shape: f32[2,48,1], index: 8, kind: input, shape index: {}]
  %s9 = inlined_call_operand.vmem [shape: f32[2,32,16], index: 9, kind: input, shape index: {}]
  %s10 = inlined_call_operand.vmem [shape: f32[2,32,1], index: 10, kind: input, shape index: {}]
  %s11 = inlined_call_operand.vmem [shape: f32[2,32,32], index: 11, kind: input, shape index: {}]
  %s12 = inlined_call_operand.vmem [shape: f32[2,32,1], index: 12, kind: input, shape index: {}]
  %s13 = inlined_call_operand.vmem [shape: f32[6,32], index: 13, kind: input, shape index: {}]
  %s14 = inlined_call_operand.vmem [shape: f32[6,1], index: 14, kind: input, shape index: {}]
  %s15 = inlined_call_operand.vmem [shape: f32[2,6,128], index: 15, kind: output, shape index: {0}]
  %s16 = inlined_call_operand.hbm [shape: f32[2,32,128], index: 16, kind: output, shape index: {1}]
  %17 = xla_tuple %s15, %s16
  %s18 = sld [smem:[#allocation0]]
  $region101: #{tpu_custom_call.1} parent=0
    _
  %s20 = ssub.s32 1, %s18
  %s21 = scalar_select 0, %s20, %s18
  $region1: #{tpu_custom_call.1} parent=0
    #allocation2 [shape = 'u8[32768]{0}', space=vmem, size = 0x8000, scoped, tag = 'output window, operand 1']
    #allocation3 [shape = 's32[2]{0}', space=sflag, size = 0x8, scoped, tag = 'scoped memory for tpu_custom_call.1']
    %22 = vsyncpa [#allocation3], 0
    %s23 = scalar_lea.sflag [#allocation3], 1
    %24 = vsyncpa %s23, 0
    loop: start=0, step=1, limit=4
    $region2: #{tpu_custom_call.1} parent=1 // loop_pre_header
      _
    $region3: #{tpu_custom_call.1} parent=1 // loop_header
      %s26 = sphi 0, %s30
      %p27 = scmp.ge.s32.totalorder %s26, 4
      %s36 = sphi 0, %s38
      %s39 = sphi 0, %s36
      %s40 = sphi 0, %s39
      %s56 = sphi 0, %s40
      %s62 = sphi 0, %s64
      %s65 = sphi 0, %s62
      %s66 = sphi 0, %s65
      %s82 = sphi 0, %s66
      %s88 = sphi 0, %s90
      %s91 = sphi 0, %s88
      %s92 = sphi 0, %s91
      %s108 = sphi 0, %s92
      %s112 = sphi 0, %s112
      %s114 = sphi 0, %s112
      %s115 = sphi 0, %s114
      %s129 = sphi 0, %s115
      %s133 = sphi 0, %s133
      %s135 = sphi 0, %s133
      %s136 = sphi 0, %s135
      %s150 = sphi 0, %s136
      %s154 = sphi 0, %s154
      %s156 = sphi 0, %s154
      %s157 = sphi 0, %s156
      %s171 = sphi 0, %s157
      %s175 = sphi 0, %s175
      %s177 = sphi 0, %s175
      %s178 = sphi 0, %s177
      %s192 = sphi 0, %s178
      %s196 = sphi 0, %s196
      %s198 = sphi 0, %s196
      %s199 = sphi 0, %s198
      %s213 = sphi 0, %s199
      %s217 = sphi 0, %s217
      %s219 = sphi 0, %s217
      %s220 = sphi 0, %s219
      %s234 = sphi 0, %s220
      %s238 = sphi 0, %s238
      %s240 = sphi 0, %s238
      %s241 = sphi 0, %s240
      %s255 = sphi 0, %s241
      %s259 = sphi 0, %s259
      %s261 = sphi 0, %s259
      %s262 = sphi 0, %s261
      %s276 = sphi 0, %s262
      %s280 = sphi 0, %s280
      %s282 = sphi 0, %s280
      %s283 = sphi 0, %s282
      %s297 = sphi 0, %s283
      %s301 = sphi 0, %s301
      %s303 = sphi 0, %s301
      %s304 = sphi 0, %s303
      %s318 = sphi 0, %s304
      %s322 = sphi 0, %s322
      %s324 = sphi 0, %s322
      %s325 = sphi 0, %s324
      %s339 = sphi 0, %s325
      %s343 = sphi 0, %s343
      %s345 = sphi 0, %s343
      %s346 = sphi 0, %s345
      %s360 = sphi 0, %s346
      %s366 = sphi 0, %s368
      %s369 = sphi 0, %s366
      %s370 = sphi 0, %s369
      %s386 = sphi 0, %s370
      %s392 = sphi 0, %s394
      %s395 = sphi 0, %s392
      %s396 = sphi 0, %s395
      %s412 = sphi 0, %s396
    $region4: #{tpu_custom_call.1} parent=1 // loop_header_branch
      %29 = sbr.rel (%p27) target = $region8
    $region5: #{tpu_custom_call.1} parent=1 // loop_body
      %s31 = ssub.s32 %s26, 1
      %s32 = ssub.s32 %s26, 2
      %s33 = sadd.s32 %s26, 1
      %s34 = ssub.s32 %s26, %s33
      %p35 = scmp.eq.s32.totalorder %s34, 0
      %s37 = sadd.s32 %s36, 1
      %s38 = scalar_select %p35, %s36, %s37
      %p41 = pneg %p35
      %p42 = scmp.eq.s32.totalorder %s26, 1
      %p43 = por %p41, %p42
      %p44 = scmp.ne.s32.totalorder %s36, %s39
      %p45 = scmp.eq.s32.totalorder %s26, 0
      %p46 = por %p44, %p45
      %p47 = scmp.ne.s32.totalorder %s36, %s39
      %p48 = scmp.eq.s32.totalorder %s31, 1
      %p49 = por %p47, %p48
      %p50 = scmp.ne.s32.totalorder %s39, %s40
      %p51 = scmp.eq.s32.totalorder %s31, 0
      %p52 = por %p50, %p51
      %p53 = scmp.ne.s32.totalorder %s39, %s40
      %p54 = scmp.eq.s32.totalorder %s32, 1
      %p55 = por %p53, %p54
      %p57 = scmp.ne.s32.totalorder %s40, %s56
      %p58 = scmp.eq.s32.totalorder %s32, 0
      %p59 = por %p57, %p58
      %s60 = ssub.s32 %s26, %s33
      %p61 = scmp.eq.s32.totalorder %s60, 0
      %s63 = sadd.s32 %s62, 1
      %s64 = scalar_select %p61, %s62, %s63
      %p67 = pneg %p61
      %p68 = scmp.eq.s32.totalorder %s26, 1
      %p69 = por %p67, %p68
      %p70 = scmp.ne.s32.totalorder %s62, %s65
      %p71 = scmp.eq.s32.totalorder %s26, 0
      %p72 = por %p70, %p71
      %p73 = scmp.ne.s32.totalorder %s62, %s65
      %p74 = scmp.eq.s32.totalorder %s31, 1
      %p75 = por %p73, %p74
      %p76 = scmp.ne.s32.totalorder %s65, %s66
      %p77 = scmp.eq.s32.totalorder %s31, 0
      %p78 = por %p76, %p77
      %p79 = scmp.ne.s32.totalorder %s65, %s66
      %p80 = scmp.eq.s32.totalorder %s32, 1
      %p81 = por %p79, %p80
      %p83 = scmp.ne.s32.totalorder %s66, %s82
      %p84 = scmp.eq.s32.totalorder %s32, 0
      %p85 = por %p83, %p84
      %s86 = ssub.s32 %s26, %s33
      %p87 = scmp.eq.s32.totalorder %s86, 0
      %s89 = sadd.s32 %s88, 1
      %s90 = scalar_select %p87, %s88, %s89
      %p93 = pneg %p87
      %p94 = scmp.eq.s32.totalorder %s26, 1
      %p95 = por %p93, %p94
      %p96 = scmp.ne.s32.totalorder %s88, %s91
      %p97 = scmp.eq.s32.totalorder %s26, 0
      %p98 = por %p96, %p97
      %p99 = scmp.ne.s32.totalorder %s88, %s91
      %p100 = scmp.eq.s32.totalorder %s31, 1
      %p101 = por %p99, %p100
      %p102 = scmp.ne.s32.totalorder %s91, %s92
      %p103 = scmp.eq.s32.totalorder %s31, 0
      %p104 = por %p102, %p103
      %p105 = scmp.ne.s32.totalorder %s91, %s92
      %p106 = scmp.eq.s32.totalorder %s32, 1
      %p107 = por %p105, %p106
      %p109 = scmp.ne.s32.totalorder %s92, %s108
      %p110 = scmp.eq.s32.totalorder %s32, 0
      %p111 = por %p109, %p110
      %s113 = sadd.s32 %s112, 1
      %p116 = scmp.eq.s32.totalorder %s26, 1
      %p117 = scmp.ne.s32.totalorder %s112, %s114
      %p118 = scmp.eq.s32.totalorder %s26, 0
      %p119 = por %p117, %p118
      %p120 = scmp.ne.s32.totalorder %s112, %s114
      %p121 = scmp.eq.s32.totalorder %s31, 1
      %p122 = por %p120, %p121
      %p123 = scmp.ne.s32.totalorder %s114, %s115
      %p124 = scmp.eq.s32.totalorder %s31, 0
      %p125 = por %p123, %p124
      %p126 = scmp.ne.s32.totalorder %s114, %s115
      %p127 = scmp.eq.s32.totalorder %s32, 1
      %p128 = por %p126, %p127
      %p130 = scmp.ne.s32.totalorder %s115, %s129
      %p131 = scmp.eq.s32.totalorder %s32, 0
      %p132 = por %p130, %p131
      %s134 = sadd.s32 %s133, 1
      %p137 = scmp.eq.s32.totalorder %s26, 1
      %p138 = scmp.ne.s32.totalorder %s133, %s135
      %p139 = scmp.eq.s32.totalorder %s26, 0
      %p140 = por %p138, %p139
      %p141 = scmp.ne.s32.totalorder %s133, %s135
      %p142 = scmp.eq.s32.totalorder %s31, 1
      %p143 = por %p141, %p142
      %p144 = scmp.ne.s32.totalorder %s135, %s136
      %p145 = scmp.eq.s32.totalorder %s31, 0
      %p146 = por %p144, %p145
      %p147 = scmp.ne.s32.totalorder %s135, %s136
      %p148 = scmp.eq.s32.totalorder %s32, 1
      %p149 = por %p147, %p148
      %p151 = scmp.ne.s32.totalorder %s136, %s150
      %p152 = scmp.eq.s32.totalorder %s32, 0
      %p153 = por %p151, %p152
      %s155 = sadd.s32 %s154, 1
      %p158 = scmp.eq.s32.totalorder %s26, 1
      %p159 = scmp.ne.s32.totalorder %s154, %s156
      %p160 = scmp.eq.s32.totalorder %s26, 0
      %p161 = por %p159, %p160
      %p162 = scmp.ne.s32.totalorder %s154, %s156
      %p163 = scmp.eq.s32.totalorder %s31, 1
      %p164 = por %p162, %p163
      %p165 = scmp.ne.s32.totalorder %s156, %s157
      %p166 = scmp.eq.s32.totalorder %s31, 0
      %p167 = por %p165, %p166
      %p168 = scmp.ne.s32.totalorder %s156, %s157
      %p169 = scmp.eq.s32.totalorder %s32, 1
      %p170 = por %p168, %p169
      %p172 = scmp.ne.s32.totalorder %s157, %s171
      %p173 = scmp.eq.s32.totalorder %s32, 0
      %p174 = por %p172, %p173
      %s176 = sadd.s32 %s175, 1
      %p179 = scmp.eq.s32.totalorder %s26, 1
      %p180 = scmp.ne.s32.totalorder %s175, %s177
      %p181 = scmp.eq.s32.totalorder %s26, 0
      %p182 = por %p180, %p181
      %p183 = scmp.ne.s32.totalorder %s175, %s177
      %p184 = scmp.eq.s32.totalorder %s31, 1
      %p185 = por %p183, %p184
      %p186 = scmp.ne.s32.totalorder %s177, %s178
      %p187 = scmp.eq.s32.totalorder %s31, 0
      %p188 = por %p186, %p187
      %p189 = scmp.ne.s32.totalorder %s177, %s178
      %p190 = scmp.eq.s32.totalorder %s32, 1
      %p191 = por %p189, %p190
      %p193 = scmp.ne.s32.totalorder %s178, %s192
      %p194 = scmp.eq.s32.totalorder %s32, 0
      %p195 = por %p193, %p194
      %s197 = sadd.s32 %s196, 1
      %p200 = scmp.eq.s32.totalorder %s26, 1
      %p201 = scmp.ne.s32.totalorder %s196, %s198
      %p202 = scmp.eq.s32.totalorder %s26, 0
      %p203 = por %p201, %p202
      %p204 = scmp.ne.s32.totalorder %s196, %s198
      %p205 = scmp.eq.s32.totalorder %s31, 1
      %p206 = por %p204, %p205
      %p207 = scmp.ne.s32.totalorder %s198, %s199
      %p208 = scmp.eq.s32.totalorder %s31, 0
      %p209 = por %p207, %p208
      %p210 = scmp.ne.s32.totalorder %s198, %s199
      %p211 = scmp.eq.s32.totalorder %s32, 1
      %p212 = por %p210, %p211
      %p214 = scmp.ne.s32.totalorder %s199, %s213
      %p215 = scmp.eq.s32.totalorder %s32, 0
      %p216 = por %p214, %p215
      %s218 = sadd.s32 %s217, 1
      %p221 = scmp.eq.s32.totalorder %s26, 1
      %p222 = scmp.ne.s32.totalorder %s217, %s219
      %p223 = scmp.eq.s32.totalorder %s26, 0
      %p224 = por %p222, %p223
      %p225 = scmp.ne.s32.totalorder %s217, %s219
      %p226 = scmp.eq.s32.totalorder %s31, 1
      %p227 = por %p225, %p226
      %p228 = scmp.ne.s32.totalorder %s219, %s220
      %p229 = scmp.eq.s32.totalorder %s31, 0
      %p230 = por %p228, %p229
      %p231 = scmp.ne.s32.totalorder %s219, %s220
      %p232 = scmp.eq.s32.totalorder %s32, 1
      %p233 = por %p231, %p232
      %p235 = scmp.ne.s32.totalorder %s220, %s234
      %p236 = scmp.eq.s32.totalorder %s32, 0
      %p237 = por %p235, %p236
      %s239 = sadd.s32 %s238, 1
      %p242 = scmp.eq.s32.totalorder %s26, 1
      %p243 = scmp.ne.s32.totalorder %s238, %s240
      %p244 = scmp.eq.s32.totalorder %s26, 0
      %p245 = por %p243, %p244
      %p246 = scmp.ne.s32.totalorder %s238, %s240
      %p247 = scmp.eq.s32.totalorder %s31, 1
      %p248 = por %p246, %p247
      %p249 = scmp.ne.s32.totalorder %s240, %s241
      %p250 = scmp.eq.s32.totalorder %s31, 0
      %p251 = por %p249, %p250
      %p252 = scmp.ne.s32.totalorder %s240, %s241
      %p253 = scmp.eq.s32.totalorder %s32, 1
      %p254 = por %p252, %p253
      %p256 = scmp.ne.s32.totalorder %s241, %s255
      %p257 = scmp.eq.s32.totalorder %s32, 0
      %p258 = por %p256, %p257
      %s260 = sadd.s32 %s259, 1
      %p263 = scmp.eq.s32.totalorder %s26, 1
      %p264 = scmp.ne.s32.totalorder %s259, %s261
      %p265 = scmp.eq.s32.totalorder %s26, 0
      %p266 = por %p264, %p265
      %p267 = scmp.ne.s32.totalorder %s259, %s261
      %p268 = scmp.eq.s32.totalorder %s31, 1
      %p269 = por %p267, %p268
      %p270 = scmp.ne.s32.totalorder %s261, %s262
      %p271 = scmp.eq.s32.totalorder %s31, 0
      %p272 = por %p270, %p271
      %p273 = scmp.ne.s32.totalorder %s261, %s262
      %p274 = scmp.eq.s32.totalorder %s32, 1
      %p275 = por %p273, %p274
      %p277 = scmp.ne.s32.totalorder %s262, %s276
      %p278 = scmp.eq.s32.totalorder %s32, 0
      %p279 = por %p277, %p278
      %s281 = sadd.s32 %s280, 1
      %p284 = scmp.eq.s32.totalorder %s26, 1
      %p285 = scmp.ne.s32.totalorder %s280, %s282
      %p286 = scmp.eq.s32.totalorder %s26, 0
      %p287 = por %p285, %p286
      %p288 = scmp.ne.s32.totalorder %s280, %s282
      %p289 = scmp.eq.s32.totalorder %s31, 1
      %p290 = por %p288, %p289
      %p291 = scmp.ne.s32.totalorder %s282, %s283
      %p292 = scmp.eq.s32.totalorder %s31, 0
      %p293 = por %p291, %p292
      %p294 = scmp.ne.s32.totalorder %s282, %s283
      %p295 = scmp.eq.s32.totalorder %s32, 1
      %p296 = por %p294, %p295
      %p298 = scmp.ne.s32.totalorder %s283, %s297
      %p299 = scmp.eq.s32.totalorder %s32, 0
      %p300 = por %p298, %p299
      %s302 = sadd.s32 %s301, 1
      %p305 = scmp.eq.s32.totalorder %s26, 1
      %p306 = scmp.ne.s32.totalorder %s301, %s303
      %p307 = scmp.eq.s32.totalorder %s26, 0
      %p308 = por %p306, %p307
      %p309 = scmp.ne.s32.totalorder %s301, %s303
      %p310 = scmp.eq.s32.totalorder %s31, 1
      %p311 = por %p309, %p310
      %p312 = scmp.ne.s32.totalorder %s303, %s304
      %p313 = scmp.eq.s32.totalorder %s31, 0
      %p314 = por %p312, %p313
      %p315 = scmp.ne.s32.totalorder %s303, %s304
      %p316 = scmp.eq.s32.totalorder %s32, 1
      %p317 = por %p315, %p316
      %p319 = scmp.ne.s32.totalorder %s304, %s318
      %p320 = scmp.eq.s32.totalorder %s32, 0
      %p321 = por %p319, %p320
      %s323 = sadd.s32 %s322, 1
      %p326 = scmp.eq.s32.totalorder %s26, 1
      %p327 = scmp.ne.s32.totalorder %s322, %s324
      %p328 = scmp.eq.s32.totalorder %s26, 0
      %p329 = por %p327, %p328
      %p330 = scmp.ne.s32.totalorder %s322, %s324
      %p331 = scmp.eq.s32.totalorder %s31, 1
      %p332 = por %p330, %p331
      %p333 = scmp.ne.s32.totalorder %s324, %s325
      %p334 = scmp.eq.s32.totalorder %s31, 0
      %p335 = por %p333, %p334
      %p336 = scmp.ne.s32.totalorder %s324, %s325
      %p337 = scmp.eq.s32.totalorder %s32, 1
      %p338 = por %p336, %p337
      %p340 = scmp.ne.s32.totalorder %s325, %s339
      %p341 = scmp.eq.s32.totalorder %s32, 0
      %p342 = por %p340, %p341
      %s344 = sadd.s32 %s343, 1
      %p347 = scmp.eq.s32.totalorder %s26, 1
      %p348 = scmp.ne.s32.totalorder %s343, %s345
      %p349 = scmp.eq.s32.totalorder %s26, 0
      %p350 = por %p348, %p349
      %p351 = scmp.ne.s32.totalorder %s343, %s345
      %p352 = scmp.eq.s32.totalorder %s31, 1
      %p353 = por %p351, %p352
      %p354 = scmp.ne.s32.totalorder %s345, %s346
      %p355 = scmp.eq.s32.totalorder %s31, 0
      %p356 = por %p354, %p355
      %p357 = scmp.ne.s32.totalorder %s345, %s346
      %p358 = scmp.eq.s32.totalorder %s32, 1
      %p359 = por %p357, %p358
      %p361 = scmp.ne.s32.totalorder %s346, %s360
      %p362 = scmp.eq.s32.totalorder %s32, 0
      %p363 = por %p361, %p362
      %s364 = ssub.s32 %s26, %s33
      %p365 = scmp.eq.s32.totalorder %s364, 0
      %s367 = sadd.s32 %s366, 1
      %s368 = scalar_select %p365, %s366, %s367
      %p371 = pneg %p365
      %p372 = scmp.eq.s32.totalorder %s26, 1
      %p373 = por %p371, %p372
      %p374 = scmp.ne.s32.totalorder %s366, %s369
      %p375 = scmp.eq.s32.totalorder %s26, 0
      %p376 = por %p374, %p375
      %p377 = scmp.ne.s32.totalorder %s366, %s369
      %p378 = scmp.eq.s32.totalorder %s31, 1
      %p379 = por %p377, %p378
      %p380 = scmp.ne.s32.totalorder %s369, %s370
      %p381 = scmp.eq.s32.totalorder %s31, 0
      %p382 = por %p380, %p381
      %p383 = scmp.ne.s32.totalorder %s369, %s370
      %p384 = scmp.eq.s32.totalorder %s32, 1
      %p385 = por %p383, %p384
      %p387 = scmp.ne.s32.totalorder %s370, %s386
      %p388 = scmp.eq.s32.totalorder %s32, 0
      %p389 = por %p387, %p388
      %s390 = ssub.s32 %s26, %s33
      %p391 = scmp.eq.s32.totalorder %s390, 0
      %s393 = sadd.s32 %s392, 1
      %s394 = scalar_select %p391, %s392, %s393
      %p397 = pneg %p391
      %p398 = scmp.eq.s32.totalorder %s26, 1
      %p399 = por %p397, %p398
      %p400 = scmp.ne.s32.totalorder %s392, %s395
      %p401 = scmp.eq.s32.totalorder %s26, 0
      %p402 = por %p400, %p401
      %p403 = scmp.ne.s32.totalorder %s392, %s395
      %p404 = scmp.eq.s32.totalorder %s31, 1
      %p405 = por %p403, %p404
      %p406 = scmp.ne.s32.totalorder %s395, %s396
      %p407 = scmp.eq.s32.totalorder %s31, 0
      %p408 = por %p406, %p407
      %p409 = scmp.ne.s32.totalorder %s395, %s396
      %p410 = scmp.eq.s32.totalorder %s32, 1
      %p411 = por %p409, %p410
      %p413 = scmp.ne.s32.totalorder %s396, %s412
      %p414 = scmp.eq.s32.totalorder %s32, 0
      %p415 = por %p413, %p414
      %p416 = scmp.le.s32.totalorder 1, %s26
      %p417 = scmp.lt.s32.totalorder %s26, 3
      %p418 = pnand %p416, %p417
      %p419 = pneg %p418
      // Predicated region
      $region9: #{tpu_custom_call.1} parent=5 // pred_check
        _
      $region10: #{tpu_custom_call.1} parent=5 // pred_check_branch
        %421 = sbr.rel (%p418) target = $region12
      $region11: #{tpu_custom_call.1} parent=5 // pred_region
        %s422 = ssub.s32 %s26, 1
        // Predicated region
        $region13: #{tpu_custom_call.1} parent=11 // pred_check
          %p423 = pneg %p125
        $region14: #{tpu_custom_call.1} parent=11 // pred_check_branch
          %425 = sbr.rel (%p423) target = $region16
        $region15: #{tpu_custom_call.1} parent=11 // pred_region
          _
        $region16: #{tpu_custom_call.1} parent=11 // pred_fallthru
          _
        // Predicated region
        $region17: #{tpu_custom_call.1} parent=11 // pred_check
          %p426 = pneg %p146
        $region18: #{tpu_custom_call.1} parent=11 // pred_check_branch
          %428 = sbr.rel (%p426) target = $region20
        $region19: #{tpu_custom_call.1} parent=11 // pred_region
          _
        $region20: #{tpu_custom_call.1} parent=11 // pred_fallthru
          _
        // Predicated region
        $region21: #{tpu_custom_call.1} parent=11 // pred_check
          %p429 = pneg %p167
        $region22: #{tpu_custom_call.1} parent=11 // pred_check_branch
          %431 = sbr.rel (%p429) target = $region24
        $region23: #{tpu_custom_call.1} parent=11 // pred_region
          _
        $region24: #{tpu_custom_call.1} parent=11 // pred_fallthru
          _
        // Predicated region
        $region25: #{tpu_custom_call.1} parent=11 // pred_check
          %p432 = pneg %p188
        $region26: #{tpu_custom_call.1} parent=11 // pred_check_branch
          %434 = sbr.rel (%p432) target = $region28
        $region27: #{tpu_custom_call.1} parent=11 // pred_region
          _
        $region28: #{tpu_custom_call.1} parent=11 // pred_fallthru
          _
        // Predicated region
        $region29: #{tpu_custom_call.1} parent=11 // pred_check
          %p435 = pneg %p209
        $region30: #{tpu_custom_call.1} parent=11 // pred_check_branch
          %437 = sbr.rel (%p435) target = $region32
        $region31: #{tpu_custom_call.1} parent=11 // pred_region
          _
        $region32: #{tpu_custom_call.1} parent=11 // pred_fallthru
          _
        // Predicated region
        $region33: #{tpu_custom_call.1} parent=11 // pred_check
          %p438 = pneg %p230
        $region34: #{tpu_custom_call.1} parent=11 // pred_check_branch
          %440 = sbr.rel (%p438) target = $region36
        $region35: #{tpu_custom_call.1} parent=11 // pred_region
          _
        $region36: #{tpu_custom_call.1} parent=11 // pred_fallthru
          _
        // Predicated region
        $region37: #{tpu_custom_call.1} parent=11 // pred_check
          %p441 = pneg %p251
        $region38: #{tpu_custom_call.1} parent=11 // pred_check_branch
          %443 = sbr.rel (%p441) target = $region40
        $region39: #{tpu_custom_call.1} parent=11 // pred_region
          _
        $region40: #{tpu_custom_call.1} parent=11 // pred_fallthru
          _
        // Predicated region
        $region41: #{tpu_custom_call.1} parent=11 // pred_check
          %p444 = pneg %p272
        $region42: #{tpu_custom_call.1} parent=11 // pred_check_branch
          %446 = sbr.rel (%p444) target = $region44
        $region43: #{tpu_custom_call.1} parent=11 // pred_region
          _
        $region44: #{tpu_custom_call.1} parent=11 // pred_fallthru
          _
        // Predicated region
        $region45: #{tpu_custom_call.1} parent=11 // pred_check
          %p447 = pneg %p293
        $region46: #{tpu_custom_call.1} parent=11 // pred_check_branch
          %449 = sbr.rel (%p447) target = $region48
        $region47: #{tpu_custom_call.1} parent=11 // pred_region
          _
        $region48: #{tpu_custom_call.1} parent=11 // pred_fallthru
          _
        // Predicated region
        $region49: #{tpu_custom_call.1} parent=11 // pred_check
          %p450 = pneg %p314
        $region50: #{tpu_custom_call.1} parent=11 // pred_check_branch
          %452 = sbr.rel (%p450) target = $region52
        $region51: #{tpu_custom_call.1} parent=11 // pred_region
          _
        $region52: #{tpu_custom_call.1} parent=11 // pred_fallthru
          _
        // Predicated region
        $region53: #{tpu_custom_call.1} parent=11 // pred_check
          %p453 = pneg %p335
        $region54: #{tpu_custom_call.1} parent=11 // pred_check_branch
          %455 = sbr.rel (%p453) target = $region56
        $region55: #{tpu_custom_call.1} parent=11 // pred_region
          _
        $region56: #{tpu_custom_call.1} parent=11 // pred_fallthru
          _
        // Predicated region
        $region57: #{tpu_custom_call.1} parent=11 // pred_check
          %p456 = pneg %p356
        $region58: #{tpu_custom_call.1} parent=11 // pred_check_branch
          %458 = sbr.rel (%p456) target = $region60
        $region59: #{tpu_custom_call.1} parent=11 // pred_region
          _
        $region60: #{tpu_custom_call.1} parent=11 // pred_fallthru
          _
      $region12: #{tpu_custom_call.1} parent=5 // pred_fallthru
        _
      %p459 = scmp.lt.s32.totalorder %s26, 2
      // Predicated region
      $region61: #{tpu_custom_call.1} parent=5 // pred_check
        %p460 = pneg %p459
      $region62: #{tpu_custom_call.1} parent=5 // pred_check_branch
        %462 = sbr.rel (%p460) target = $region64
      $region63: #{tpu_custom_call.1} parent=5 // pred_region
        // Predicated region
        $region65: #{tpu_custom_call.1} parent=63 // pred_check
          %p463 = pneg %p46
        $region66: #{tpu_custom_call.1} parent=63 // pred_check_branch
          %465 = sbr.rel (%p463) target = $region68
        $region67: #{tpu_custom_call.1} parent=63 // pred_region
          %p466 = scmp.lt.s32.totalorder %s26, 1
          %s467 = scalar_select %p466, %s26, 1
          %s468 = smul.addr %s467, 8
          %s469 = scalar_lea.vmem %s0, %s468
        $region68: #{tpu_custom_call.1} parent=63 // pred_fallthru
          _
        // Predicated region
        $region69: #{tpu_custom_call.1} parent=63 // pred_check
          %p470 = pneg %p72
        $region70: #{tpu_custom_call.1} parent=63 // pred_check_branch
          %472 = sbr.rel (%p470) target = $region72
        $region71: #{tpu_custom_call.1} parent=63 // pred_region
          %p473 = scmp.lt.s32.totalorder %s26, 1
          %s474 = scalar_select %p473, %s26, 1
          %s475 = scalar_lea.vmem %s1, %s474
        $region72: #{tpu_custom_call.1} parent=63 // pred_fallthru
          _
        // Predicated region
        $region73: #{tpu_custom_call.1} parent=63 // pred_check
          %p476 = pneg %p98
        $region74: #{tpu_custom_call.1} parent=63 // pred_check_branch
          %478 = sbr.rel (%p476) target = $region76
        $region75: #{tpu_custom_call.1} parent=63 // pred_region
          %p479 = scmp.lt.s32.totalorder %s26, 1
          %s480 = scalar_select %p479, %s26, 1
          %s481 = scalar_lea.vmem %s2, %s480
        $region76: #{tpu_custom_call.1} parent=63 // pred_fallthru
          _
      $region64: #{tpu_custom_call.1} parent=5 // pred_fallthru
        _
      %p482 = scmp.le.s32.totalorder 1, %s26
      %p483 = scmp.lt.s32.totalorder %s26, 3
      %p484 = pnand %p482, %p483
      %p485 = pneg %p484
      // Predicated region
      $region77: #{tpu_custom_call.1} parent=5 // pred_check
        _
      $region78: #{tpu_custom_call.1} parent=5 // pred_check_branch
        %487 = sbr.rel (%p484) target = $region80
      $region79: #{tpu_custom_call.1} parent=5 // pred_region
        %s488 = ssub.s32 %s26, 1
        %p489 = scmp.lt.s32.totalorder %s31, 1
        %s490 = scalar_select %p489, %s31, 1
        %s491 = smul.addr %s490, 8
        %s492 = scalar_lea.vmem %s0, %s491
        %p493 = pneg %p52
        %p494 = pneg %p49
        %p495 = scmp.lt.s32.totalorder %s31, 1
        %s496 = scalar_select %p495, %s31, 1
        %s497 = scalar_lea.vmem %s1, %s496
        %p498 = pneg %p78
        %p499 = pneg %p75
        %p500 = scmp.lt.s32.totalorder %s31, 1
        %s501 = scalar_select %p500, %s31, 1
        %s502 = scalar_lea.vmem %s2, %s501
        %p503 = pneg %p104
        %p504 = pneg %p101
        %p505 = pneg %p125
        %p506 = pneg %p122
        %p507 = pneg %p146
        %p508 = pneg %p143
        %p509 = pneg %p167
        %p510 = pneg %p164
        %p511 = pneg %p188
        %p512 = pneg %p185
        %p513 = pneg %p209
        %p514 = pneg %p206
        %p515 = pneg %p230
        %p516 = pneg %p227
        %p517 = pneg %p251
        %p518 = pneg %p248
        %p519 = pneg %p272
        %p520 = pneg %p269
        %p521 = pneg %p293
        %p522 = pneg %p290
        %p523 = pneg %p314
        %p524 = pneg %p311
        %p525 = pneg %p335
        %p526 = pneg %p332
        %p527 = pneg %p356
        %p528 = pneg %p353
        %p529 = pneg %p382
        %p530 = pneg %p379
        %p531 = scmp.lt.s32.totalorder %s31, 1
        %s532 = scalar_select %p531, %s31, 1
        %s533 = smul.addr %s532, 8
        %s534 = scalar_lea.vmem %s15, %s533
        %p535 = pneg %p408
        %p536 = pneg %p405
        %s537 = sand.u32 %s395, 1
        %s538 = scalar_lea.sflag [#allocation3], %s537
        %s539 = sand.u32 %s395, 1
        %s540 = smul.addr %s539, 32
        %s541 = scalar_lea.vmem [#allocation2], %s540
        %p542 = scmp.lt.s32.totalorder %s31, 1
        %s543 = scalar_select %p542, %s31, 1
        %s544 = smul.addr %s543, 8
        %s545 = scalar_lea.vmem %s0, %s544
        %p546 = scmp.lt.s32.totalorder %s31, 1
        %s547 = scalar_select %p546, %s31, 1
        %s548 = scalar_lea.vmem %s1, %s547
        %p549 = scmp.lt.s32.totalorder %s31, 1
        %s550 = scalar_select %p549, %s31, 1
        %s551 = scalar_lea.vmem %s2, %s550
        %p552 = scmp.lt.s32.totalorder %s31, 1
        %s553 = scalar_select %p552, %s31, 1
        %s554 = smul.addr %s553, 8
        %s555 = scalar_lea.vmem %s15, %s554
        %v556 = vld [vmem:[%s545] sm:$0xff]
        %v557 = vld [vmem:[%s548] sm:$0x1]
        %v558 = vld [vmem:[%s551] sm:$0x1]
        %v559 = vlaneseq
        %v560 = vand.u32 %v559, 127
        %v561 = vld [vmem:[%s3] sm:$0xff]
        %v562 = vld [vmem:[%s3 + $0x8] sm:$0xff]
        %v563 = vld [vmem:[%s3 + $0x10] sm:$0xff]
        %v564 = vld [vmem:[%s3 + $0x18] sm:$0xff]
        %v565 = vld [vmem:[%s4] sm:$0xff]
        %v566 = vld [vmem:[%s4 + $0x8] sm:$0xff]
        %v567 = vld [vmem:[%s4 + $0x10] sm:$0xff]
        %v568 = vld [vmem:[%s4 + $0x18] sm:$0xff]
        %570 = vset.pattern.permute.xlu0 0
        %571 = vperm.xlu0 %570, %v565
        %v572 = vpop.permute.xlu0 %571
        %575 = vset.pattern.permute.xlu0 0
        %576 = vperm.xlu0 %575, %v566
        %v577 = vpop.permute.xlu0 %576
        %580 = vset.pattern.permute.xlu0 0
        %581 = vperm.xlu0 %580, %v567
        %v582 = vpop.permute.xlu0 %581
        %585 = vset.pattern.permute.xlu0 0
        %586 = vperm.xlu0 %585, %v568
        %v587 = vpop.permute.xlu0 %586
        %vm589 = vcmask 64512
        %v591 = vsel %vm589, %v561, 0
        %v594 = vsel %vm589, %v562, 0
        %v597 = vsel %vm589, %v563, 0
        %v600 = vsel %vm589, %v564, 0
        %602 = vmatprep.subr.mxu0 0.0
        %603 = vmatpush1.msra.mxu0 %v556
        %604 = vmatprep.subr.mxu0 0.0
        %605 = vmatpush1.msra.mxu0 0.0
        %606 = vmatprep.subr.mxu0 0.0
        %607 = vmatpush1.msra.mxu0 0.0
        %608 = vmatprep.subr.mxu0 0.0
        %609 = vmatpush1.msra.mxu0 0.0
        %610 = vmatprep.subr.mxu0 0.0
        %611 = vmatpush1.msra.mxu0 0.0
        %612 = vmatprep.subr.mxu0 0.0
        %613 = vmatpush1.msra.mxu0 0.0
        %614 = vmatprep.subr.mxu0 0.0
        %615 = vmatpush1.msra.mxu0 0.0
        %616 = vmatprep.subr.mxu0 0.0
        %617 = vmatpush1.msra.mxu0 0.0
        %618 = vmatprep.subr.mxu0 0.0
        %619 = vmatpush1.msra.mxu0 0.0
        %620 = vmatprep.subr.mxu0 0.0
        %621 = vmatpush1.msra.mxu0 0.0
        %622 = vmatprep.subr.mxu0 0.0
        %623 = vmatpush1.msra.mxu0 0.0
        %624 = vmatprep.subr.mxu0 0.0
        %625 = vmatpush1.msra.mxu0 0.0
        %626 = vmatprep.subr.mxu0 0.0
        %627 = vmatpush1.msra.mxu0 0.0
        %628 = vmatprep.subr.mxu0 0.0
        %629 = vmatpush1.msra.mxu0 0.0
        %630 = vmatprep.subr.mxu0 0.0
        %631 = vmatpush1.msra.mxu0 0.0
        %632 = vmatprep.subr.mxu0 0.0
        %633 = vmatpush1.msra.mxu0 0.0
        %634 = vmatprep.subr.mxu0 0.0
        %635 = vmatpush1.msra.mxu0 0.0
        %636 = vmatprep.subr.mxu0 0.0
        %637 = vmatpush1.msra.mxu0 0.0
        %638 = vmatprep.subr.mxu0 0.0
        %639 = vmatpush1.msra.mxu0 0.0
        %640 = vmatprep.subr.mxu0 0.0
        %641 = vmatpush1.msra.mxu0 0.0
        %642 = vmatprep.subr.mxu0 0.0
        %643 = vmatpush1.msra.mxu0 0.0
        %644 = vmatprep.subr.mxu0 0.0
        %645 = vmatpush1.msra.mxu0 0.0
        %646 = vmatprep.subr.mxu0 0.0
        %647 = vmatpush1.msra.mxu0 0.0
        %648 = vmatprep.subr.mxu0 0.0
        %649 = vmatpush1.msra.mxu0 0.0
        %650 = vmatprep.subr.mxu0 0.0
        %651 = vmatpush1.msra.mxu0 0.0
        %652 = vmatprep.subr.mxu0 0.0
        %653 = vmatpush1.msra.mxu0 0.0
        %654 = vmatprep.subr.mxu0 0.0
        %655 = vmatpush1.msra.mxu0 0.0
        %656 = vmatprep.subr.mxu0 0.0
        %657 = vmatpush1.msra.mxu0 0.0
        %658 = vmatprep.subr.mxu0 0.0
        %659 = vmatpush1.msra.mxu0 0.0
        %660 = vmatprep.subr.mxu0 0.0
        %661 = vmatpush1.msra.mxu0 0.0
        %662 = vmatprep.subr.mxu0 0.0
        %663 = vmatpush1.msra.mxu0 0.0
        %664 = vmatprep.subr.mxu0 0.0
        %665 = vmatpush1.msra.mxu0 0.0
        %666 = vmatprep.mubr.f32.mxu0 0.0
        %667 = vmatmul.mubr.f32.gmra.mrb[0].mxu0 %v591
        %v668 = vpop.f32.mrb[0].mxu0
        %v669 = vadd.f32 %v572, %v668
        %v670 = vpop.f32.mrb[0].mxu0
        %671 = vmatprep.mubr.f32.mxu0 0.0
        %672 = vmatmul.mubr.f32.gmra.mrb[0].mxu0 %v594
        %v673 = vpop.f32.mrb[0].mxu0
        %v674 = vadd.f32 %v577, %v673
        %v675 = vpop.f32.mrb[0].mxu0
        %676 = vmatprep.mubr.f32.mxu0 0.0
        %677 = vmatmul.mubr.f32.gmra.mrb[0].mxu0 %v597
        %v678 = vpop.f32.mrb[0].mxu0
        %v679 = vadd.f32 %v582, %v678
        %v680 = vpop.f32.mrb[0].mxu0
        %681 = vmatprep.mubr.f32.mxu0 0.0
        %682 = vmatmul.mubr.f32.gmra.mrb[0].mxu0 %v600
        %v683 = vpop.f32.mrb[0].mxu0
        %v684 = vadd.f32 %v587, %v683
        %v685 = vpop.f32.mrb[0].mxu0
        %686 = vdwg.mxu0
        %vm687 = vcmp.ge.s32.totalorder %v560, 1
        %688 = vrot.lane.b32.xlu0 %v669, 1
        %v689 = vpop.permute.xlu0 %688
        %690 = vrot.lane.b32.xlu0 %v674, 1
        %v691 = vpop.permute.xlu0 %690
        %692 = vrot.lane.b32.xlu0 %v679, 1
        %v693 = vpop.permute.xlu0 %692
        %694 = vrot.lane.b32.xlu0 %v684, 1
        %v695 = vpop.permute.xlu0 %694
        %v696 = vsel %vm687, 1, 0
        %vm697 = vcmp.eq.s32.totalorder %v696, 1
        %v698 = vsel %vm697, %v689, 0.0
        %v699 = vsel %vm697, %v691, 0.0
        %v700 = vsel %vm697, %v693, 0.0
        %v701 = vsel %vm697, %v695, 0.0
        %vm702 = vcmp.lt.s32.totalorder %v560, 127
        %703 = vrot.lane.b32.xlu0 %v669, 127
        %v704 = vpop.permute.xlu0 %703
        %705 = vrot.lane.b32.xlu0 %v674, 127
        %v706 = vpop.permute.xlu0 %705
        %707 = vrot.lane.b32.xlu0 %v679, 127
        %v708 = vpop.permute.xlu0 %707
        %709 = vrot.lane.b32.xlu0 %v684, 127
        %v710 = vpop.permute.xlu0 %709
        %v711 = vsel %vm702, 1, 0
        %vm712 = vcmp.eq.s32.totalorder %v711, 1
        %v713 = vsel %vm712, %v704, 0.0
        %v714 = vsel %vm712, %v706, 0.0
        %v715 = vsel %vm712, %v708, 0.0
        %v716 = vsel %vm712, %v710, 0.0
        %v717 = vld [vmem:[%s5] sm:$0xff]
        %v718 = vld [vmem:[%s5 + $0x8] sm:$0xff]
        %v719 = vld [vmem:[%s5 + $0x10] sm:$0xff]
        %v720 = vld [vmem:[%s5 + $0x18] sm:$0xff]
        %s721 = scalar_lea.vmem %s5, 32
        %v722 = vld [vmem:[%s721] sm:$0xff]
        %v723 = vld [vmem:[%s721 + $0x8] sm:$0xff]
        %v724 = vld [vmem:[%s721 + $0x10] sm:$0xff]
        %v725 = vld [vmem:[%s721 + $0x18] sm:$0xff]
        %vm726 = vcmask 261120
        %v728 = vsel %vm726, %v722, 0
        %v731 = vsel %vm726, %v723, 0
        %v734 = vsel %vm726, %v724, 0
        %v737 = vsel %vm726, %v725, 0
        %739 = vmatprep.subr.mxu0 0.0
        %740 = vmatpush1.msra.mxu0 %v669
        %741 = vmatprep.subr.mxu0 0.0
        %742 = vmatpush1.msra.mxu0 %v674
        %743 = vmatprep.subr.mxu0 0.0
        %744 = vmatpush1.msra.mxu0 %v679
        %745 = vmatprep.subr.mxu0 0.0
        %746 = vmatpush1.msra.mxu0 %v684
        %747 = vmatprep.subr.mxu0 0.0
        %748 = vmatpush1.msra.mxu0 0.0
        %749 = vmatprep.subr.mxu0 0.0
        %750 = vmatpush1.msra.mxu0 0.0
        %751 = vmatprep.subr.mxu0 0.0
        %752 = vmatpush1.msra.mxu0 0.0
        %753 = vmatprep.subr.mxu0 0.0
        %754 = vmatpush1.msra.mxu0 0.0
        %755 = vmatprep.subr.mxu0 0.0
        %756 = vmatpush1.msra.mxu0 0.0
        %757 = vmatprep.subr.mxu0 0.0
        %758 = vmatpush1.msra.mxu0 0.0
        %759 = vmatprep.subr.mxu0 0.0
        %760 = vmatpush1.msra.mxu0 0.0
        %761 = vmatprep.subr.mxu0 0.0
        %762 = vmatpush1.msra.mxu0 0.0
        %763 = vmatprep.subr.mxu0 0.0
        %764 = vmatpush1.msra.mxu0 0.0
        %765 = vmatprep.subr.mxu0 0.0
        %766 = vmatpush1.msra.mxu0 0.0
        %767 = vmatprep.subr.mxu0 0.0
        %768 = vmatpush1.msra.mxu0 0.0
        %769 = vmatprep.subr.mxu0 0.0
        %770 = vmatpush1.msra.mxu0 0.0
        %771 = vmatprep.subr.mxu0 0.0
        %772 = vmatpush1.msra.mxu0 0.0
        %773 = vmatprep.subr.mxu0 0.0
        %774 = vmatpush1.msra.mxu0 0.0
        %775 = vmatprep.subr.mxu0 0.0
        %776 = vmatpush1.msra.mxu0 0.0
        %777 = vmatprep.subr.mxu0 0.0
        %778 = vmatpush1.msra.mxu0 0.0
        %779 = vmatprep.subr.mxu0 0.0
        %780 = vmatpush1.msra.mxu0 0.0
        %781 = vmatprep.subr.mxu0 0.0
        %782 = vmatpush1.msra.mxu0 0.0
        %783 = vmatprep.subr.mxu0 0.0
        %784 = vmatpush1.msra.mxu0 0.0
        %785 = vmatprep.subr.mxu0 0.0
        %786 = vmatpush1.msra.mxu0 0.0
        %787 = vmatprep.subr.mxu0 0.0
        %788 = vmatpush1.msra.mxu0 0.0
        %789 = vmatprep.subr.mxu0 0.0
        %790 = vmatpush1.msra.mxu0 0.0
        %791 = vmatprep.subr.mxu0 0.0
        %792 = vmatpush1.msra.mxu0 0.0
        %793 = vmatprep.subr.mxu0 0.0
        %794 = vmatpush1.msra.mxu0 0.0
        %795 = vmatprep.subr.mxu0 0.0
        %796 = vmatpush1.msra.mxu0 0.0
        %797 = vmatprep.subr.mxu0 0.0
        %798 = vmatpush1.msra.mxu0 0.0
        %799 = vmatprep.subr.mxu0 0.0
        %800 = vmatpush1.msra.mxu0 0.0
        %801 = vmatprep.subr.mxu0 0.0
        %802 = vmatpush1.msra.mxu0 0.0
        %803 = vmatprep.mubr.f32.mxu0 0.0
        %804 = vmatmul.mubr.f32.gmra.mrb[0].mxu0 %v728
        %v805 = vpop.f32.mrb[0].mxu0
        %v806 = vadd.f32 0.0, %v805
        %v807 = vpop.f32.mrb[0].mxu0
        %808 = vmatprep.mubr.f32.mxu0 0.0
        %809 = vmatmul.mubr.f32.gmra.mrb[0].mxu0 %v731
        %v810 = vpop.f32.mrb[0].mxu0
        %v811 = vadd.f32 0.0, %v810
        %v812 = vpop.f32.mrb[0].mxu0
        %813 = vmatprep.mubr.f32.mxu0 0.0
        %814 = vmatmul.mubr.f32.gmra.mrb[0].mxu0 %v734
        %v815 = vpop.f32.mrb[0].mxu0
        %v816 = vadd.f32 0.0, %v815
        %v817 = vpop.f32.mrb[0].mxu0
        %818 = vmatprep.mubr.f32.mxu0 0.0
        %819 = vmatmul.mubr.f32.gmra.mrb[0].mxu0 %v737
        %v820 = vpop.f32.mrb[0].mxu0
        %v821 = vadd.f32 0.0, %v820
        %v822 = vpop.f32.mrb[0].mxu0
        %823 = vdwg.mxu0
        %v825 = vsel %vm726, %v717, 0
        %v828 = vsel %vm726, %v718, 0
        %v831 = vsel %vm726, %v719, 0
        %v834 = vsel %vm726, %v720, 0
        %836 = vmatprep.subr.mxu0 0.0
        %837 = vmatpush1.msra.mxu0 %v698
        %838 = vmatprep.subr.mxu0 0.0
        %839 = vmatpush1.msra.mxu0 %v699
        %840 = vmatprep.subr.mxu0 0.0
        %841 = vmatpush1.msra.mxu0 %v700
        %842 = vmatprep.subr.mxu0 0.0
        %843 = vmatpush1.msra.mxu0 %v701
        %844 = vmatprep.subr.mxu0 0.0
        %845 = vmatpush1.msra.mxu0 0.0
        %846 = vmatprep.subr.mxu0 0.0
        %847 = vmatpush1.msra.mxu0 0.0
        %848 = vmatprep.subr.mxu0 0.0
        %849 = vmatpush1.msra.mxu0 0.0
        %850 = vmatprep.subr.mxu0 0.0
        %851 = vmatpush1.msra.mxu0 0.0
        %852 = vmatprep.subr.mxu0 0.0
        %853 = vmatpush1.msra.mxu0 0.0
        %854 = vmatprep.subr.mxu0 0.0
        %855 = vmatpush1.msra.mxu0 0.0
        %856 = vmatprep.subr.mxu0 0.0
        %857 = vmatpush1.msra.mxu0 0.0
        %858 = vmatprep.subr.mxu0 0.0
        %859 = vmatpush1.msra.mxu0 0.0
        %860 = vmatprep.subr.mxu0 0.0
        %861 = vmatpush1.msra.mxu0 0.0
        %862 = vmatprep.subr.mxu0 0.0
        %863 = vmatpush1.msra.mxu0 0.0
        %864 = vmatprep.subr.mxu0 0.0
        %865 = vmatpush1.msra.mxu0 0.0
        %866 = vmatprep.subr.mxu0 0.0
        %867 = vmatpush1.msra.mxu0 0.0
        %868 = vmatprep.subr.mxu0 0.0
        %869 = vmatpush1.msra.mxu0 0.0
        %870 = vmatprep.subr.mxu0 0.0
        %871 = vmatpush1.msra.mxu0 0.0
        %872 = vmatprep.subr.mxu0 0.0
        %873 = vmatpush1.msra.mxu0 0.0
        %874 = vmatprep.subr.mxu0 0.0
        %875 = vmatpush1.msra.mxu0 0.0
        %876 = vmatprep.subr.mxu0 0.0
        %877 = vmatpush1.msra.mxu0 0.0
        %878 = vmatprep.subr.mxu0 0.0
        %879 = vmatpush1.msra.mxu0 0.0
        %880 = vmatprep.subr.mxu0 0.0
        %881 = vmatpush1.msra.mxu0 0.0
        %882 = vmatprep.subr.mxu0 0.0
        %883 = vmatpush1.msra.mxu0 0.0
        %884 = vmatprep.subr.mxu0 0.0
        %885 = vmatpush1.msra.mxu0 0.0
        %886 = vmatprep.subr.mxu0 0.0
        %887 = vmatpush1.msra.mxu0 0.0
        %888 = vmatprep.subr.mxu0 0.0
        %889 = vmatpush1.msra.mxu0 0.0
        %890 = vmatprep.subr.mxu0 0.0
        %891 = vmatpush1.msra.mxu0 0.0
        %892 = vmatprep.subr.mxu0 0.0
        %893 = vmatpush1.msra.mxu0 0.0
        %894 = vmatprep.subr.mxu0 0.0
        %895 = vmatpush1.msra.mxu0 0.0
        %896 = vmatprep.subr.mxu0 0.0
        %897 = vmatpush1.msra.mxu0 0.0
        %898 = vmatprep.subr.mxu0 0.0
        %899 = vmatpush1.msra.mxu0 0.0
        %900 = vmatprep.mubr.f32.mxu0 0.0
        %901 = vmatmul.mubr.f32.gmra.mrb[0].mxu0 %v825
        %v902 = vpop.f32.mrb[0].mxu0
        %v903 = vadd.f32 %v806, %v902
        %v904 = vpop.f32.mrb[0].mxu0
        %905 = vmatprep.mubr.f32.mxu0 0.0
        %906 = vmatmul.mubr.f32.gmra.mrb[0].mxu0 %v828
        %v907 = vpop.f32.mrb[0].mxu0
        %v908 = vadd.f32 %v811, %v907
        %v909 = vpop.f32.mrb[0].mxu0
        %910 = vmatprep.mubr.f32.mxu0 0.0
        %911 = vmatmul.mubr.f32.gmra.mrb[0].mxu0 %v831
        %v912 = vpop.f32.mrb[0].mxu0
        %v913 = vadd.f32 %v816, %v912
        %v914 = vpop.f32.mrb[0].mxu0
        %915 = vmatprep.mubr.f32.mxu0 0.0
        %916 = vmatmul.mubr.f32.gmra.mrb[0].mxu0 %v834
        %v917 = vpop.f32.mrb[0].mxu0
        %v918 = vadd.f32 %v821, %v917
        %v919 = vpop.f32.mrb[0].mxu0
        %920 = vdwg.mxu0
        %s921 = scalar_lea.vmem %s5, 64
        %v922 = vld [vmem:[%s921] sm:$0xff]
        %v923 = vld [vmem:[%s921 + $0x8] sm:$0xff]
        %v924 = vld [vmem:[%s921 + $0x10] sm:$0xff]
        %v925 = vld [vmem:[%s921 + $0x18] sm:$0xff]
        %v927 = vsel %vm726, %v922, 0
        %v930 = vsel %vm726, %v923, 0
        %v933 = vsel %vm726, %v924, 0
        %v936 = vsel %vm726, %v925, 0
        %938 = vmatprep.subr.mxu0 0.0
        %939 = vmatpush1.msra.mxu0 %v713
        %940 = vmatprep.subr.mxu0 0.0
        %941 = vmatpush1.msra.mxu0 %v714
        %942 = vmatprep.subr.mxu0 0.0
        %943 = vmatpush1.msra.mxu0 %v715
        %944 = vmatprep.subr.mxu0 0.0
        %945 = vmatpush1.msra.mxu0 %v716
        %946 = vmatprep.subr.mxu0 0.0
        %947 = vmatpush1.msra.mxu0 0.0
        %948 = vmatprep.subr.mxu0 0.0
        %949 = vmatpush1.msra.mxu0 0.0
        %950 = vmatprep.subr.mxu0 0.0
        %951 = vmatpush1.msra.mxu0 0.0
        %952 = vmatprep.subr.mxu0 0.0
        %953 = vmatpush1.msra.mxu0 0.0
        %954 = vmatprep.subr.mxu0 0.0
        %955 = vmatpush1.msra.mxu0 0.0
        %956 = vmatprep.subr.mxu0 0.0
        %957 = vmatpush1.msra.mxu0 0.0
        %958 = vmatprep.subr.mxu0 0.0
        %959 = vmatpush1.msra.mxu0 0.0
        %960 = vmatprep.subr.mxu0 0.0
        %961 = vmatpush1.msra.mxu0 0.0
        %962 = vmatprep.subr.mxu0 0.0
        %963 = vmatpush1.msra.mxu0 0.0
        %964 = vmatprep.subr.mxu0 0.0
        %965 = vmatpush1.msra.mxu0 0.0
        %966 = vmatprep.subr.mxu0 0.0
        %967 = vmatpush1.msra.mxu0 0.0
        %968 = vmatprep.subr.mxu0 0.0
        %969 = vmatpush1.msra.mxu0 0.0
        %970 = vmatprep.subr.mxu0 0.0
        %971 = vmatpush1.msra.mxu0 0.0
        %972 = vmatprep.subr.mxu0 0.0
        %973 = vmatpush1.msra.mxu0 0.0
        %974 = vmatprep.subr.mxu0 0.0
        %975 = vmatpush1.msra.mxu0 0.0
        %976 = vmatprep.subr.mxu0 0.0
        %977 = vmatpush1.msra.mxu0 0.0
        %978 = vmatprep.subr.mxu0 0.0
        %979 = vmatpush1.msra.mxu0 0.0
        %980 = vmatprep.subr.mxu0 0.0
        %981 = vmatpush1.msra.mxu0 0.0
        %982 = vmatprep.subr.mxu0 0.0
        %983 = vmatpush1.msra.mxu0 0.0
        %984 = vmatprep.subr.mxu0 0.0
        %985 = vmatpush1.msra.mxu0 0.0
        %986 = vmatprep.subr.mxu0 0.0
        %987 = vmatpush1.msra.mxu0 0.0
        %988 = vmatprep.subr.mxu0 0.0
        %989 = vmatpush1.msra.mxu0 0.0
        %990 = vmatprep.subr.mxu0 0.0
        %991 = vmatpush1.msra.mxu0 0.0
        %992 = vmatprep.subr.mxu0 0.0
        %993 = vmatpush1.msra.mxu0 0.0
        %994 = vmatprep.subr.mxu0 0.0
        %995 = vmatpush1.msra.mxu0 0.0
        %996 = vmatprep.subr.mxu0 0.0
        %997 = vmatpush1.msra.mxu0 0.0
        %998 = vmatprep.subr.mxu0 0.0
        %999 = vmatpush1.msra.mxu0 0.0
        %1000 = vmatprep.subr.mxu0 0.0
        %1001 = vmatpush1.msra.mxu0 0.0
        %1002 = vmatprep.mubr.f32.mxu0 0.0
        %1003 = vmatmul.mubr.f32.gmra.mrb[0].mxu0 %v927
        %v1004 = vpop.f32.mrb[0].mxu0
        %v1005 = vadd.f32 0.0, %v1004
        %v1006 = vpop.f32.mrb[0].mxu0
        %1007 = vmatprep.mubr.f32.mxu0 0.0
        %1008 = vmatmul.mubr.f32.gmra.mrb[0].mxu0 %v930
        %v1009 = vpop.f32.mrb[0].mxu0
        %v1010 = vadd.f32 0.0, %v1009
        %v1011 = vpop.f32.mrb[0].mxu0
        %1012 = vmatprep.mubr.f32.mxu0 0.0
        %1013 = vmatmul.mubr.f32.gmra.mrb[0].mxu0 %v933
        %v1014 = vpop.f32.mrb[0].mxu0
        %v1015 = vadd.f32 0.0, %v1014
        %v1016 = vpop.f32.mrb[0].mxu0
        %1017 = vmatprep.mubr.f32.mxu0 0.0
        %1018 = vmatmul.mubr.f32.gmra.mrb[0].mxu0 %v936
        %v1019 = vpop.f32.mrb[0].mxu0
        %v1020 = vadd.f32 0.0, %v1019
        %v1021 = vpop.f32.mrb[0].mxu0
        %1022 = vdwg.mxu0
        %v1023 = vadd.f32 %v903, %v1005
        %v1024 = vadd.f32 %v908, %v1010
        %v1025 = vadd.f32 %v913, %v1015
        %v1026 = vadd.f32 %v918, %v1020
        %v1027 = vld [vmem:[%s6] sm:$0xff]
        %v1028 = vld [vmem:[%s6 + $0x8] sm:$0xff]
        %v1029 = vld [vmem:[%s6 + $0x10] sm:$0xff]
        %v1030 = vld [vmem:[%s6 + $0x18] sm:$0xff]
        %1032 = vset.pattern.permute.xlu0 0
        %1033 = vperm.xlu0 %1032, %v1027
        %v1034 = vpop.permute.xlu0 %1033
        %1037 = vset.pattern.permute.xlu0 0
        %1038 = vperm.xlu0 %1037, %v1028
        %v1039 = vpop.permute.xlu0 %1038
        %1042 = vset.pattern.permute.xlu0 0
        %1043 = vperm.xlu0 %1042, %v1029
        %v1044 = vpop.permute.xlu0 %1043
        %1047 = vset.pattern.permute.xlu0 0
        %1048 = vperm.xlu0 %1047, %v1030
        %v1049 = vpop.permute.xlu0 %1048
        %v1051 = vadd.f32 %v1023, %v1034
        %v1052 = vadd.f32 %v1024, %v1039
        %v1053 = vadd.f32 %v1025, %v1044
        %v1054 = vadd.f32 %v1026, %v1049
        %v1055 = vmax.f32 %v1051, 0.0
        %v1056 = vmax.f32 %v1052, 0.0
        %v1057 = vmax.f32 %v1053, 0.0
        %v1058 = vmax.f32 %v1054, 0.0
        %1059 = vadd.xlane.f32.xlu0 %v1055
        %v1060 = vpop.xlane.xlu0 %1059
        %1061 = vadd.xlane.f32.xlu0 %v1056
        %v1062 = vpop.xlane.xlu0 %1061
        %1063 = vadd.xlane.f32.xlu0 %v1057
        %v1064 = vpop.xlane.xlu0 %1063
        %1065 = vadd.xlane.f32.xlu0 %v1058
        %v1066 = vpop.xlane.xlu0 %1065
        %v1067 = vrcp.pop 128.0
        %v1068 = vmul.f32 %v1060, %v1067
        %v1069 = vmul.f32 %v1062, %v1067
        %v1070 = vmul.f32 %v1064, %v1067
        %v1071 = vmul.f32 %v1066, %v1067
        %v1072 = vmul.f32 %v1055, %v1055
        %v1073 = vmul.f32 %v1056, %v1056
        %v1074 = vmul.f32 %v1057, %v1057
        %v1075 = vmul.f32 %v1058, %v1058
        %1076 = vadd.xlane.f32.xlu0 %v1072
        %v1077 = vpop.xlane.xlu0 %1076
        %1078 = vadd.xlane.f32.xlu0 %v1073
        %v1079 = vpop.xlane.xlu0 %1078
        %1080 = vadd.xlane.f32.xlu0 %v1074
        %v1081 = vpop.xlane.xlu0 %1080
        %1082 = vadd.xlane.f32.xlu0 %v1075
        %v1083 = vpop.xlane.xlu0 %1082
        %v1084 = vmul.f32 %v1077, %v1067
        %v1085 = vmul.f32 %v1079, %v1067
        %v1086 = vmul.f32 %v1081, %v1067
        %v1087 = vmul.f32 %v1083, %v1067
        %v1088 = vsub.f32 %v1055, %v1068
        %v1089 = vsub.f32 %v1056, %v1069
        %v1090 = vsub.f32 %v1057, %v1070
        %v1091 = vsub.f32 %v1058, %v1071
        %v1092 = vmul.f32 %v1068, %v1068
        %v1093 = vmul.f32 %v1069, %v1069
        %v1094 = vmul.f32 %v1070, %v1070
        %v1095 = vmul.f32 %v1071, %v1071
        %v1096 = vsub.f32 %v1084, %v1092
        %v1097 = vsub.f32 %v1085, %v1093
        %v1098 = vsub.f32 %v1086, %v1094
        %v1099 = vsub.f32 %v1087, %v1095
        %v1100 = vadd.f32 %v1096, 1e-05
        %v1101 = vadd.f32 %v1097, 1e-05
        %v1102 = vadd.f32 %v1098, 1e-05
        %v1103 = vadd.f32 %v1099, 1e-05
        %v1104 = vrsqrt.pop %v1100
        %v1105 = vrsqrt.pop %v1101
        %v1106 = vrsqrt.pop %v1102
        %v1107 = vrsqrt.pop %v1103
        %v1108 = vmul.f32 %v1088, %v1104
        %v1109 = vmul.f32 %v1089, %v1105
        %v1110 = vmul.f32 %v1090, %v1106
        %v1111 = vmul.f32 %v1091, %v1107
        %v1112 = vld [vmem:[%s7] sm:$0xff]
        %v1113 = vld [vmem:[%s7 + $0x8] sm:$0xff]
        %v1114 = vld [vmem:[%s7 + $0x10] sm:$0xff]
        %v1115 = vld [vmem:[%s7 + $0x18] sm:$0xff]
        %v1116 = vld [vmem:[%s7 + $0x20] sm:$0xff]
        %v1117 = vld [vmem:[%s7 + $0x28] sm:$0xff]
        %v1118 = vld [vmem:[%s8] sm:$0xff]
        %v1119 = vld [vmem:[%s8 + $0x8] sm:$0xff]
        %v1120 = vld [vmem:[%s8 + $0x10] sm:$0xff]
        %v1121 = vld [vmem:[%s8 + $0x18] sm:$0xff]
        %v1122 = vld [vmem:[%s8 + $0x20] sm:$0xff]
        %v1123 = vld [vmem:[%s8 + $0x28] sm:$0xff]
        %1125 = vset.pattern.permute.xlu0 0
        %1126 = vperm.xlu0 %1125, %v1118
        %v1127 = vpop.permute.xlu0 %1126
        %1130 = vset.pattern.permute.xlu0 0
        %1131 = vperm.xlu0 %1130, %v1119
        %v1132 = vpop.permute.xlu0 %1131
        %1135 = vset.pattern.permute.xlu0 0
        %1136 = vperm.xlu0 %1135, %v1120
        %v1137 = vpop.permute.xlu0 %1136
        %1140 = vset.pattern.permute.xlu0 0
        %1141 = vperm.xlu0 %1140, %v1121
        %v1142 = vpop.permute.xlu0 %1141
        %1145 = vset.pattern.permute.xlu0 0
        %1146 = vperm.xlu0 %1145, %v1122
        %v1147 = vpop.permute.xlu0 %1146
        %1150 = vset.pattern.permute.xlu0 0
        %1151 = vperm.xlu0 %1150, %v1123
        %v1152 = vpop.permute.xlu0 %1151
        %v1155 = vsel %vm726, %v1112, 0
        %v1158 = vsel %vm726, %v1113, 0
        %v1161 = vsel %vm726, %v1114, 0
        %v1164 = vsel %vm726, %v1115, 0
        %v1167 = vsel %vm726, %v1116, 0
        %v1170 = vsel %vm726, %v1117, 0
        %1172 = vmatprep.subr.mxu0 0.0
        %1173 = vmatpush1.msra.mxu0 %v1108
        %1174 = vmatprep.subr.mxu0 0.0
        %1175 = vmatpush1.msra.mxu0 %v1109
        %1176 = vmatprep.subr.mxu0 0.0
        %1177 = vmatpush1.msra.mxu0 %v1110
        %1178 = vmatprep.subr.mxu0 0.0
        %1179 = vmatpush1.msra.mxu0 %v1111
        %1180 = vmatprep.subr.mxu0 0.0
        %1181 = vmatpush1.msra.mxu0 0.0
        %1182 = vmatprep.subr.mxu0 0.0
        %1183 = vmatpush1.msra.mxu0 0.0
        %1184 = vmatprep.subr.mxu0 0.0
        %1185 = vmatpush1.msra.mxu0 0.0
        %1186 = vmatprep.subr.mxu0 0.0
        %1187 = vmatpush1.msra.mxu0 0.0
        %1188 = vmatprep.subr.mxu0 0.0
        %1189 = vmatpush1.msra.mxu0 0.0
        %1190 = vmatprep.subr.mxu0 0.0
        %1191 = vmatpush1.msra.mxu0 0.0
        %1192 = vmatprep.subr.mxu0 0.0
        %1193 = vmatpush1.msra.mxu0 0.0
        %1194 = vmatprep.subr.mxu0 0.0
        %1195 = vmatpush1.msra.mxu0 0.0
        %1196 = vmatprep.subr.mxu0 0.0
        %1197 = vmatpush1.msra.mxu0 0.0
        %1198 = vmatprep.subr.mxu0 0.0
        %1199 = vmatpush1.msra.mxu0 0.0
        %1200 = vmatprep.subr.mxu0 0.0
        %1201 = vmatpush1.msra.mxu0 0.0
        %1202 = vmatprep.subr.mxu0 0.0
        %1203 = vmatpush1.msra.mxu0 0.0
        %1204 = vmatprep.subr.mxu0 0.0
        %1205 = vmatpush1.msra.mxu0 0.0
        %1206 = vmatprep.subr.mxu0 0.0
        %1207 = vmatpush1.msra.mxu0 0.0
        %1208 = vmatprep.subr.mxu0 0.0
        %1209 = vmatpush1.msra.mxu0 0.0
        %1210 = vmatprep.subr.mxu0 0.0
        %1211 = vmatpush1.msra.mxu0 0.0
        %1212 = vmatprep.subr.mxu0 0.0
        %1213 = vmatpush1.msra.mxu0 0.0
        %1214 = vmatprep.subr.mxu0 0.0
        %1215 = vmatpush1.msra.mxu0 0.0
        %1216 = vmatprep.subr.mxu0 0.0
        %1217 = vmatpush1.msra.mxu0 0.0
        %1218 = vmatprep.subr.mxu0 0.0
        %1219 = vmatpush1.msra.mxu0 0.0
        %1220 = vmatprep.subr.mxu0 0.0
        %1221 = vmatpush1.msra.mxu0 0.0
        %1222 = vmatprep.subr.mxu0 0.0
        %1223 = vmatpush1.msra.mxu0 0.0
        %1224 = vmatprep.subr.mxu0 0.0
        %1225 = vmatpush1.msra.mxu0 0.0
        %1226 = vmatprep.subr.mxu0 0.0
        %1227 = vmatpush1.msra.mxu0 0.0
        %1228 = vmatprep.subr.mxu0 0.0
        %1229 = vmatpush1.msra.mxu0 0.0
        %1230 = vmatprep.subr.mxu0 0.0
        %1231 = vmatpush1.msra.mxu0 0.0
        %1232 = vmatprep.subr.mxu0 0.0
        %1233 = vmatpush1.msra.mxu0 0.0
        %1234 = vmatprep.subr.mxu0 0.0
        %1235 = vmatpush1.msra.mxu0 0.0
        %1236 = vmatprep.mubr.f32.mxu0 0.0
        %1237 = vmatmul.mubr.f32.gmra.mrb[0].mxu0 %v1155
        %v1238 = vpop.f32.mrb[0].mxu0
        %v1239 = vadd.f32 %v1127, %v1238
        %v1240 = vpop.f32.mrb[0].mxu0
        %1241 = vmatprep.mubr.f32.mxu0 0.0
        %1242 = vmatmul.mubr.f32.gmra.mrb[0].mxu0 %v1158
        %v1243 = vpop.f32.mrb[0].mxu0
        %v1244 = vadd.f32 %v1132, %v1243
        %v1245 = vpop.f32.mrb[0].mxu0
        %1246 = vmatprep.mubr.f32.mxu0 0.0
        %1247 = vmatmul.mubr.f32.gmra.mrb[0].mxu0 %v1161
        %v1248 = vpop.f32.mrb[0].mxu0
        %v1249 = vadd.f32 %v1137, %v1248
        %v1250 = vpop.f32.mrb[0].mxu0
        %1251 = vmatprep.mubr.f32.mxu0 0.0
        %1252 = vmatmul.mubr.f32.gmra.mrb[0].mxu0 %v1164
        %v1253 = vpop.f32.mrb[0].mxu0
        %v1254 = vadd.f32 %v1142, %v1253
        %v1255 = vpop.f32.mrb[0].mxu0
        %1256 = vmatprep.mubr.f32.mxu0 0.0
        %1257 = vmatmul.mubr.f32.gmra.mrb[0].mxu0 %v1167
        %v1258 = vpop.f32.mrb[0].mxu0
        %v1259 = vadd.f32 %v1147, %v1258
        %v1260 = vpop.f32.mrb[0].mxu0
        %1261 = vmatprep.mubr.f32.mxu0 0.0
        %1262 = vmatmul.mubr.f32.gmra.mrb[0].mxu0 %v1170
        %v1263 = vpop.f32.mrb[0].mxu0
        %v1264 = vadd.f32 %v1152, %v1263
        %v1265 = vpop.f32.mrb[0].mxu0
        %1266 = vdwg.mxu0
        %1267 = vxpose.xlu0.b32.start [1/16] %v1239, 128
        %1268 = vxpose.xlu0.b32.cont [2/16] %v1244, 128
        %1269 = vxpose.xlu0.b32.cont [3/16] 0.0, 128
        %1270 = vxpose.xlu0.b32.cont [4/16] 0.0, 128
        %1271 = vxpose.xlu0.b32.cont [5/16] 0.0, 128
        %1272 = vxpose.xlu0.b32.cont [6/16] 0.0, 128
        %1273 = vxpose.xlu0.b32.cont [7/16] 0.0, 128
        %1274 = vxpose.xlu0.b32.cont [8/16] 0.0, 128
        %1275 = vxpose.xlu0.b32.cont [9/16] 0.0, 128
        %1276 = vxpose.xlu0.b32.cont [10/16] 0.0, 128
        %1277 = vxpose.xlu0.b32.cont [11/16] 0.0, 128
        %1278 = vxpose.xlu0.b32.cont [12/16] 0.0, 128
        %1279 = vxpose.xlu0.b32.cont [13/16] 0.0, 128
        %1280 = vxpose.xlu0.b32.cont [14/16] 0.0, 128
        %1281 = vxpose.xlu0.b32.cont [15/16] 0.0, 128
        %1282 = vxpose.xlu0.b32.end [16/16] 0.0, 128
        %v1283 = vpop.trf.xlu0
        %v1284 = vpop.trf.xlu0
        %v1285 = vpop.trf.xlu0
        %v1286 = vpop.trf.xlu0
        %v1287 = vpop.trf.xlu0
        %v1288 = vpop.trf.xlu0
        %v1289 = vpop.trf.xlu0
        %v1290 = vpop.trf.xlu0
        %v1291 = vpop.trf.xlu0
        %v1292 = vpop.trf.xlu0
        %v1293 = vpop.trf.xlu0
        %v1294 = vpop.trf.xlu0
        %v1295 = vpop.trf.xlu0
        %v1296 = vpop.trf.xlu0
        %v1297 = vpop.trf.xlu0
        %v1298 = vpop.trf.xlu0
        %vm1299 = vcmask 130048
        %v1301 = vsel %vm1299, %v1283, 0
        %v1304 = vsel %vm1299, %v1284, 0
        %v1307 = vsel %vm1299, %v1285, 0
        %v1310 = vsel %vm1299, %v1286, 0
        %v1313 = vsel %vm1299, %v1287, 0
        %v1316 = vsel %vm1299, %v1288, 0
        %v1319 = vsel %vm1299, %v1289, 0
        %v1322 = vsel %vm1299, %v1290, 0
        %v1325 = vsel %vm1299, %v1291, 0
        %v1328 = vsel %vm1299, %v1292, 0
        %v1331 = vsel %vm1299, %v1293, 0
        %v1334 = vsel %vm1299, %v1294, 0
        %v1337 = vsel %vm1299, %v1295, 0
        %v1340 = vsel %vm1299, %v1296, 0
        %v1343 = vsel %vm1299, %v1297, 0
        %v1346 = vsel %vm1299, %v1298, 0
        %1348 = vmatprep.subr.mxu0 0.0
        %1349 = vmatpush1.msra.mxu0 %v1249
        %1350 = vmatprep.subr.mxu0 0.0
        %1351 = vmatpush1.msra.mxu0 %v1254
        %1352 = vmatprep.subr.mxu0 0.0
        %1353 = vmatpush1.msra.mxu0 0.0
        %1354 = vmatprep.subr.mxu0 0.0
        %1355 = vmatpush1.msra.mxu0 0.0
        %1356 = vmatprep.subr.mxu0 0.0
        %1357 = vmatpush1.msra.mxu0 0.0
        %1358 = vmatprep.subr.mxu0 0.0
        %1359 = vmatpush1.msra.mxu0 0.0
        %1360 = vmatprep.subr.mxu0 0.0
        %1361 = vmatpush1.msra.mxu0 0.0
        %1362 = vmatprep.subr.mxu0 0.0
        %1363 = vmatpush1.msra.mxu0 0.0
        %1364 = vmatprep.subr.mxu0 0.0
        %1365 = vmatpush1.msra.mxu0 0.0
        %1366 = vmatprep.subr.mxu0 0.0
        %1367 = vmatpush1.msra.mxu0 0.0
        %1368 = vmatprep.subr.mxu0 0.0
        %1369 = vmatpush1.msra.mxu0 0.0
        %1370 = vmatprep.subr.mxu0 0.0
        %1371 = vmatpush1.msra.mxu0 0.0
        %1372 = vmatprep.subr.mxu0 0.0
        %1373 = vmatpush1.msra.mxu0 0.0
        %1374 = vmatprep.subr.mxu0 0.0
        %1375 = vmatpush1.msra.mxu0 0.0
        %1376 = vmatprep.subr.mxu0 0.0
        %1377 = vmatpush1.msra.mxu0 0.0
        %1378 = vmatprep.subr.mxu0 0.0
        %1379 = vmatpush1.msra.mxu0 0.0
        %1380 = vmatprep.subr.mxu0 0.0
        %1381 = vmatpush1.msra.mxu0 0.0
        %1382 = vmatprep.subr.mxu0 0.0
        %1383 = vmatpush1.msra.mxu0 0.0
        %1384 = vmatprep.subr.mxu0 0.0
        %1385 = vmatpush1.msra.mxu0 0.0
        %1386 = vmatprep.subr.mxu0 0.0
        %1387 = vmatpush1.msra.mxu0 0.0
        %1388 = vmatprep.subr.mxu0 0.0
        %1389 = vmatpush1.msra.mxu0 0.0
        %1390 = vmatprep.subr.mxu0 0.0
        %1391 = vmatpush1.msra.mxu0 0.0
        %1392 = vmatprep.subr.mxu0 0.0
        %1393 = vmatpush1.msra.mxu0 0.0
        %1394 = vmatprep.subr.mxu0 0.0
        %1395 = vmatpush1.msra.mxu0 0.0
        %1396 = vmatprep.subr.mxu0 0.0
        %1397 = vmatpush1.msra.mxu0 0.0
        %1398 = vmatprep.subr.mxu0 0.0
        %1399 = vmatpush1.msra.mxu0 0.0
        %1400 = vmatprep.subr.mxu0 0.0
        %1401 = vmatpush1.msra.mxu0 0.0
        %1402 = vmatprep.subr.mxu0 0.0
        %1403 = vmatpush1.msra.mxu0 0.0
        %1404 = vmatprep.subr.mxu0 0.0
        %1405 = vmatpush1.msra.mxu0 0.0
        %1406 = vmatprep.subr.mxu0 0.0
        %1407 = vmatpush1.msra.mxu0 0.0
        %1408 = vmatprep.subr.mxu0 0.0
        %1409 = vmatpush1.msra.mxu0 0.0
        %1410 = vmatprep.subr.mxu0 0.0
        %1411 = vmatpush1.msra.mxu0 0.0
        %1412 = vmatprep.mubr.f32.mxu0 0.0
        %1413 = vmatmul.mubr.f32.gmra.mrb[0].mxu0 %v1301
        %v1414 = vpop.f32.mrb[0].mxu0
        %v1415 = vadd.f32 0.0, %v1414
        %v1416 = vpop.f32.mrb[0].mxu0
        %1417 = vmatprep.mubr.f32.mxu0 0.0
        %1418 = vmatmul.mubr.f32.gmra.mrb[0].mxu0 %v1304
        %v1419 = vpop.f32.mrb[0].mxu0
        %v1420 = vadd.f32 0.0, %v1419
        %v1421 = vpop.f32.mrb[0].mxu0
        %1422 = vmatprep.mubr.f32.mxu0 0.0
        %1423 = vmatmul.mubr.f32.gmra.mrb[0].mxu0 %v1307
        %v1424 = vpop.f32.mrb[0].mxu0
        %v1425 = vadd.f32 0.0, %v1424
        %v1426 = vpop.f32.mrb[0].mxu0
        %1427 = vmatprep.mubr.f32.mxu0 0.0
        %1428 = vmatmul.mubr.f32.gmra.mrb[0].mxu0 %v1310
        %v1429 = vpop.f32.mrb[0].mxu0
        %v1430 = vadd.f32 0.0, %v1429
        %v1431 = vpop.f32.mrb[0].mxu0
        %1432 = vmatprep.mubr.f32.mxu0 0.0
        %1433 = vmatmul.mubr.f32.gmra.mrb[0].mxu0 %v1313
        %v1434 = vpop.f32.mrb[0].mxu0
        %v1435 = vadd.f32 0.0, %v1434
        %v1436 = vpop.f32.mrb[0].mxu0
        %1437 = vmatprep.mubr.f32.mxu0 0.0
        %1438 = vmatmul.mubr.f32.gmra.mrb[0].mxu0 %v1316
        %v1439 = vpop.f32.mrb[0].mxu0
        %v1440 = vadd.f32 0.0, %v1439
        %v1441 = vpop.f32.mrb[0].mxu0
        %1442 = vmatprep.mubr.f32.mxu0 0.0
        %1443 = vmatmul.mubr.f32.gmra.mrb[0].mxu0 %v1319
        %v1444 = vpop.f32.mrb[0].mxu0
        %v1445 = vadd.f32 0.0, %v1444
        %v1446 = vpop.f32.mrb[0].mxu0
        %1447 = vmatprep.mubr.f32.mxu0 0.0
        %1448 = vmatmul.mubr.f32.gmra.mrb[0].mxu0 %v1322
        %v1449 = vpop.f32.mrb[0].mxu0
        %v1450 = vadd.f32 0.0, %v1449
        %v1451 = vpop.f32.mrb[0].mxu0
        %1452 = vmatprep.mubr.f32.mxu0 0.0
        %1453 = vmatmul.mubr.f32.gmra.mrb[0].mxu0 %v1325
        %v1454 = vpop.f32.mrb[0].mxu0
        %v1455 = vadd.f32 0.0, %v1454
        %v1456 = vpop.f32.mrb[0].mxu0
        %1457 = vmatprep.mubr.f32.mxu0 0.0
        %1458 = vmatmul.mubr.f32.gmra.mrb[0].mxu0 %v1328
        %v1459 = vpop.f32.mrb[0].mxu0
        %v1460 = vadd.f32 0.0, %v1459
        %v1461 = vpop.f32.mrb[0].mxu0
        %1462 = vmatprep.mubr.f32.mxu0 0.0
        %1463 = vmatmul.mubr.f32.gmra.mrb[0].mxu0 %v1331
        %v1464 = vpop.f32.mrb[0].mxu0
        %v1465 = vadd.f32 0.0, %v1464
        %v1466 = vpop.f32.mrb[0].mxu0
        %1467 = vmatprep.mubr.f32.mxu0 0.0
        %1468 = vmatmul.mubr.f32.gmra.mrb[0].mxu0 %v1334
        %v1469 = vpop.f32.mrb[0].mxu0
        %v1470 = vadd.f32 0.0, %v1469
        %v1471 = vpop.f32.mrb[0].mxu0
        %1472 = vmatprep.mubr.f32.mxu0 0.0
        %1473 = vmatmul.mubr.f32.gmra.mrb[0].mxu0 %v1337
        %v1474 = vpop.f32.mrb[0].mxu0
        %v1475 = vadd.f32 0.0, %v1474
        %v1476 = vpop.f32.mrb[0].mxu0
        %1477 = vmatprep.mubr.f32.mxu0 0.0
        %1478 = vmatmul.mubr.f32.gmra.mrb[0].mxu0 %v1340
        %v1479 = vpop.f32.mrb[0].mxu0
        %v1480 = vadd.f32 0.0, %v1479
        %v1481 = vpop.f32.mrb[0].mxu0
        %1482 = vmatprep.mubr.f32.mxu0 0.0
        %1483 = vmatmul.mubr.f32.gmra.mrb[0].mxu0 %v1343
        %v1484 = vpop.f32.mrb[0].mxu0
        %v1485 = vadd.f32 0.0, %v1484
        %v1486 = vpop.f32.mrb[0].mxu0
        %1487 = vmatprep.mubr.f32.mxu0 0.0
        %1488 = vmatmul.mubr.f32.gmra.mrb[0].mxu0 %v1346
        %v1489 = vpop.f32.mrb[0].mxu0
        %v1490 = vadd.f32 0.0, %v1489
        %v1491 = vpop.f32.mrb[0].mxu0
        %1492 = vdwg.mxu0
        %v1493 = vmul.f32 %v1415, 0.25
        %v1494 = vmul.f32 %v1420, 0.25
        %v1495 = vmul.f32 %v1425, 0.25
        %v1496 = vmul.f32 %v1430, 0.25
        %v1497 = vmul.f32 %v1435, 0.25
        %v1498 = vmul.f32 %v1440, 0.25
        %v1499 = vmul.f32 %v1445, 0.25
        %v1500 = vmul.f32 %v1450, 0.25
        %v1501 = vmul.f32 %v1455, 0.25
        %v1502 = vmul.f32 %v1460, 0.25
        %v1503 = vmul.f32 %v1465, 0.25
        %v1504 = vmul.f32 %v1470, 0.25
        %v1505 = vmul.f32 %v1475, 0.25
        %v1506 = vmul.f32 %v1480, 0.25
        %v1507 = vmul.f32 %v1485, 0.25
        %v1508 = vmul.f32 %v1490, 0.25
        %v1510 = vlaneseq
        %v1511 = vshrl.u32 %v1510, 7
        %v1512 = vsub.s32 0, %v1511
        %v1513 = vrot.slane %v558, %v1512
        %v1515 = vadd.f32 %v1493, %v1513
        %v1516 = vadd.f32 %v1494, %v1513
        %v1517 = vadd.f32 %v1495, %v1513
        %v1518 = vadd.f32 %v1496, %v1513
        %v1519 = vadd.f32 %v1497, %v1513
        %v1520 = vadd.f32 %v1498, %v1513
        %v1521 = vadd.f32 %v1499, %v1513
        %v1522 = vadd.f32 %v1500, %v1513
        %v1523 = vadd.f32 %v1501, %v1513
        %v1524 = vadd.f32 %v1502, %v1513
        %v1525 = vadd.f32 %v1503, %v1513
        %v1526 = vadd.f32 %v1504, %v1513
        %v1527 = vadd.f32 %v1505, %v1513
        %v1528 = vadd.f32 %v1506, %v1513
        %v1529 = vadd.f32 %v1507, %v1513
        %v1530 = vadd.f32 %v1508, %v1513
        %1531 = vmax.xlane.f32.xlu0 %v1515
        %v1532 = vpop.xlane.xlu0 %1531
        %1533 = vmax.xlane.f32.xlu0 %v1516
        %v1534 = vpop.xlane.xlu0 %1533
        %1535 = vmax.xlane.f32.xlu0 %v1517
        %v1536 = vpop.xlane.xlu0 %1535
        %1537 = vmax.xlane.f32.xlu0 %v1518
        %v1538 = vpop.xlane.xlu0 %1537
        %1539 = vmax.xlane.f32.xlu0 %v1519
        %v1540 = vpop.xlane.xlu0 %1539
        %1541 = vmax.xlane.f32.xlu0 %v1520
        %v1542 = vpop.xlane.xlu0 %1541
        %1543 = vmax.xlane.f32.xlu0 %v1521
        %v1544 = vpop.xlane.xlu0 %1543
        %1545 = vmax.xlane.f32.xlu0 %v1522
        %v1546 = vpop.xlane.xlu0 %1545
        %1547 = vmax.xlane.f32.xlu0 %v1523
        %v1548 = vpop.xlane.xlu0 %1547
        %1549 = vmax.xlane.f32.xlu0 %v1524
        %v1550 = vpop.xlane.xlu0 %1549
        %1551 = vmax.xlane.f32.xlu0 %v1525
        %v1552 = vpop.xlane.xlu0 %1551
        %1553 = vmax.xlane.f32.xlu0 %v1526
        %v1554 = vpop.xlane.xlu0 %1553
        %1555 = vmax.xlane.f32.xlu0 %v1527
        %v1556 = vpop.xlane.xlu0 %1555
        %1557 = vmax.xlane.f32.xlu0 %v1528
        %v1558 = vpop.xlane.xlu0 %1557
        %1559 = vmax.xlane.f32.xlu0 %v1529
        %v1560 = vpop.xlane.xlu0 %1559
        %1561 = vmax.xlane.f32.xlu0 %v1530
        %v1562 = vpop.xlane.xlu0 %1561
        %v1563 = vsub.f32 %v1515, %v1532
        %v1564 = vsub.f32 %v1516, %v1534
        %v1565 = vsub.f32 %v1517, %v1536
        %v1566 = vsub.f32 %v1518, %v1538
        %v1567 = vsub.f32 %v1519, %v1540
        %v1568 = vsub.f32 %v1520, %v1542
        %v1569 = vsub.f32 %v1521, %v1544
        %v1570 = vsub.f32 %v1522, %v1546
        %v1571 = vsub.f32 %v1523, %v1548
        %v1572 = vsub.f32 %v1524, %v1550
        %v1573 = vsub.f32 %v1525, %v1552
        %v1574 = vsub.f32 %v1526, %v1554
        %v1575 = vsub.f32 %v1527, %v1556
        %v1576 = vsub.f32 %v1528, %v1558
        %v1577 = vsub.f32 %v1529, %v1560
        %v1578 = vsub.f32 %v1530, %v1562
        %v1579 = vmul.f32 %v1563, 1.442695
        %v1580 = vpow.pop %v1579
        %v1581 = vmul.f32 %v1564, 1.442695
        %v1582 = vpow.pop %v1581
        %v1583 = vmul.f32 %v1565, 1.442695
        %v1584 = vpow.pop %v1583
        %v1585 = vmul.f32 %v1566, 1.442695
        %v1586 = vpow.pop %v1585
        %v1587 = vmul.f32 %v1567, 1.442695
        %v1588 = vpow.pop %v1587
        %v1589 = vmul.f32 %v1568, 1.442695
        %v1590 = vpow.pop %v1589
        %v1591 = vmul.f32 %v1569, 1.442695
        %v1592 = vpow.pop %v1591
        %v1593 = vmul.f32 %v1570, 1.442695
        %v1594 = vpow.pop %v1593
        %v1595 = vmul.f32 %v1571, 1.442695
        %v1596 = vpow.pop %v1595
        %v1597 = vmul.f32 %v1572, 1.442695
        %v1598 = vpow.pop %v1597
        %v1599 = vmul.f32 %v1573, 1.442695
        %v1600 = vpow.pop %v1599
        %v1601 = vmul.f32 %v1574, 1.442695
        %v1602 = vpow.pop %v1601
        %v1603 = vmul.f32 %v1575, 1.442695
        %v1604 = vpow.pop %v1603
        %v1605 = vmul.f32 %v1576, 1.442695
        %v1606 = vpow.pop %v1605
        %v1607 = vmul.f32 %v1577, 1.442695
        %v1608 = vpow.pop %v1607
        %v1609 = vmul.f32 %v1578, 1.442695
        %v1610 = vpow.pop %v1609
        %1611 = vadd.xlane.f32.xlu0 %v1580
        %v1612 = vpop.xlane.xlu0 %1611
        %1613 = vadd.xlane.f32.xlu0 %v1582
        %v1614 = vpop.xlane.xlu0 %1613
        %1615 = vadd.xlane.f32.xlu0 %v1584
        %v1616 = vpop.xlane.xlu0 %1615
        %1617 = vadd.xlane.f32.xlu0 %v1586
        %v1618 = vpop.xlane.xlu0 %1617
        %1619 = vadd.xlane.f32.xlu0 %v1588
        %v1620 = vpop.xlane.xlu0 %1619
        %1621 = vadd.xlane.f32.xlu0 %v1590
        %v1622 = vpop.xlane.xlu0 %1621
        %1623 = vadd.xlane.f32.xlu0 %v1592
        %v1624 = vpop.xlane.xlu0 %1623
        %1625 = vadd.xlane.f32.xlu0 %v1594
        %v1626 = vpop.xlane.xlu0 %1625
        %1627 = vadd.xlane.f32.xlu0 %v1596
        %v1628 = vpop.xlane.xlu0 %1627
        %1629 = vadd.xlane.f32.xlu0 %v1598
        %v1630 = vpop.xlane.xlu0 %1629
        %1631 = vadd.xlane.f32.xlu0 %v1600
        %v1632 = vpop.xlane.xlu0 %1631
        %1633 = vadd.xlane.f32.xlu0 %v1602
        %v1634 = vpop.xlane.xlu0 %1633
        %1635 = vadd.xlane.f32.xlu0 %v1604
        %v1636 = vpop.xlane.xlu0 %1635
        %1637 = vadd.xlane.f32.xlu0 %v1606
        %v1638 = vpop.xlane.xlu0 %1637
        %1639 = vadd.xlane.f32.xlu0 %v1608
        %v1640 = vpop.xlane.xlu0 %1639
        %1641 = vadd.xlane.f32.xlu0 %v1610
        %v1642 = vpop.xlane.xlu0 %1641
        %v1643 = vrcp.pop %v1612
        %v1644 = vrcp.pop %v1614
        %v1645 = vrcp.pop %v1616
        %v1646 = vrcp.pop %v1618
        %v1647 = vrcp.pop %v1620
        %v1648 = vrcp.pop %v1622
        %v1649 = vrcp.pop %v1624
        %v1650 = vrcp.pop %v1626
        %v1651 = vrcp.pop %v1628
        %v1652 = vrcp.pop %v1630
        %v1653 = vrcp.pop %v1632
        %v1654 = vrcp.pop %v1634
        %v1655 = vrcp.pop %v1636
        %v1656 = vrcp.pop %v1638
        %v1657 = vrcp.pop %v1640
        %v1658 = vrcp.pop %v1642
        %v1659 = vmul.f32 %v1580, %v1643
        %v1660 = vmul.f32 %v1582, %v1644
        %v1661 = vmul.f32 %v1584, %v1645
        %v1662 = vmul.f32 %v1586, %v1646
        %v1663 = vmul.f32 %v1588, %v1647
        %v1664 = vmul.f32 %v1590, %v1648
        %v1665 = vmul.f32 %v1592, %v1649
        %v1666 = vmul.f32 %v1594, %v1650
        %v1667 = vmul.f32 %v1596, %v1651
        %v1668 = vmul.f32 %v1598, %v1652
        %v1669 = vmul.f32 %v1600, %v1653
        %v1670 = vmul.f32 %v1602, %v1654
        %v1671 = vmul.f32 %v1604, %v1655
        %v1672 = vmul.f32 %v1606, %v1656
        %v1673 = vmul.f32 %v1608, %v1657
        %v1674 = vmul.f32 %v1610, %v1658
        %v1676 = vlaneseq
        %v1677 = vshrl.u32 %v1676, 7
        %v1678 = vsub.s32 0, %v1677
        %v1679 = vrot.slane %v557, %v1678
        %v1681 = vmul.f32 %v1659, %v1679
        %v1682 = vmul.f32 %v1660, %v1679
        %v1683 = vmul.f32 %v1661, %v1679
        %v1684 = vmul.f32 %v1662, %v1679
        %v1685 = vmul.f32 %v1663, %v1679
        %v1686 = vmul.f32 %v1664, %v1679
        %v1687 = vmul.f32 %v1665, %v1679
        %v1688 = vmul.f32 %v1666, %v1679
        %v1689 = vmul.f32 %v1667, %v1679
        %v1690 = vmul.f32 %v1668, %v1679
        %v1691 = vmul.f32 %v1669, %v1679
        %v1692 = vmul.f32 %v1670, %v1679
        %v1693 = vmul.f32 %v1671, %v1679
        %v1694 = vmul.f32 %v1672, %v1679
        %v1695 = vmul.f32 %v1673, %v1679
        %v1696 = vmul.f32 %v1674, %v1679
        %1697 = vmatprep.subr.mxu0 0.0
        %1698 = vmatpush1.xpose.msra.mxu0 %v1681
        %1699 = vmatprep.subr.mxu0 0.0
        %1700 = vmatpush1.xpose.msra.mxu0 %v1682
        %1701 = vmatprep.subr.mxu0 0.0
        %1702 = vmatpush1.xpose.msra.mxu0 %v1683
        %1703 = vmatprep.subr.mxu0 0.0
        %1704 = vmatpush1.xpose.msra.mxu0 %v1684
        %1705 = vmatprep.subr.mxu0 0.0
        %1706 = vmatpush1.xpose.msra.mxu0 %v1685
        %1707 = vmatprep.subr.mxu0 0.0
        %1708 = vmatpush1.xpose.msra.mxu0 %v1686
        %1709 = vmatprep.subr.mxu0 0.0
        %1710 = vmatpush1.xpose.msra.mxu0 %v1687
        %1711 = vmatprep.subr.mxu0 0.0
        %1712 = vmatpush1.xpose.msra.mxu0 %v1688
        %1713 = vmatprep.subr.mxu0 0.0
        %1714 = vmatpush1.xpose.msra.mxu0 %v1689
        %1715 = vmatprep.subr.mxu0 0.0
        %1716 = vmatpush1.xpose.msra.mxu0 %v1690
        %1717 = vmatprep.subr.mxu0 0.0
        %1718 = vmatpush1.xpose.msra.mxu0 %v1691
        %1719 = vmatprep.subr.mxu0 0.0
        %1720 = vmatpush1.xpose.msra.mxu0 %v1692
        %1721 = vmatprep.subr.mxu0 0.0
        %1722 = vmatpush1.xpose.msra.mxu0 %v1693
        %1723 = vmatprep.subr.mxu0 0.0
        %1724 = vmatpush1.xpose.msra.mxu0 %v1694
        %1725 = vmatprep.subr.mxu0 0.0
        %1726 = vmatpush1.xpose.msra.mxu0 %v1695
        %1727 = vmatprep.subr.mxu0 0.0
        %1728 = vmatpush1.xpose.msra.mxu0 %v1696
        %1729 = vmatprep.subr.mxu0 0.0
        %1730 = vmatpush1.xpose.msra.mxu0 0.0
        %1731 = vmatprep.subr.mxu0 0.0
        %1732 = vmatpush1.xpose.msra.mxu0 0.0
        %1733 = vmatprep.subr.mxu0 0.0
        %1734 = vmatpush1.xpose.msra.mxu0 0.0
        %1735 = vmatprep.subr.mxu0 0.0
        %1736 = vmatpush1.xpose.msra.mxu0 0.0
        %1737 = vmatprep.subr.mxu0 0.0
        %1738 = vmatpush1.xpose.msra.mxu0 0.0
        %1739 = vmatprep.subr.mxu0 0.0
        %1740 = vmatpush1.xpose.msra.mxu0 0.0
        %1741 = vmatprep.subr.mxu0 0.0
        %1742 = vmatpush1.xpose.msra.mxu0 0.0
        %1743 = vmatprep.subr.mxu0 0.0
        %1744 = vmatpush1.xpose.msra.mxu0 0.0
        %1745 = vmatprep.subr.mxu0 0.0
        %1746 = vmatpush1.xpose.msra.mxu0 0.0
        %1747 = vmatprep.subr.mxu0 0.0
        %1748 = vmatpush1.xpose.msra.mxu0 0.0
        %1749 = vmatprep.subr.mxu0 0.0
        %1750 = vmatpush1.xpose.msra.mxu0 0.0
        %1751 = vmatprep.subr.mxu0 0.0
        %1752 = vmatpush1.xpose.msra.mxu0 0.0
        %1753 = vmatprep.subr.mxu0 0.0
        %1754 = vmatpush1.xpose.msra.mxu0 0.0
        %1755 = vmatprep.subr.mxu0 0.0
        %1756 = vmatpush1.xpose.msra.mxu0 0.0
        %1757 = vmatprep.subr.mxu0 0.0
        %1758 = vmatpush1.xpose.msra.mxu0 0.0
        %1759 = vmatprep.subr.mxu0 0.0
        %1760 = vmatpush1.xpose.msra.mxu0 0.0
        %1761 = vmatprep.mubr.f32.mxu0 0.0
        %1762 = vmatmul.mubr.f32.gmra.mrb[0].mxu0 %v1259
        %v1763 = vpop.f32.mrb[0].mxu0
        %v1764 = vadd.f32 0.0, %v1763
        %v1765 = vpop.f32.mrb[0].mxu0
        %1766 = vmatprep.mubr.f32.mxu0 0.0
        %1767 = vmatmul.mubr.f32.gmra.mrb[0].mxu0 %v1264
        %v1768 = vpop.f32.mrb[0].mxu0
        %v1769 = vadd.f32 0.0, %v1768
        %v1770 = vpop.f32.mrb[0].mxu0
        %1771 = vdwg.mxu0
        %v1772 = vld [vmem:[%s9] sm:$0xff]
        %v1773 = vld [vmem:[%s9 + $0x8] sm:$0xff]
        %v1774 = vld [vmem:[%s9 + $0x10] sm:$0xff]
        %v1775 = vld [vmem:[%s9 + $0x18] sm:$0xff]
        %v1776 = vmax.f32 %v1764, 0.0
        %v1777 = vmax.f32 %v1769, 0.0
        %v1778 = vld [vmem:[%s10] sm:$0xff]
        %v1779 = vld [vmem:[%s10 + $0x8] sm:$0xff]
        %v1780 = vld [vmem:[%s10 + $0x10] sm:$0xff]
        %v1781 = vld [vmem:[%s10 + $0x18] sm:$0xff]
        %1783 = vset.pattern.permute.xlu0 0
        %1784 = vperm.xlu0 %1783, %v1778
        %v1785 = vpop.permute.xlu0 %1784
        %1788 = vset.pattern.permute.xlu0 0
        %1789 = vperm.xlu0 %1788, %v1779
        %v1790 = vpop.permute.xlu0 %1789
        %1793 = vset.pattern.permute.xlu0 0
        %1794 = vperm.xlu0 %1793, %v1780
        %v1795 = vpop.permute.xlu0 %1794
        %1798 = vset.pattern.permute.xlu0 0
        %1799 = vperm.xlu0 %1798, %v1781
        %v1800 = vpop.permute.xlu0 %1799
        %v1803 = vsel %vm1299, %v1772, 0
        %v1806 = vsel %vm1299, %v1773, 0
        %v1809 = vsel %vm1299, %v1774, 0
        %v1812 = vsel %vm1299, %v1775, 0
        %1814 = vmatprep.subr.mxu0 0.0
        %1815 = vmatpush1.msra.mxu0 %v1776
        %1816 = vmatprep.subr.mxu0 0.0
        %1817 = vmatpush1.msra.mxu0 %v1777
        %1818 = vmatprep.subr.mxu0 0.0
        %1819 = vmatpush1.msra.mxu0 0.0
        %1820 = vmatprep.subr.mxu0 0.0
        %1821 = vmatpush1.msra.mxu0 0.0
        %1822 = vmatprep.subr.mxu0 0.0
        %1823 = vmatpush1.msra.mxu0 0.0
        %1824 = vmatprep.subr.mxu0 0.0
        %1825 = vmatpush1.msra.mxu0 0.0
        %1826 = vmatprep.subr.mxu0 0.0
        %1827 = vmatpush1.msra.mxu0 0.0
        %1828 = vmatprep.subr.mxu0 0.0
        %1829 = vmatpush1.msra.mxu0 0.0
        %1830 = vmatprep.subr.mxu0 0.0
        %1831 = vmatpush1.msra.mxu0 0.0
        %1832 = vmatprep.subr.mxu0 0.0
        %1833 = vmatpush1.msra.mxu0 0.0
        %1834 = vmatprep.subr.mxu0 0.0
        %1835 = vmatpush1.msra.mxu0 0.0
        %1836 = vmatprep.subr.mxu0 0.0
        %1837 = vmatpush1.msra.mxu0 0.0
        %1838 = vmatprep.subr.mxu0 0.0
        %1839 = vmatpush1.msra.mxu0 0.0
        %1840 = vmatprep.subr.mxu0 0.0
        %1841 = vmatpush1.msra.mxu0 0.0
        %1842 = vmatprep.subr.mxu0 0.0
        %1843 = vmatpush1.msra.mxu0 0.0
        %1844 = vmatprep.subr.mxu0 0.0
        %1845 = vmatpush1.msra.mxu0 0.0
        %1846 = vmatprep.subr.mxu0 0.0
        %1847 = vmatpush1.msra.mxu0 0.0
        %1848 = vmatprep.subr.mxu0 0.0
        %1849 = vmatpush1.msra.mxu0 0.0
        %1850 = vmatprep.subr.mxu0 0.0
        %1851 = vmatpush1.msra.mxu0 0.0
        %1852 = vmatprep.subr.mxu0 0.0
        %1853 = vmatpush1.msra.mxu0 0.0
        %1854 = vmatprep.subr.mxu0 0.0
        %1855 = vmatpush1.msra.mxu0 0.0
        %1856 = vmatprep.subr.mxu0 0.0
        %1857 = vmatpush1.msra.mxu0 0.0
        %1858 = vmatprep.subr.mxu0 0.0
        %1859 = vmatpush1.msra.mxu0 0.0
        %1860 = vmatprep.subr.mxu0 0.0
        %1861 = vmatpush1.msra.mxu0 0.0
        %1862 = vmatprep.subr.mxu0 0.0
        %1863 = vmatpush1.msra.mxu0 0.0
        %1864 = vmatprep.subr.mxu0 0.0
        %1865 = vmatpush1.msra.mxu0 0.0
        %1866 = vmatprep.subr.mxu0 0.0
        %1867 = vmatpush1.msra.mxu0 0.0
        %1868 = vmatprep.subr.mxu0 0.0
        %1869 = vmatpush1.msra.mxu0 0.0
        %1870 = vmatprep.subr.mxu0 0.0
        %1871 = vmatpush1.msra.mxu0 0.0
        %1872 = vmatprep.subr.mxu0 0.0
        %1873 = vmatpush1.msra.mxu0 0.0
        %1874 = vmatprep.subr.mxu0 0.0
        %1875 = vmatpush1.msra.mxu0 0.0
        %1876 = vmatprep.subr.mxu0 0.0
        %1877 = vmatpush1.msra.mxu0 0.0
        %1878 = vmatprep.mubr.f32.mxu0 0.0
        %1879 = vmatmul.mubr.f32.gmra.mrb[0].mxu0 %v1803
        %v1880 = vpop.f32.mrb[0].mxu0
        %v1881 = vadd.f32 %v1785, %v1880
        %v1882 = vpop.f32.mrb[0].mxu0
        %1883 = vmatprep.mubr.f32.mxu0 0.0
        %1884 = vmatmul.mubr.f32.gmra.mrb[0].mxu0 %v1806
        %v1885 = vpop.f32.mrb[0].mxu0
        %v1886 = vadd.f32 %v1790, %v1885
        %v1887 = vpop.f32.mrb[0].mxu0
        %1888 = vmatprep.mubr.f32.mxu0 0.0
        %1889 = vmatmul.mubr.f32.gmra.mrb[0].mxu0 %v1809
        %v1890 = vpop.f32.mrb[0].mxu0
        %v1891 = vadd.f32 %v1795, %v1890
        %v1892 = vpop.f32.mrb[0].mxu0
        %1893 = vmatprep.mubr.f32.mxu0 0.0
        %1894 = vmatmul.mubr.f32.gmra.mrb[0].mxu0 %v1812
        %v1895 = vpop.f32.mrb[0].mxu0
        %v1896 = vadd.f32 %v1800, %v1895
        %v1897 = vpop.f32.mrb[0].mxu0
        %1898 = vdwg.mxu0
        %v1899 = vmul.f32 %v1881, %v1679
        %v1900 = vmul.f32 %v1886, %v1679
        %v1901 = vmul.f32 %v1891, %v1679
        %v1902 = vmul.f32 %v1896, %v1679
        %v1903 = vmul.f32 %v1899, 0.8
        %v1904 = vmul.f32 %v1900, 0.8
        %v1905 = vmul.f32 %v1901, 0.8
        %v1906 = vmul.f32 %v1902, 0.8
        %v1907 = vadd.f32 %v1903, %v1055
        %v1908 = vadd.f32 %v1904, %v1056
        %v1909 = vadd.f32 %v1905, %v1057
        %v1910 = vadd.f32 %v1906, %v1058
        %v1911 = vld [vmem:[%s11] sm:$0xff]
        %v1912 = vld [vmem:[%s11 + $0x8] sm:$0xff]
        %v1913 = vld [vmem:[%s11 + $0x10] sm:$0xff]
        %v1914 = vld [vmem:[%s11 + $0x18] sm:$0xff]
        %v1916 = vsel %vm726, %v1911, 0
        %v1919 = vsel %vm726, %v1912, 0
        %v1922 = vsel %vm726, %v1913, 0
        %v1925 = vsel %vm726, %v1914, 0
        %1927 = vmatprep.subr.mxu0 0.0
        %1928 = vmatpush1.msra.mxu0 %v1907
        %1929 = vmatprep.subr.mxu0 0.0
        %1930 = vmatpush1.msra.mxu0 %v1908
        %1931 = vmatprep.subr.mxu0 0.0
        %1932 = vmatpush1.msra.mxu0 %v1909
        %1933 = vmatprep.subr.mxu0 0.0
        %1934 = vmatpush1.msra.mxu0 %v1910
        %1935 = vmatprep.subr.mxu0 0.0
        %1936 = vmatpush1.msra.mxu0 0.0
        %1937 = vmatprep.subr.mxu0 0.0
        %1938 = vmatpush1.msra.mxu0 0.0
        %1939 = vmatprep.subr.mxu0 0.0
        %1940 = vmatpush1.msra.mxu0 0.0
        %1941 = vmatprep.subr.mxu0 0.0
        %1942 = vmatpush1.msra.mxu0 0.0
        %1943 = vmatprep.subr.mxu0 0.0
        %1944 = vmatpush1.msra.mxu0 0.0
        %1945 = vmatprep.subr.mxu0 0.0
        %1946 = vmatpush1.msra.mxu0 0.0
        %1947 = vmatprep.subr.mxu0 0.0
        %1948 = vmatpush1.msra.mxu0 0.0
        %1949 = vmatprep.subr.mxu0 0.0
        %1950 = vmatpush1.msra.mxu0 0.0
        %1951 = vmatprep.subr.mxu0 0.0
        %1952 = vmatpush1.msra.mxu0 0.0
        %1953 = vmatprep.subr.mxu0 0.0
        %1954 = vmatpush1.msra.mxu0 0.0
        %1955 = vmatprep.subr.mxu0 0.0
        %1956 = vmatpush1.msra.mxu0 0.0
        %1957 = vmatprep.subr.mxu0 0.0
        %1958 = vmatpush1.msra.mxu0 0.0
        %1959 = vmatprep.subr.mxu0 0.0
        %1960 = vmatpush1.msra.mxu0 0.0
        %1961 = vmatprep.subr.mxu0 0.0
        %1962 = vmatpush1.msra.mxu0 0.0
        %1963 = vmatprep.subr.mxu0 0.0
        %1964 = vmatpush1.msra.mxu0 0.0
        %1965 = vmatprep.subr.mxu0 0.0
        %1966 = vmatpush1.msra.mxu0 0.0
        %1967 = vmatprep.subr.mxu0 0.0
        %1968 = vmatpush1.msra.mxu0 0.0
        %1969 = vmatprep.subr.mxu0 0.0
        %1970 = vmatpush1.msra.mxu0 0.0
        %1971 = vmatprep.subr.mxu0 0.0
        %1972 = vmatpush1.msra.mxu0 0.0
        %1973 = vmatprep.subr.mxu0 0.0
        %1974 = vmatpush1.msra.mxu0 0.0
        %1975 = vmatprep.subr.mxu0 0.0
        %1976 = vmatpush1.msra.mxu0 0.0
        %1977 = vmatprep.subr.mxu0 0.0
        %1978 = vmatpush1.msra.mxu0 0.0
        %1979 = vmatprep.subr.mxu0 0.0
        %1980 = vmatpush1.msra.mxu0 0.0
        %1981 = vmatprep.subr.mxu0 0.0
        %1982 = vmatpush1.msra.mxu0 0.0
        %1983 = vmatprep.subr.mxu0 0.0
        %1984 = vmatpush1.msra.mxu0 0.0
        %1985 = vmatprep.subr.mxu0 0.0
        %1986 = vmatpush1.msra.mxu0 0.0
        %1987 = vmatprep.subr.mxu0 0.0
        %1988 = vmatpush1.msra.mxu0 0.0
        %1989 = vmatprep.subr.mxu0 0.0
        %1990 = vmatpush1.msra.mxu0 0.0
        %1991 = vmatprep.mubr.f32.mxu0 0.0
        %1992 = vmatmul.mubr.f32.gmra.mrb[0].mxu0 %v1916
        %v1993 = vpop.f32.mrb[0].mxu0
        %v1994 = vadd.f32 0.0, %v1993
        %v1995 = vpop.f32.mrb[0].mxu0
        %1996 = vmatprep.mubr.f32.mxu0 0.0
        %1997 = vmatmul.mubr.f32.gmra.mrb[0].mxu0 %v1919
        %v1998 = vpop.f32.mrb[0].mxu0
        %v1999 = vadd.f32 0.0, %v1998
        %v2000 = vpop.f32.mrb[0].mxu0
        %2001 = vmatprep.mubr.f32.mxu0 0.0
        %2002 = vmatmul.mubr.f32.gmra.mrb[0].mxu0 %v1922
        %v2003 = vpop.f32.mrb[0].mxu0
        %v2004 = vadd.f32 0.0, %v2003
        %v2005 = vpop.f32.mrb[0].mxu0
        %2006 = vmatprep.mubr.f32.mxu0 0.0
        %2007 = vmatmul.mubr.f32.gmra.mrb[0].mxu0 %v1925
        %v2008 = vpop.f32.mrb[0].mxu0
        %v2009 = vadd.f32 0.0, %v2008
        %v2010 = vpop.f32.mrb[0].mxu0
        %2011 = vdwg.mxu0
        %v2012 = vadd.f32 %v669, %v1994
        %v2013 = vadd.f32 %v674, %v1999
        %v2014 = vadd.f32 %v679, %v2004
        %v2015 = vadd.f32 %v684, %v2009
        %v2016 = vld [vmem:[%s12] sm:$0xff]
        %v2017 = vld [vmem:[%s12 + $0x8] sm:$0xff]
        %v2018 = vld [vmem:[%s12 + $0x10] sm:$0xff]
        %v2019 = vld [vmem:[%s12 + $0x18] sm:$0xff]
        %2021 = vset.pattern.permute.xlu0 0
        %2022 = vperm.xlu0 %2021, %v2016
        %v2023 = vpop.permute.xlu0 %2022
        %2026 = vset.pattern.permute.xlu0 0
        %2027 = vperm.xlu0 %2026, %v2017
        %v2028 = vpop.permute.xlu0 %2027
        %2031 = vset.pattern.permute.xlu0 0
        %2032 = vperm.xlu0 %2031, %v2018
        %v2033 = vpop.permute.xlu0 %2032
        %2036 = vset.pattern.permute.xlu0 0
        %2037 = vperm.xlu0 %2036, %v2019
        %v2038 = vpop.permute.xlu0 %2037
        %v2040 = vadd.f32 %v2012, %v2023
        %v2041 = vadd.f32 %v2013, %v2028
        %v2042 = vadd.f32 %v2014, %v2033
        %v2043 = vadd.f32 %v2015, %v2038
        %v2044 = vmul.f32 %v2040, %v1679
        %v2045 = vmul.f32 %v2041, %v1679
        %v2046 = vmul.f32 %v2042, %v1679
        %v2047 = vmul.f32 %v2043, %v1679
        %vm2048 = vcmp.ge.s32.totalorder %v560, 2
        %2049 = vrot.lane.b32.xlu0 %v2044, 2
        %v2050 = vpop.permute.xlu0 %2049
        %2051 = vrot.lane.b32.xlu0 %v2045, 2
        %v2052 = vpop.permute.xlu0 %2051
        %2053 = vrot.lane.b32.xlu0 %v2046, 2
        %v2054 = vpop.permute.xlu0 %2053
        %2055 = vrot.lane.b32.xlu0 %v2047, 2
        %v2056 = vpop.permute.xlu0 %2055
        %v2057 = vsel %vm2048, 1, 0
        %vm2058 = vcmp.eq.s32.totalorder %v2057, 1
        %v2059 = vsel %vm2058, %v2050, 0.0
        %v2060 = vsel %vm2058, %v2052, 0.0
        %v2061 = vsel %vm2058, %v2054, 0.0
        %v2062 = vsel %vm2058, %v2056, 0.0
        %vm2063 = vcmp.lt.s32.totalorder %v560, 126
        %2064 = vrot.lane.b32.xlu0 %v2044, 126
        %v2065 = vpop.permute.xlu0 %2064
        %2066 = vrot.lane.b32.xlu0 %v2045, 126
        %v2067 = vpop.permute.xlu0 %2066
        %2068 = vrot.lane.b32.xlu0 %v2046, 126
        %v2069 = vpop.permute.xlu0 %2068
        %2070 = vrot.lane.b32.xlu0 %v2047, 126
        %v2071 = vpop.permute.xlu0 %2070
        %v2072 = vsel %vm2063, 1, 0
        %vm2073 = vcmp.eq.s32.totalorder %v2072, 1
        %v2074 = vsel %vm2073, %v2065, 0.0
        %v2075 = vsel %vm2073, %v2067, 0.0
        %v2076 = vsel %vm2073, %v2069, 0.0
        %v2077 = vsel %vm2073, %v2071, 0.0
        %s2078 = scalar_lea.vmem %s5, 96
        %v2079 = vld [vmem:[%s2078] sm:$0xff]
        %v2080 = vld [vmem:[%s2078 + $0x8] sm:$0xff]
        %v2081 = vld [vmem:[%s2078 + $0x10] sm:$0xff]
        %v2082 = vld [vmem:[%s2078 + $0x18] sm:$0xff]
        %s2083 = scalar_lea.vmem %s5, 128
        %v2084 = vld [vmem:[%s2083] sm:$0xff]
        %v2085 = vld [vmem:[%s2083 + $0x8] sm:$0xff]
        %v2086 = vld [vmem:[%s2083 + $0x10] sm:$0xff]
        %v2087 = vld [vmem:[%s2083 + $0x18] sm:$0xff]
        %v2089 = vsel %vm726, %v2084, 0
        %v2092 = vsel %vm726, %v2085, 0
        %v2095 = vsel %vm726, %v2086, 0
        %v2098 = vsel %vm726, %v2087, 0
        %2100 = vmatprep.subr.mxu0 0.0
        %2101 = vmatpush1.msra.mxu0 %v2044
        %2102 = vmatprep.subr.mxu0 0.0
        %2103 = vmatpush1.msra.mxu0 %v2045
        %2104 = vmatprep.subr.mxu0 0.0
        %2105 = vmatpush1.msra.mxu0 %v2046
        %2106 = vmatprep.subr.mxu0 0.0
        %2107 = vmatpush1.msra.mxu0 %v2047
        %2108 = vmatprep.subr.mxu0 0.0
        %2109 = vmatpush1.msra.mxu0 0.0
        %2110 = vmatprep.subr.mxu0 0.0
        %2111 = vmatpush1.msra.mxu0 0.0
        %2112 = vmatprep.subr.mxu0 0.0
        %2113 = vmatpush1.msra.mxu0 0.0
        %2114 = vmatprep.subr.mxu0 0.0
        %2115 = vmatpush1.msra.mxu0 0.0
        %2116 = vmatprep.subr.mxu0 0.0
        %2117 = vmatpush1.msra.mxu0 0.0
        %2118 = vmatprep.subr.mxu0 0.0
        %2119 = vmatpush1.msra.mxu0 0.0
        %2120 = vmatprep.subr.mxu0 0.0
        %2121 = vmatpush1.msra.mxu0 0.0
        %2122 = vmatprep.subr.mxu0 0.0
        %2123 = vmatpush1.msra.mxu0 0.0
        %2124 = vmatprep.subr.mxu0 0.0
        %2125 = vmatpush1.msra.mxu0 0.0
        %2126 = vmatprep.subr.mxu0 0.0
        %2127 = vmatpush1.msra.mxu0 0.0
        %2128 = vmatprep.subr.mxu0 0.0
        %2129 = vmatpush1.msra.mxu0 0.0
        %2130 = vmatprep.subr.mxu0 0.0
        %2131 = vmatpush1.msra.mxu0 0.0
        %2132 = vmatprep.subr.mxu0 0.0
        %2133 = vmatpush1.msra.mxu0 0.0
        %2134 = vmatprep.subr.mxu0 0.0
        %2135 = vmatpush1.msra.mxu0 0.0
        %2136 = vmatprep.subr.mxu0 0.0
        %2137 = vmatpush1.msra.mxu0 0.0
        %2138 = vmatprep.subr.mxu0 0.0
        %2139 = vmatpush1.msra.mxu0 0.0
        %2140 = vmatprep.subr.mxu0 0.0
        %2141 = vmatpush1.msra.mxu0 0.0
        %2142 = vmatprep.subr.mxu0 0.0
        %2143 = vmatpush1.msra.mxu0 0.0
        %2144 = vmatprep.subr.mxu0 0.0
        %2145 = vmatpush1.msra.mxu0 0.0
        %2146 = vmatprep.subr.mxu0 0.0
        %2147 = vmatpush1.msra.mxu0 0.0
        %2148 = vmatprep.subr.mxu0 0.0
        %2149 = vmatpush1.msra.mxu0 0.0
        %2150 = vmatprep.subr.mxu0 0.0
        %2151 = vmatpush1.msra.mxu0 0.0
        %2152 = vmatprep.subr.mxu0 0.0
        %2153 = vmatpush1.msra.mxu0 0.0
        %2154 = vmatprep.subr.mxu0 0.0
        %2155 = vmatpush1.msra.mxu0 0.0
        %2156 = vmatprep.subr.mxu0 0.0
        %2157 = vmatpush1.msra.mxu0 0.0
        %2158 = vmatprep.subr.mxu0 0.0
        %2159 = vmatpush1.msra.mxu0 0.0
        %2160 = vmatprep.subr.mxu0 0.0
        %2161 = vmatpush1.msra.mxu0 0.0
        %2162 = vmatprep.subr.mxu0 0.0
        %2163 = vmatpush1.msra.mxu0 0.0
        %2164 = vmatprep.mubr.f32.mxu0 0.0
        %2165 = vmatmul.mubr.f32.gmra.mrb[0].mxu0 %v2089
        %v2166 = vpop.f32.mrb[0].mxu0
        %v2167 = vadd.f32 0.0, %v2166
        %v2168 = vpop.f32.mrb[0].mxu0
        %2169 = vmatprep.mubr.f32.mxu0 0.0
        %2170 = vmatmul.mubr.f32.gmra.mrb[0].mxu0 %v2092
        %v2171 = vpop.f32.mrb[0].mxu0
        %v2172 = vadd.f32 0.0, %v2171
        %v2173 = vpop.f32.mrb[0].mxu0
        %2174 = vmatprep.mubr.f32.mxu0 0.0
        %2175 = vmatmul.mubr.f32.gmra.mrb[0].mxu0 %v2095
        %v2176 = vpop.f32.mrb[0].mxu0
        %v2177 = vadd.f32 0.0, %v2176
        %v2178 = vpop.f32.mrb[0].mxu0
        %2179 = vmatprep.mubr.f32.mxu0 0.0
        %2180 = vmatmul.mubr.f32.gmra.mrb[0].mxu0 %v2098
        %v2181 = vpop.f32.mrb[0].mxu0
        %v2182 = vadd.f32 0.0, %v2181
        %v2183 = vpop.f32.mrb[0].mxu0
        %2184 = vdwg.mxu0
        %v2186 = vsel %vm726, %v2079, 0
        %v2189 = vsel %vm726, %v2080, 0
        %v2192 = vsel %vm726, %v2081, 0
        %v2195 = vsel %vm726, %v2082, 0
        %2197 = vmatprep.subr.mxu0 0.0
        %2198 = vmatpush1.msra.mxu0 %v2059
        %2199 = vmatprep.subr.mxu0 0.0
        %2200 = vmatpush1.msra.mxu0 %v2060
        %2201 = vmatprep.subr.mxu0 0.0
        %2202 = vmatpush1.msra.mxu0 %v2061
        %2203 = vmatprep.subr.mxu0 0.0
        %2204 = vmatpush1.msra.mxu0 %v2062
        %2205 = vmatprep.subr.mxu0 0.0
        %2206 = vmatpush1.msra.mxu0 0.0
        %2207 = vmatprep.subr.mxu0 0.0
        %2208 = vmatpush1.msra.mxu0 0.0
        %2209 = vmatprep.subr.mxu0 0.0
        %2210 = vmatpush1.msra.mxu0 0.0
        %2211 = vmatprep.subr.mxu0 0.0
        %2212 = vmatpush1.msra.mxu0 0.0
        %2213 = vmatprep.subr.mxu0 0.0
        %2214 = vmatpush1.msra.mxu0 0.0
        %2215 = vmatprep.subr.mxu0 0.0
        %2216 = vmatpush1.msra.mxu0 0.0
        %2217 = vmatprep.subr.mxu0 0.0
        %2218 = vmatpush1.msra.mxu0 0.0
        %2219 = vmatprep.subr.mxu0 0.0
        %2220 = vmatpush1.msra.mxu0 0.0
        %2221 = vmatprep.subr.mxu0 0.0
        %2222 = vmatpush1.msra.mxu0 0.0
        %2223 = vmatprep.subr.mxu0 0.0
        %2224 = vmatpush1.msra.mxu0 0.0
        %2225 = vmatprep.subr.mxu0 0.0
        %2226 = vmatpush1.msra.mxu0 0.0
        %2227 = vmatprep.subr.mxu0 0.0
        %2228 = vmatpush1.msra.mxu0 0.0
        %2229 = vmatprep.subr.mxu0 0.0
        %2230 = vmatpush1.msra.mxu0 0.0
        %2231 = vmatprep.subr.mxu0 0.0
        %2232 = vmatpush1.msra.mxu0 0.0
        %2233 = vmatprep.subr.mxu0 0.0
        %2234 = vmatpush1.msra.mxu0 0.0
        %2235 = vmatprep.subr.mxu0 0.0
        %2236 = vmatpush1.msra.mxu0 0.0
        %2237 = vmatprep.subr.mxu0 0.0
        %2238 = vmatpush1.msra.mxu0 0.0
        %2239 = vmatprep.subr.mxu0 0.0
        %2240 = vmatpush1.msra.mxu0 0.0
        %2241 = vmatprep.subr.mxu0 0.0
        %2242 = vmatpush1.msra.mxu0 0.0
        %2243 = vmatprep.subr.mxu0 0.0
        %2244 = vmatpush1.msra.mxu0 0.0
        %2245 = vmatprep.subr.mxu0 0.0
        %2246 = vmatpush1.msra.mxu0 0.0
        %2247 = vmatprep.subr.mxu0 0.0
        %2248 = vmatpush1.msra.mxu0 0.0
        %2249 = vmatprep.subr.mxu0 0.0
        %2250 = vmatpush1.msra.mxu0 0.0
        %2251 = vmatprep.subr.mxu0 0.0
        %2252 = vmatpush1.msra.mxu0 0.0
        %2253 = vmatprep.subr.mxu0 0.0
        %2254 = vmatpush1.msra.mxu0 0.0
        %2255 = vmatprep.subr.mxu0 0.0
        %2256 = vmatpush1.msra.mxu0 0.0
        %2257 = vmatprep.subr.mxu0 0.0
        %2258 = vmatpush1.msra.mxu0 0.0
        %2259 = vmatprep.subr.mxu0 0.0
        %2260 = vmatpush1.msra.mxu0 0.0
        %2261 = vmatprep.mubr.f32.mxu0 0.0
        %2262 = vmatmul.mubr.f32.gmra.mrb[0].mxu0 %v2186
        %v2263 = vpop.f32.mrb[0].mxu0
        %v2264 = vadd.f32 %v2167, %v2263
        %v2265 = vpop.f32.mrb[0].mxu0
        %2266 = vmatprep.mubr.f32.mxu0 0.0
        %2267 = vmatmul.mubr.f32.gmra.mrb[0].mxu0 %v2189
        %v2268 = vpop.f32.mrb[0].mxu0
        %v2269 = vadd.f32 %v2172, %v2268
        %v2270 = vpop.f32.mrb[0].mxu0
        %2271 = vmatprep.mubr.f32.mxu0 0.0
        %2272 = vmatmul.mubr.f32.gmra.mrb[0].mxu0 %v2192
        %v2273 = vpop.f32.mrb[0].mxu0
        %v2274 = vadd.f32 %v2177, %v2273
        %v2275 = vpop.f32.mrb[0].mxu0
        %2276 = vmatprep.mubr.f32.mxu0 0.0
        %2277 = vmatmul.mubr.f32.gmra.mrb[0].mxu0 %v2195
        %v2278 = vpop.f32.mrb[0].mxu0
        %v2279 = vadd.f32 %v2182, %v2278
        %v2280 = vpop.f32.mrb[0].mxu0
        %2281 = vdwg.mxu0
        %s2282 = scalar_lea.vmem %s5, 160
        %v2283 = vld [vmem:[%s2282] sm:$0xff]
        %v2284 = vld [vmem:[%s2282 + $0x8] sm:$0xff]
        %v2285 = vld [vmem:[%s2282 + $0x10] sm:$0xff]
        %v2286 = vld [vmem:[%s2282 + $0x18] sm:$0xff]
        %v2288 = vsel %vm726, %v2283, 0
        %v2291 = vsel %vm726, %v2284, 0
        %v2294 = vsel %vm726, %v2285, 0
        %v2297 = vsel %vm726, %v2286, 0
        %2299 = vmatprep.subr.mxu0 0.0
        %2300 = vmatpush1.msra.mxu0 %v2074
        %2301 = vmatprep.subr.mxu0 0.0
        %2302 = vmatpush1.msra.mxu0 %v2075
        %2303 = vmatprep.subr.mxu0 0.0
        %2304 = vmatpush1.msra.mxu0 %v2076
        %2305 = vmatprep.subr.mxu0 0.0
        %2306 = vmatpush1.msra.mxu0 %v2077
        %2307 = vmatprep.subr.mxu0 0.0
        %2308 = vmatpush1.msra.mxu0 0.0
        %2309 = vmatprep.subr.mxu0 0.0
        %2310 = vmatpush1.msra.mxu0 0.0
        %2311 = vmatprep.subr.mxu0 0.0
        %2312 = vmatpush1.msra.mxu0 0.0
        %2313 = vmatprep.subr.mxu0 0.0
        %2314 = vmatpush1.msra.mxu0 0.0
        %2315 = vmatprep.subr.mxu0 0.0
        %2316 = vmatpush1.msra.mxu0 0.0
        %2317 = vmatprep.subr.mxu0 0.0
        %2318 = vmatpush1.msra.mxu0 0.0
        %2319 = vmatprep.subr.mxu0 0.0
        %2320 = vmatpush1.msra.mxu0 0.0
        %2321 = vmatprep.subr.mxu0 0.0
        %2322 = vmatpush1.msra.mxu0 0.0
        %2323 = vmatprep.subr.mxu0 0.0
        %2324 = vmatpush1.msra.mxu0 0.0
        %2325 = vmatprep.subr.mxu0 0.0
        %2326 = vmatpush1.msra.mxu0 0.0
        %2327 = vmatprep.subr.mxu0 0.0
        %2328 = vmatpush1.msra.mxu0 0.0
        %2329 = vmatprep.subr.mxu0 0.0
        %2330 = vmatpush1.msra.mxu0 0.0
        %2331 = vmatprep.subr.mxu0 0.0
        %2332 = vmatpush1.msra.mxu0 0.0
        %2333 = vmatprep.subr.mxu0 0.0
        %2334 = vmatpush1.msra.mxu0 0.0
        %2335 = vmatprep.subr.mxu0 0.0
        %2336 = vmatpush1.msra.mxu0 0.0
        %2337 = vmatprep.subr.mxu0 0.0
        %2338 = vmatpush1.msra.mxu0 0.0
        %2339 = vmatprep.subr.mxu0 0.0
        %2340 = vmatpush1.msra.mxu0 0.0
        %2341 = vmatprep.subr.mxu0 0.0
        %2342 = vmatpush1.msra.mxu0 0.0
        %2343 = vmatprep.subr.mxu0 0.0
        %2344 = vmatpush1.msra.mxu0 0.0
        %2345 = vmatprep.subr.mxu0 0.0
        %2346 = vmatpush1.msra.mxu0 0.0
        %2347 = vmatprep.subr.mxu0 0.0
        %2348 = vmatpush1.msra.mxu0 0.0
        %2349 = vmatprep.subr.mxu0 0.0
        %2350 = vmatpush1.msra.mxu0 0.0
        %2351 = vmatprep.subr.mxu0 0.0
        %2352 = vmatpush1.msra.mxu0 0.0
        %2353 = vmatprep.subr.mxu0 0.0
        %2354 = vmatpush1.msra.mxu0 0.0
        %2355 = vmatprep.subr.mxu0 0.0
        %2356 = vmatpush1.msra.mxu0 0.0
        %2357 = vmatprep.subr.mxu0 0.0
        %2358 = vmatpush1.msra.mxu0 0.0
        %2359 = vmatprep.subr.mxu0 0.0
        %2360 = vmatpush1.msra.mxu0 0.0
        %2361 = vmatprep.subr.mxu0 0.0
        %2362 = vmatpush1.msra.mxu0 0.0
        %2363 = vmatprep.mubr.f32.mxu0 0.0
        %2364 = vmatmul.mubr.f32.gmra.mrb[0].mxu0 %v2288
        %v2365 = vpop.f32.mrb[0].mxu0
        %v2366 = vadd.f32 0.0, %v2365
        %v2367 = vpop.f32.mrb[0].mxu0
        %2368 = vmatprep.mubr.f32.mxu0 0.0
        %2369 = vmatmul.mubr.f32.gmra.mrb[0].mxu0 %v2291
        %v2370 = vpop.f32.mrb[0].mxu0
        %v2371 = vadd.f32 0.0, %v2370
        %v2372 = vpop.f32.mrb[0].mxu0
        %2373 = vmatprep.mubr.f32.mxu0 0.0
        %2374 = vmatmul.mubr.f32.gmra.mrb[0].mxu0 %v2294
        %v2375 = vpop.f32.mrb[0].mxu0
        %v2376 = vadd.f32 0.0, %v2375
        %v2377 = vpop.f32.mrb[0].mxu0
        %2378 = vmatprep.mubr.f32.mxu0 0.0
        %2379 = vmatmul.mubr.f32.gmra.mrb[0].mxu0 %v2297
        %v2380 = vpop.f32.mrb[0].mxu0
        %v2381 = vadd.f32 0.0, %v2380
        %v2382 = vpop.f32.mrb[0].mxu0
        %2383 = vdwg.mxu0
        %v2384 = vadd.f32 %v2264, %v2366
        %v2385 = vadd.f32 %v2269, %v2371
        %v2386 = vadd.f32 %v2274, %v2376
        %v2387 = vadd.f32 %v2279, %v2381
        %s2388 = scalar_lea.vmem %s6, 32
        %v2389 = vld [vmem:[%s2388] sm:$0xff]
        %v2390 = vld [vmem:[%s2388 + $0x8] sm:$0xff]
        %v2391 = vld [vmem:[%s2388 + $0x10] sm:$0xff]
        %v2392 = vld [vmem:[%s2388 + $0x18] sm:$0xff]
        %2394 = vset.pattern.permute.xlu0 0
        %2395 = vperm.xlu0 %2394, %v2389
        %v2396 = vpop.permute.xlu0 %2395
        %2399 = vset.pattern.permute.xlu0 0
        %2400 = vperm.xlu0 %2399, %v2390
        %v2401 = vpop.permute.xlu0 %2400
        %2404 = vset.pattern.permute.xlu0 0
        %2405 = vperm.xlu0 %2404, %v2391
        %v2406 = vpop.permute.xlu0 %2405
        %2409 = vset.pattern.permute.xlu0 0
        %2410 = vperm.xlu0 %2409, %v2392
        %v2411 = vpop.permute.xlu0 %2410
        %v2413 = vadd.f32 %v2384, %v2396
        %v2414 = vadd.f32 %v2385, %v2401
        %v2415 = vadd.f32 %v2386, %v2406
        %v2416 = vadd.f32 %v2387, %v2411
        %v2417 = vmax.f32 %v2413, 0.0
        %v2418 = vmax.f32 %v2414, 0.0
        %v2419 = vmax.f32 %v2415, 0.0
        %v2420 = vmax.f32 %v2416, 0.0
        %2421 = vadd.xlane.f32.xlu0 %v2417
        %v2422 = vpop.xlane.xlu0 %2421
        %2423 = vadd.xlane.f32.xlu0 %v2418
        %v2424 = vpop.xlane.xlu0 %2423
        %2425 = vadd.xlane.f32.xlu0 %v2419
        %v2426 = vpop.xlane.xlu0 %2425
        %2427 = vadd.xlane.f32.xlu0 %v2420
        %v2428 = vpop.xlane.xlu0 %2427
        %v2429 = vmul.f32 %v2422, %v1067
        %v2430 = vmul.f32 %v2424, %v1067
        %v2431 = vmul.f32 %v2426, %v1067
        %v2432 = vmul.f32 %v2428, %v1067
        %v2433 = vmul.f32 %v2417, %v2417
        %v2434 = vmul.f32 %v2418, %v2418
        %v2435 = vmul.f32 %v2419, %v2419
        %v2436 = vmul.f32 %v2420, %v2420
        %2437 = vadd.xlane.f32.xlu0 %v2433
        %v2438 = vpop.xlane.xlu0 %2437
        %2439 = vadd.xlane.f32.xlu0 %v2434
        %v2440 = vpop.xlane.xlu0 %2439
        %2441 = vadd.xlane.f32.xlu0 %v2435
        %v2442 = vpop.xlane.xlu0 %2441
        %2443 = vadd.xlane.f32.xlu0 %v2436
        %v2444 = vpop.xlane.xlu0 %2443
        %v2445 = vmul.f32 %v2438, %v1067
        %v2446 = vmul.f32 %v2440, %v1067
        %v2447 = vmul.f32 %v2442, %v1067
        %v2448 = vmul.f32 %v2444, %v1067
        %v2449 = vsub.f32 %v2417, %v2429
        %v2450 = vsub.f32 %v2418, %v2430
        %v2451 = vsub.f32 %v2419, %v2431
        %v2452 = vsub.f32 %v2420, %v2432
        %v2453 = vmul.f32 %v2429, %v2429
        %v2454 = vmul.f32 %v2430, %v2430
        %v2455 = vmul.f32 %v2431, %v2431
        %v2456 = vmul.f32 %v2432, %v2432
        %v2457 = vsub.f32 %v2445, %v2453
        %v2458 = vsub.f32 %v2446, %v2454
        %v2459 = vsub.f32 %v2447, %v2455
        %v2460 = vsub.f32 %v2448, %v2456
        %v2461 = vadd.f32 %v2457, 1e-05
        %v2462 = vadd.f32 %v2458, 1e-05
        %v2463 = vadd.f32 %v2459, 1e-05
        %v2464 = vadd.f32 %v2460, 1e-05
        %v2465 = vrsqrt.pop %v2461
        %v2466 = vrsqrt.pop %v2462
        %v2467 = vrsqrt.pop %v2463
        %v2468 = vrsqrt.pop %v2464
        %v2469 = vmul.f32 %v2449, %v2465
        %v2470 = vmul.f32 %v2450, %v2466
        %v2471 = vmul.f32 %v2451, %v2467
        %v2472 = vmul.f32 %v2452, %v2468
        %s2473 = scalar_lea.vmem %s7, 48
        %v2474 = vld [vmem:[%s2473] sm:$0xff]
        %v2475 = vld [vmem:[%s2473 + $0x8] sm:$0xff]
        %v2476 = vld [vmem:[%s2473 + $0x10] sm:$0xff]
        %v2477 = vld [vmem:[%s2473 + $0x18] sm:$0xff]
        %v2478 = vld [vmem:[%s2473 + $0x20] sm:$0xff]
        %v2479 = vld [vmem:[%s2473 + $0x28] sm:$0xff]
        %s2480 = scalar_lea.vmem %s8, 48
        %v2481 = vld [vmem:[%s2480] sm:$0xff]
        %v2482 = vld [vmem:[%s2480 + $0x8] sm:$0xff]
        %v2483 = vld [vmem:[%s2480 + $0x10] sm:$0xff]
        %v2484 = vld [vmem:[%s2480 + $0x18] sm:$0xff]
        %v2485 = vld [vmem:[%s2480 + $0x20] sm:$0xff]
        %v2486 = vld [vmem:[%s2480 + $0x28] sm:$0xff]
        %2488 = vset.pattern.permute.xlu0 0
        %2489 = vperm.xlu0 %2488, %v2481
        %v2490 = vpop.permute.xlu0 %2489
        %2493 = vset.pattern.permute.xlu0 0
        %2494 = vperm.xlu0 %2493, %v2482
        %v2495 = vpop.permute.xlu0 %2494
        %2498 = vset.pattern.permute.xlu0 0
        %2499 = vperm.xlu0 %2498, %v2483
        %v2500 = vpop.permute.xlu0 %2499
        %2503 = vset.pattern.permute.xlu0 0
        %2504 = vperm.xlu0 %2503, %v2484
        %v2505 = vpop.permute.xlu0 %2504
        %2508 = vset.pattern.permute.xlu0 0
        %2509 = vperm.xlu0 %2508, %v2485
        %v2510 = vpop.permute.xlu0 %2509
        %2513 = vset.pattern.permute.xlu0 0
        %2514 = vperm.xlu0 %2513, %v2486
        %v2515 = vpop.permute.xlu0 %2514
        %v2518 = vsel %vm726, %v2474, 0
        %v2521 = vsel %vm726, %v2475, 0
        %v2524 = vsel %vm726, %v2476, 0
        %v2527 = vsel %vm726, %v2477, 0
        %v2530 = vsel %vm726, %v2478, 0
        %v2533 = vsel %vm726, %v2479, 0
        %2535 = vmatprep.subr.mxu0 0.0
        %2536 = vmatpush1.msra.mxu0 %v2469
        %2537 = vmatprep.subr.mxu0 0.0
        %2538 = vmatpush1.msra.mxu0 %v2470
        %2539 = vmatprep.subr.mxu0 0.0
        %2540 = vmatpush1.msra.mxu0 %v2471
        %2541 = vmatprep.subr.mxu0 0.0
        %2542 = vmatpush1.msra.mxu0 %v2472
        %2543 = vmatprep.subr.mxu0 0.0
        %2544 = vmatpush1.msra.mxu0 0.0
        %2545 = vmatprep.subr.mxu0 0.0
        %2546 = vmatpush1.msra.mxu0 0.0
        %2547 = vmatprep.subr.mxu0 0.0
        %2548 = vmatpush1.msra.mxu0 0.0
        %2549 = vmatprep.subr.mxu0 0.0
        %2550 = vmatpush1.msra.mxu0 0.0
        %2551 = vmatprep.subr.mxu0 0.0
        %2552 = vmatpush1.msra.mxu0 0.0
        %2553 = vmatprep.subr.mxu0 0.0
        %2554 = vmatpush1.msra.mxu0 0.0
        %2555 = vmatprep.subr.mxu0 0.0
        %2556 = vmatpush1.msra.mxu0 0.0
        %2557 = vmatprep.subr.mxu0 0.0
        %2558 = vmatpush1.msra.mxu0 0.0
        %2559 = vmatprep.subr.mxu0 0.0
        %2560 = vmatpush1.msra.mxu0 0.0
        %2561 = vmatprep.subr.mxu0 0.0
        %2562 = vmatpush1.msra.mxu0 0.0
        %2563 = vmatprep.subr.mxu0 0.0
        %2564 = vmatpush1.msra.mxu0 0.0
        %2565 = vmatprep.subr.mxu0 0.0
        %2566 = vmatpush1.msra.mxu0 0.0
        %2567 = vmatprep.subr.mxu0 0.0
        %2568 = vmatpush1.msra.mxu0 0.0
        %2569 = vmatprep.subr.mxu0 0.0
        %2570 = vmatpush1.msra.mxu0 0.0
        %2571 = vmatprep.subr.mxu0 0.0
        %2572 = vmatpush1.msra.mxu0 0.0
        %2573 = vmatprep.subr.mxu0 0.0
        %2574 = vmatpush1.msra.mxu0 0.0
        %2575 = vmatprep.subr.mxu0 0.0
        %2576 = vmatpush1.msra.mxu0 0.0
        %2577 = vmatprep.subr.mxu0 0.0
        %2578 = vmatpush1.msra.mxu0 0.0
        %2579 = vmatprep.subr.mxu0 0.0
        %2580 = vmatpush1.msra.mxu0 0.0
        %2581 = vmatprep.subr.mxu0 0.0
        %2582 = vmatpush1.msra.mxu0 0.0
        %2583 = vmatprep.subr.mxu0 0.0
        %2584 = vmatpush1.msra.mxu0 0.0
        %2585 = vmatprep.subr.mxu0 0.0
        %2586 = vmatpush1.msra.mxu0 0.0
        %2587 = vmatprep.subr.mxu0 0.0
        %2588 = vmatpush1.msra.mxu0 0.0
        %2589 = vmatprep.subr.mxu0 0.0
        %2590 = vmatpush1.msra.mxu0 0.0
        %2591 = vmatprep.subr.mxu0 0.0
        %2592 = vmatpush1.msra.mxu0 0.0
        %2593 = vmatprep.subr.mxu0 0.0
        %2594 = vmatpush1.msra.mxu0 0.0
        %2595 = vmatprep.subr.mxu0 0.0
        %2596 = vmatpush1.msra.mxu0 0.0
        %2597 = vmatprep.subr.mxu0 0.0
        %2598 = vmatpush1.msra.mxu0 0.0
        %2599 = vmatprep.mubr.f32.mxu0 0.0
        %2600 = vmatmul.mubr.f32.gmra.mrb[0].mxu0 %v2518
        %v2601 = vpop.f32.mrb[0].mxu0
        %v2602 = vadd.f32 %v2490, %v2601
        %v2603 = vpop.f32.mrb[0].mxu0
        %2604 = vmatprep.mubr.f32.mxu0 0.0
        %2605 = vmatmul.mubr.f32.gmra.mrb[0].mxu0 %v2521
        %v2606 = vpop.f32.mrb[0].mxu0
        %v2607 = vadd.f32 %v2495, %v2606
        %v2608 = vpop.f32.mrb[0].mxu0
        %2609 = vmatprep.mubr.f32.mxu0 0.0
        %2610 = vmatmul.mubr.f32.gmra.mrb[0].mxu0 %v2524
        %v2611 = vpop.f32.mrb[0].mxu0
        %v2612 = vadd.f32 %v2500, %v2611
        %v2613 = vpop.f32.mrb[0].mxu0
        %2614 = vmatprep.mubr.f32.mxu0 0.0
        %2615 = vmatmul.mubr.f32.gmra.mrb[0].mxu0 %v2527
        %v2616 = vpop.f32.mrb[0].mxu0
        %v2617 = vadd.f32 %v2505, %v2616
        %v2618 = vpop.f32.mrb[0].mxu0
        %2619 = vmatprep.mubr.f32.mxu0 0.0
        %2620 = vmatmul.mubr.f32.gmra.mrb[0].mxu0 %v2530
        %v2621 = vpop.f32.mrb[0].mxu0
        %v2622 = vadd.f32 %v2510, %v2621
        %v2623 = vpop.f32.mrb[0].mxu0
        %2624 = vmatprep.mubr.f32.mxu0 0.0
        %2625 = vmatmul.mubr.f32.gmra.mrb[0].mxu0 %v2533
        %v2626 = vpop.f32.mrb[0].mxu0
        %v2627 = vadd.f32 %v2515, %v2626
        %v2628 = vpop.f32.mrb[0].mxu0
        %2629 = vdwg.mxu0
        %2630 = vxpose.xlu0.b32.start [1/16] %v2602, 128
        %2631 = vxpose.xlu0.b32.cont [2/16] %v2607, 128
        %2632 = vxpose.xlu0.b32.cont [3/16] 0.0, 128
        %2633 = vxpose.xlu0.b32.cont [4/16] 0.0, 128
        %2634 = vxpose.xlu0.b32.cont [5/16] 0.0, 128
        %2635 = vxpose.xlu0.b32.cont [6/16] 0.0, 128
        %2636 = vxpose.xlu0.b32.cont [7/16] 0.0, 128
        %2637 = vxpose.xlu0.b32.cont [8/16] 0.0, 128
        %2638 = vxpose.xlu0.b32.cont [9/16] 0.0, 128
        %2639 = vxpose.xlu0.b32.cont [10/16] 0.0, 128
        %2640 = vxpose.xlu0.b32.cont [11/16] 0.0, 128
        %2641 = vxpose.xlu0.b32.cont [12/16] 0.0, 128
        %2642 = vxpose.xlu0.b32.cont [13/16] 0.0, 128
        %2643 = vxpose.xlu0.b32.cont [14/16] 0.0, 128
        %2644 = vxpose.xlu0.b32.cont [15/16] 0.0, 128
        %2645 = vxpose.xlu0.b32.end [16/16] 0.0, 128
        %v2646 = vpop.trf.xlu0
        %v2647 = vpop.trf.xlu0
        %v2648 = vpop.trf.xlu0
        %v2649 = vpop.trf.xlu0
        %v2650 = vpop.trf.xlu0
        %v2651 = vpop.trf.xlu0
        %v2652 = vpop.trf.xlu0
        %v2653 = vpop.trf.xlu0
        %v2654 = vpop.trf.xlu0
        %v2655 = vpop.trf.xlu0
        %v2656 = vpop.trf.xlu0
        %v2657 = vpop.trf.xlu0
        %v2658 = vpop.trf.xlu0
        %v2659 = vpop.trf.xlu0
        %v2660 = vpop.trf.xlu0
        %v2661 = vpop.trf.xlu0
        %v2663 = vsel %vm1299, %v2646, 0
        %v2666 = vsel %vm1299, %v2647, 0
        %v2669 = vsel %vm1299, %v2648, 0
        %v2672 = vsel %vm1299, %v2649, 0
        %v2675 = vsel %vm1299, %v2650, 0
        %v2678 = vsel %vm1299, %v2651, 0
        %v2681 = vsel %vm1299, %v2652, 0
        %v2684 = vsel %vm1299, %v2653, 0
        %v2687 = vsel %vm1299, %v2654, 0
        %v2690 = vsel %vm1299, %v2655, 0
        %v2693 = vsel %vm1299, %v2656, 0
        %v2696 = vsel %vm1299, %v2657, 0
        %v2699 = vsel %vm1299, %v2658, 0
        %v2702 = vsel %vm1299, %v2659, 0
        %v2705 = vsel %vm1299, %v2660, 0
        %v2708 = vsel %vm1299, %v2661, 0
        %2710 = vmatprep.subr.mxu0 0.0
        %2711 = vmatpush1.msra.mxu0 %v2612
        %2712 = vmatprep.subr.mxu0 0.0
        %2713 = vmatpush1.msra.mxu0 %v2617
        %2714 = vmatprep.subr.mxu0 0.0
        %2715 = vmatpush1.msra.mxu0 0.0
        %2716 = vmatprep.subr.mxu0 0.0
        %2717 = vmatpush1.msra.mxu0 0.0
        %2718 = vmatprep.subr.mxu0 0.0
        %2719 = vmatpush1.msra.mxu0 0.0
        %2720 = vmatprep.subr.mxu0 0.0
        %2721 = vmatpush1.msra.mxu0 0.0
        %2722 = vmatprep.subr.mxu0 0.0
        %2723 = vmatpush1.msra.mxu0 0.0
        %2724 = vmatprep.subr.mxu0 0.0
        %2725 = vmatpush1.msra.mxu0 0.0
        %2726 = vmatprep.subr.mxu0 0.0
        %2727 = vmatpush1.msra.mxu0 0.0
        %2728 = vmatprep.subr.mxu0 0.0
        %2729 = vmatpush1.msra.mxu0 0.0
        %2730 = vmatprep.subr.mxu0 0.0
        %2731 = vmatpush1.msra.mxu0 0.0
        %2732 = vmatprep.subr.mxu0 0.0
        %2733 = vmatpush1.msra.mxu0 0.0
        %2734 = vmatprep.subr.mxu0 0.0
        %2735 = vmatpush1.msra.mxu0 0.0
        %2736 = vmatprep.subr.mxu0 0.0
        %2737 = vmatpush1.msra.mxu0 0.0
        %2738 = vmatprep.subr.mxu0 0.0
        %2739 = vmatpush1.msra.mxu0 0.0
        %2740 = vmatprep.subr.mxu0 0.0
        %2741 = vmatpush1.msra.mxu0 0.0
        %2742 = vmatprep.subr.mxu0 0.0
        %2743 = vmatpush1.msra.mxu0 0.0
        %2744 = vmatprep.subr.mxu0 0.0
        %2745 = vmatpush1.msra.mxu0 0.0
        %2746 = vmatprep.subr.mxu0 0.0
        %2747 = vmatpush1.msra.mxu0 0.0
        %2748 = vmatprep.subr.mxu0 0.0
        %2749 = vmatpush1.msra.mxu0 0.0
        %2750 = vmatprep.subr.mxu0 0.0
        %2751 = vmatpush1.msra.mxu0 0.0
        %2752 = vmatprep.subr.mxu0 0.0
        %2753 = vmatpush1.msra.mxu0 0.0
        %2754 = vmatprep.subr.mxu0 0.0
        %2755 = vmatpush1.msra.mxu0 0.0
        %2756 = vmatprep.subr.mxu0 0.0
        %2757 = vmatpush1.msra.mxu0 0.0
        %2758 = vmatprep.subr.mxu0 0.0
        %2759 = vmatpush1.msra.mxu0 0.0
        %2760 = vmatprep.subr.mxu0 0.0
        %2761 = vmatpush1.msra.mxu0 0.0
        %2762 = vmatprep.subr.mxu0 0.0
        %2763 = vmatpush1.msra.mxu0 0.0
        %2764 = vmatprep.subr.mxu0 0.0
        %2765 = vmatpush1.msra.mxu0 0.0
        %2766 = vmatprep.subr.mxu0 0.0
        %2767 = vmatpush1.msra.mxu0 0.0
        %2768 = vmatprep.subr.mxu0 0.0
        %2769 = vmatpush1.msra.mxu0 0.0
        %2770 = vmatprep.subr.mxu0 0.0
        %2771 = vmatpush1.msra.mxu0 0.0
        %2772 = vmatprep.subr.mxu0 0.0
        %2773 = vmatpush1.msra.mxu0 0.0
        %2774 = vmatprep.mubr.f32.mxu0 0.0
        %2775 = vmatmul.mubr.f32.gmra.mrb[0].mxu0 %v2663
        %v2776 = vpop.f32.mrb[0].mxu0
        %v2777 = vadd.f32 0.0, %v2776
        %v2778 = vpop.f32.mrb[0].mxu0
        %2779 = vmatprep.mubr.f32.mxu0 0.0
        %2780 = vmatmul.mubr.f32.gmra.mrb[0].mxu0 %v2666
        %v2781 = vpop.f32.mrb[0].mxu0
        %v2782 = vadd.f32 0.0, %v2781
        %v2783 = vpop.f32.mrb[0].mxu0
        %2784 = vmatprep.mubr.f32.mxu0 0.0
        %2785 = vmatmul.mubr.f32.gmra.mrb[0].mxu0 %v2669
        %v2786 = vpop.f32.mrb[0].mxu0
        %v2787 = vadd.f32 0.0, %v2786
        %v2788 = vpop.f32.mrb[0].mxu0
        %2789 = vmatprep.mubr.f32.mxu0 0.0
        %2790 = vmatmul.mubr.f32.gmra.mrb[0].mxu0 %v2672
        %v2791 = vpop.f32.mrb[0].mxu0
        %v2792 = vadd.f32 0.0, %v2791
        %v2793 = vpop.f32.mrb[0].mxu0
        %2794 = vmatprep.mubr.f32.mxu0 0.0
        %2795 = vmatmul.mubr.f32.gmra.mrb[0].mxu0 %v2675
        %v2796 = vpop.f32.mrb[0].mxu0
        %v2797 = vadd.f32 0.0, %v2796
        %v2798 = vpop.f32.mrb[0].mxu0
        %2799 = vmatprep.mubr.f32.mxu0 0.0
        %2800 = vmatmul.mubr.f32.gmra.mrb[0].mxu0 %v2678
        %v2801 = vpop.f32.mrb[0].mxu0
        %v2802 = vadd.f32 0.0, %v2801
        %v2803 = vpop.f32.mrb[0].mxu0
        %2804 = vmatprep.mubr.f32.mxu0 0.0
        %2805 = vmatmul.mubr.f32.gmra.mrb[0].mxu0 %v2681
        %v2806 = vpop.f32.mrb[0].mxu0
        %v2807 = vadd.f32 0.0, %v2806
        %v2808 = vpop.f32.mrb[0].mxu0
        %2809 = vmatprep.mubr.f32.mxu0 0.0
        %2810 = vmatmul.mubr.f32.gmra.mrb[0].mxu0 %v2684
        %v2811 = vpop.f32.mrb[0].mxu0
        %v2812 = vadd.f32 0.0, %v2811
        %v2813 = vpop.f32.mrb[0].mxu0
        %2814 = vmatprep.mubr.f32.mxu0 0.0
        %2815 = vmatmul.mubr.f32.gmra.mrb[0].mxu0 %v2687
        %v2816 = vpop.f32.mrb[0].mxu0
        %v2817 = vadd.f32 0.0, %v2816
        %v2818 = vpop.f32.mrb[0].mxu0
        %2819 = vmatprep.mubr.f32.mxu0 0.0
        %2820 = vmatmul.mubr.f32.gmra.mrb[0].mxu0 %v2690
        %v2821 = vpop.f32.mrb[0].mxu0
        %v2822 = vadd.f32 0.0, %v2821
        %v2823 = vpop.f32.mrb[0].mxu0
        %2824 = vmatprep.mubr.f32.mxu0 0.0
        %2825 = vmatmul.mubr.f32.gmra.mrb[0].mxu0 %v2693
        %v2826 = vpop.f32.mrb[0].mxu0
        %v2827 = vadd.f32 0.0, %v2826
        %v2828 = vpop.f32.mrb[0].mxu0
        %2829 = vmatprep.mubr.f32.mxu0 0.0
        %2830 = vmatmul.mubr.f32.gmra.mrb[0].mxu0 %v2696
        %v2831 = vpop.f32.mrb[0].mxu0
        %v2832 = vadd.f32 0.0, %v2831
        %v2833 = vpop.f32.mrb[0].mxu0
        %2834 = vmatprep.mubr.f32.mxu0 0.0
        %2835 = vmatmul.mubr.f32.gmra.mrb[0].mxu0 %v2699
        %v2836 = vpop.f32.mrb[0].mxu0
        %v2837 = vadd.f32 0.0, %v2836
        %v2838 = vpop.f32.mrb[0].mxu0
        %2839 = vmatprep.mubr.f32.mxu0 0.0
        %2840 = vmatmul.mubr.f32.gmra.mrb[0].mxu0 %v2702
        %v2841 = vpop.f32.mrb[0].mxu0
        %v2842 = vadd.f32 0.0, %v2841
        %v2843 = vpop.f32.mrb[0].mxu0
        %2844 = vmatprep.mubr.f32.mxu0 0.0
        %2845 = vmatmul.mubr.f32.gmra.mrb[0].mxu0 %v2705
        %v2846 = vpop.f32.mrb[0].mxu0
        %v2847 = vadd.f32 0.0, %v2846
        %v2848 = vpop.f32.mrb[0].mxu0
        %2849 = vmatprep.mubr.f32.mxu0 0.0
        %2850 = vmatmul.mubr.f32.gmra.mrb[0].mxu0 %v2708
        %v2851 = vpop.f32.mrb[0].mxu0
        %v2852 = vadd.f32 0.0, %v2851
        %v2853 = vpop.f32.mrb[0].mxu0
        %2854 = vdwg.mxu0
        %v2855 = vmul.f32 %v2777, 0.25
        %v2856 = vmul.f32 %v2782, 0.25
        %v2857 = vmul.f32 %v2787, 0.25
        %v2858 = vmul.f32 %v2792, 0.25
        %v2859 = vmul.f32 %v2797, 0.25
        %v2860 = vmul.f32 %v2802, 0.25
        %v2861 = vmul.f32 %v2807, 0.25
        %v2862 = vmul.f32 %v2812, 0.25
        %v2863 = vmul.f32 %v2817, 0.25
        %v2864 = vmul.f32 %v2822, 0.25
        %v2865 = vmul.f32 %v2827, 0.25
        %v2866 = vmul.f32 %v2832, 0.25
        %v2867 = vmul.f32 %v2837, 0.25
        %v2868 = vmul.f32 %v2842, 0.25
        %v2869 = vmul.f32 %v2847, 0.25
        %v2870 = vmul.f32 %v2852, 0.25
        %v2871 = vadd.f32 %v2855, %v1513
        %v2872 = vadd.f32 %v2856, %v1513
        %v2873 = vadd.f32 %v2857, %v1513
        %v2874 = vadd.f32 %v2858, %v1513
        %v2875 = vadd.f32 %v2859, %v1513
        %v2876 = vadd.f32 %v2860, %v1513
        %v2877 = vadd.f32 %v2861, %v1513
        %v2878 = vadd.f32 %v2862, %v1513
        %v2879 = vadd.f32 %v2863, %v1513
        %v2880 = vadd.f32 %v2864, %v1513
        %v2881 = vadd.f32 %v2865, %v1513
        %v2882 = vadd.f32 %v2866, %v1513
        %v2883 = vadd.f32 %v2867, %v1513
        %v2884 = vadd.f32 %v2868, %v1513
        %v2885 = vadd.f32 %v2869, %v1513
        %v2886 = vadd.f32 %v2870, %v1513
        %2887 = vmax.xlane.f32.xlu0 %v2871
        %v2888 = vpop.xlane.xlu0 %2887
        %2889 = vmax.xlane.f32.xlu0 %v2872
        %v2890 = vpop.xlane.xlu0 %2889
        %2891 = vmax.xlane.f32.xlu0 %v2873
        %v2892 = vpop.xlane.xlu0 %2891
        %2893 = vmax.xlane.f32.xlu0 %v2874
        %v2894 = vpop.xlane.xlu0 %2893
        %2895 = vmax.xlane.f32.xlu0 %v2875
        %v2896 = vpop.xlane.xlu0 %2895
        %2897 = vmax.xlane.f32.xlu0 %v2876
        %v2898 = vpop.xlane.xlu0 %2897
        %2899 = vmax.xlane.f32.xlu0 %v2877
        %v2900 = vpop.xlane.xlu0 %2899
        %2901 = vmax.xlane.f32.xlu0 %v2878
        %v2902 = vpop.xlane.xlu0 %2901
        %2903 = vmax.xlane.f32.xlu0 %v2879
        %v2904 = vpop.xlane.xlu0 %2903
        %2905 = vmax.xlane.f32.xlu0 %v2880
        %v2906 = vpop.xlane.xlu0 %2905
        %2907 = vmax.xlane.f32.xlu0 %v2881
        %v2908 = vpop.xlane.xlu0 %2907
        %2909 = vmax.xlane.f32.xlu0 %v2882
        %v2910 = vpop.xlane.xlu0 %2909
        %2911 = vmax.xlane.f32.xlu0 %v2883
        %v2912 = vpop.xlane.xlu0 %2911
        %2913 = vmax.xlane.f32.xlu0 %v2884
        %v2914 = vpop.xlane.xlu0 %2913
        %2915 = vmax.xlane.f32.xlu0 %v2885
        %v2916 = vpop.xlane.xlu0 %2915
        %2917 = vmax.xlane.f32.xlu0 %v2886
        %v2918 = vpop.xlane.xlu0 %2917
        %v2919 = vsub.f32 %v2871, %v2888
        %v2920 = vsub.f32 %v2872, %v2890
        %v2921 = vsub.f32 %v2873, %v2892
        %v2922 = vsub.f32 %v2874, %v2894
        %v2923 = vsub.f32 %v2875, %v2896
        %v2924 = vsub.f32 %v2876, %v2898
        %v2925 = vsub.f32 %v2877, %v2900
        %v2926 = vsub.f32 %v2878, %v2902
        %v2927 = vsub.f32 %v2879, %v2904
        %v2928 = vsub.f32 %v2880, %v2906
        %v2929 = vsub.f32 %v2881, %v2908
        %v2930 = vsub.f32 %v2882, %v2910
        %v2931 = vsub.f32 %v2883, %v2912
        %v2932 = vsub.f32 %v2884, %v2914
        %v2933 = vsub.f32 %v2885, %v2916
        %v2934 = vsub.f32 %v2886, %v2918
        %v2935 = vmul.f32 %v2919, 1.442695
        %v2936 = vpow.pop %v2935
        %v2937 = vmul.f32 %v2920, 1.442695
        %v2938 = vpow.pop %v2937
        %v2939 = vmul.f32 %v2921, 1.442695
        %v2940 = vpow.pop %v2939
        %v2941 = vmul.f32 %v2922, 1.442695
        %v2942 = vpow.pop %v2941
        %v2943 = vmul.f32 %v2923, 1.442695
        %v2944 = vpow.pop %v2943
        %v2945 = vmul.f32 %v2924, 1.442695
        %v2946 = vpow.pop %v2945
        %v2947 = vmul.f32 %v2925, 1.442695
        %v2948 = vpow.pop %v2947
        %v2949 = vmul.f32 %v2926, 1.442695
        %v2950 = vpow.pop %v2949
        %v2951 = vmul.f32 %v2927, 1.442695
        %v2952 = vpow.pop %v2951
        %v2953 = vmul.f32 %v2928, 1.442695
        %v2954 = vpow.pop %v2953
        %v2955 = vmul.f32 %v2929, 1.442695
        %v2956 = vpow.pop %v2955
        %v2957 = vmul.f32 %v2930, 1.442695
        %v2958 = vpow.pop %v2957
        %v2959 = vmul.f32 %v2931, 1.442695
        %v2960 = vpow.pop %v2959
        %v2961 = vmul.f32 %v2932, 1.442695
        %v2962 = vpow.pop %v2961
        %v2963 = vmul.f32 %v2933, 1.442695
        %v2964 = vpow.pop %v2963
        %v2965 = vmul.f32 %v2934, 1.442695
        %v2966 = vpow.pop %v2965
        %2967 = vadd.xlane.f32.xlu0 %v2936
        %v2968 = vpop.xlane.xlu0 %2967
        %2969 = vadd.xlane.f32.xlu0 %v2938
        %v2970 = vpop.xlane.xlu0 %2969
        %2971 = vadd.xlane.f32.xlu0 %v2940
        %v2972 = vpop.xlane.xlu0 %2971
        %2973 = vadd.xlane.f32.xlu0 %v2942
        %v2974 = vpop.xlane.xlu0 %2973
        %2975 = vadd.xlane.f32.xlu0 %v2944
        %v2976 = vpop.xlane.xlu0 %2975
        %2977 = vadd.xlane.f32.xlu0 %v2946
        %v2978 = vpop.xlane.xlu0 %2977
        %2979 = vadd.xlane.f32.xlu0 %v2948
        %v2980 = vpop.xlane.xlu0 %2979
        %2981 = vadd.xlane.f32.xlu0 %v2950
        %v2982 = vpop.xlane.xlu0 %2981
        %2983 = vadd.xlane.f32.xlu0 %v2952
        %v2984 = vpop.xlane.xlu0 %2983
        %2985 = vadd.xlane.f32.xlu0 %v2954
        %v2986 = vpop.xlane.xlu0 %2985
        %2987 = vadd.xlane.f32.xlu0 %v2956
        %v2988 = vpop.xlane.xlu0 %2987
        %2989 = vadd.xlane.f32.xlu0 %v2958
        %v2990 = vpop.xlane.xlu0 %2989
        %2991 = vadd.xlane.f32.xlu0 %v2960
        %v2992 = vpop.xlane.xlu0 %2991
        %2993 = vadd.xlane.f32.xlu0 %v2962
        %v2994 = vpop.xlane.xlu0 %2993
        %2995 = vadd.xlane.f32.xlu0 %v2964
        %v2996 = vpop.xlane.xlu0 %2995
        %2997 = vadd.xlane.f32.xlu0 %v2966
        %v2998 = vpop.xlane.xlu0 %2997
        %v2999 = vrcp.pop %v2968
        %v3000 = vrcp.pop %v2970
        %v3001 = vrcp.pop %v2972
        %v3002 = vrcp.pop %v2974
        %v3003 = vrcp.pop %v2976
        %v3004 = vrcp.pop %v2978
        %v3005 = vrcp.pop %v2980
        %v3006 = vrcp.pop %v2982
        %v3007 = vrcp.pop %v2984
        %v3008 = vrcp.pop %v2986
        %v3009 = vrcp.pop %v2988
        %v3010 = vrcp.pop %v2990
        %v3011 = vrcp.pop %v2992
        %v3012 = vrcp.pop %v2994
        %v3013 = vrcp.pop %v2996
        %v3014 = vrcp.pop %v2998
        %v3015 = vmul.f32 %v2936, %v2999
        %v3016 = vmul.f32 %v2938, %v3000
        %v3017 = vmul.f32 %v2940, %v3001
        %v3018 = vmul.f32 %v2942, %v3002
        %v3019 = vmul.f32 %v2944, %v3003
        %v3020 = vmul.f32 %v2946, %v3004
        %v3021 = vmul.f32 %v2948, %v3005
        %v3022 = vmul.f32 %v2950, %v3006
        %v3023 = vmul.f32 %v2952, %v3007
        %v3024 = vmul.f32 %v2954, %v3008
        %v3025 = vmul.f32 %v2956, %v3009
        %v3026 = vmul.f32 %v2958, %v3010
        %v3027 = vmul.f32 %v2960, %v3011
        %v3028 = vmul.f32 %v2962, %v3012
        %v3029 = vmul.f32 %v2964, %v3013
        %v3030 = vmul.f32 %v2966, %v3014
        %v3031 = vmul.f32 %v3015, %v1679
        %v3032 = vmul.f32 %v3016, %v1679
        %v3033 = vmul.f32 %v3017, %v1679
        %v3034 = vmul.f32 %v3018, %v1679
        %v3035 = vmul.f32 %v3019, %v1679
        %v3036 = vmul.f32 %v3020, %v1679
        %v3037 = vmul.f32 %v3021, %v1679
        %v3038 = vmul.f32 %v3022, %v1679
        %v3039 = vmul.f32 %v3023, %v1679
        %v3040 = vmul.f32 %v3024, %v1679
        %v3041 = vmul.f32 %v3025, %v1679
        %v3042 = vmul.f32 %v3026, %v1679
        %v3043 = vmul.f32 %v3027, %v1679
        %v3044 = vmul.f32 %v3028, %v1679
        %v3045 = vmul.f32 %v3029, %v1679
        %v3046 = vmul.f32 %v3030, %v1679
        %3047 = vmatprep.subr.mxu0 0.0
        %3048 = vmatpush1.xpose.msra.mxu0 %v3031
        %3049 = vmatprep.subr.mxu0 0.0
        %3050 = vmatpush1.xpose.msra.mxu0 %v3032
        %3051 = vmatprep.subr.mxu0 0.0
        %3052 = vmatpush1.xpose.msra.mxu0 %v3033
        %3053 = vmatprep.subr.mxu0 0.0
        %3054 = vmatpush1.xpose.msra.mxu0 %v3034
        %3055 = vmatprep.subr.mxu0 0.0
        %3056 = vmatpush1.xpose.msra.mxu0 %v3035
        %3057 = vmatprep.subr.mxu0 0.0
        %3058 = vmatpush1.xpose.msra.mxu0 %v3036
        %3059 = vmatprep.subr.mxu0 0.0
        %3060 = vmatpush1.xpose.msra.mxu0 %v3037
        %3061 = vmatprep.subr.mxu0 0.0
        %3062 = vmatpush1.xpose.msra.mxu0 %v3038
        %3063 = vmatprep.subr.mxu0 0.0
        %3064 = vmatpush1.xpose.msra.mxu0 %v3039
        %3065 = vmatprep.subr.mxu0 0.0
        %3066 = vmatpush1.xpose.msra.mxu0 %v3040
        %3067 = vmatprep.subr.mxu0 0.0
        %3068 = vmatpush1.xpose.msra.mxu0 %v3041
        %3069 = vmatprep.subr.mxu0 0.0
        %3070 = vmatpush1.xpose.msra.mxu0 %v3042
        %3071 = vmatprep.subr.mxu0 0.0
        %3072 = vmatpush1.xpose.msra.mxu0 %v3043
        %3073 = vmatprep.subr.mxu0 0.0
        %3074 = vmatpush1.xpose.msra.mxu0 %v3044
        %3075 = vmatprep.subr.mxu0 0.0
        %3076 = vmatpush1.xpose.msra.mxu0 %v3045
        %3077 = vmatprep.subr.mxu0 0.0
        %3078 = vmatpush1.xpose.msra.mxu0 %v3046
        %3079 = vmatprep.subr.mxu0 0.0
        %3080 = vmatpush1.xpose.msra.mxu0 0.0
        %3081 = vmatprep.subr.mxu0 0.0
        %3082 = vmatpush1.xpose.msra.mxu0 0.0
        %3083 = vmatprep.subr.mxu0 0.0
        %3084 = vmatpush1.xpose.msra.mxu0 0.0
        %3085 = vmatprep.subr.mxu0 0.0
        %3086 = vmatpush1.xpose.msra.mxu0 0.0
        %3087 = vmatprep.subr.mxu0 0.0
        %3088 = vmatpush1.xpose.msra.mxu0 0.0
        %3089 = vmatprep.subr.mxu0 0.0
        %3090 = vmatpush1.xpose.msra.mxu0 0.0
        %3091 = vmatprep.subr.mxu0 0.0
        %3092 = vmatpush1.xpose.msra.mxu0 0.0
        %3093 = vmatprep.subr.mxu0 0.0
        %3094 = vmatpush1.xpose.msra.mxu0 0.0
        %3095 = vmatprep.subr.mxu0 0.0
        %3096 = vmatpush1.xpose.msra.mxu0 0.0
        %3097 = vmatprep.subr.mxu0 0.0
        %3098 = vmatpush1.xpose.msra.mxu0 0.0
        %3099 = vmatprep.subr.mxu0 0.0
        %3100 = vmatpush1.xpose.msra.mxu0 0.0
        %3101 = vmatprep.subr.mxu0 0.0
        %3102 = vmatpush1.xpose.msra.mxu0 0.0
        %3103 = vmatprep.subr.mxu0 0.0
        %3104 = vmatpush1.xpose.msra.mxu0 0.0
        %3105 = vmatprep.subr.mxu0 0.0
        %3106 = vmatpush1.xpose.msra.mxu0 0.0
        %3107 = vmatprep.subr.mxu0 0.0
        %3108 = vmatpush1.xpose.msra.mxu0 0.0
        %3109 = vmatprep.subr.mxu0 0.0
        %3110 = vmatpush1.xpose.msra.mxu0 0.0
        %3111 = vmatprep.mubr.f32.mxu0 0.0
        %3112 = vmatmul.mubr.f32.gmra.mrb[0].mxu0 %v2622
        %v3113 = vpop.f32.mrb[0].mxu0
        %v3114 = vadd.f32 0.0, %v3113
        %v3115 = vpop.f32.mrb[0].mxu0
        %3116 = vmatprep.mubr.f32.mxu0 0.0
        %3117 = vmatmul.mubr.f32.gmra.mrb[0].mxu0 %v2627
        %v3118 = vpop.f32.mrb[0].mxu0
        %v3119 = vadd.f32 0.0, %v3118
        %v3120 = vpop.f32.mrb[0].mxu0
        %3121 = vdwg.mxu0
        %s3122 = scalar_lea.vmem %s9, 32
        %v3123 = vld [vmem:[%s3122] sm:$0xff]
        %v3124 = vld [vmem:[%s3122 + $0x8] sm:$0xff]
        %v3125 = vld [vmem:[%s3122 + $0x10] sm:$0xff]
        %v3126 = vld [vmem:[%s3122 + $0x18] sm:$0xff]
        %v3127 = vmax.f32 %v3114, 0.0
        %v3128 = vmax.f32 %v3119, 0.0
        %s3129 = scalar_lea.vmem %s10, 32
        %v3130 = vld [vmem:[%s3129] sm:$0xff]
        %v3131 = vld [vmem:[%s3129 + $0x8] sm:$0xff]
        %v3132 = vld [vmem:[%s3129 + $0x10] sm:$0xff]
        %v3133 = vld [vmem:[%s3129 + $0x18] sm:$0xff]
        %3135 = vset.pattern.permute.xlu0 0
        %3136 = vperm.xlu0 %3135, %v3130
        %v3137 = vpop.permute.xlu0 %3136
        %3140 = vset.pattern.permute.xlu0 0
        %3141 = vperm.xlu0 %3140, %v3131
        %v3142 = vpop.permute.xlu0 %3141
        %3145 = vset.pattern.permute.xlu0 0
        %3146 = vperm.xlu0 %3145, %v3132
        %v3147 = vpop.permute.xlu0 %3146
        %3150 = vset.pattern.permute.xlu0 0
        %3151 = vperm.xlu0 %3150, %v3133
        %v3152 = vpop.permute.xlu0 %3151
        %v3155 = vsel %vm1299, %v3123, 0
        %v3158 = vsel %vm1299, %v3124, 0
        %v3161 = vsel %vm1299, %v3125, 0
        %v3164 = vsel %vm1299, %v3126, 0
        %3166 = vmatprep.subr.mxu0 0.0
        %3167 = vmatpush1.msra.mxu0 %v3127
        %3168 = vmatprep.subr.mxu0 0.0
        %3169 = vmatpush1.msra.mxu0 %v3128
        %3170 = vmatprep.subr.mxu0 0.0
        %3171 = vmatpush1.msra.mxu0 0.0
        %3172 = vmatprep.subr.mxu0 0.0
        %3173 = vmatpush1.msra.mxu0 0.0
        %3174 = vmatprep.subr.mxu0 0.0
        %3175 = vmatpush1.msra.mxu0 0.0
        %3176 = vmatprep.subr.mxu0 0.0
        %3177 = vmatpush1.msra.mxu0 0.0
        %3178 = vmatprep.subr.mxu0 0.0
        %3179 = vmatpush1.msra.mxu0 0.0
        %3180 = vmatprep.subr.mxu0 0.0
        %3181 = vmatpush1.msra.mxu0 0.0
        %3182 = vmatprep.subr.mxu0 0.0
        %3183 = vmatpush1.msra.mxu0 0.0
        %3184 = vmatprep.subr.mxu0 0.0
        %3185 = vmatpush1.msra.mxu0 0.0
        %3186 = vmatprep.subr.mxu0 0.0
        %3187 = vmatpush1.msra.mxu0 0.0
        %3188 = vmatprep.subr.mxu0 0.0
        %3189 = vmatpush1.msra.mxu0 0.0
        %3190 = vmatprep.subr.mxu0 0.0
        %3191 = vmatpush1.msra.mxu0 0.0
        %3192 = vmatprep.subr.mxu0 0.0
        %3193 = vmatpush1.msra.mxu0 0.0
        %3194 = vmatprep.subr.mxu0 0.0
        %3195 = vmatpush1.msra.mxu0 0.0
        %3196 = vmatprep.subr.mxu0 0.0
        %3197 = vmatpush1.msra.mxu0 0.0
        %3198 = vmatprep.subr.mxu0 0.0
        %3199 = vmatpush1.msra.mxu0 0.0
        %3200 = vmatprep.subr.mxu0 0.0
        %3201 = vmatpush1.msra.mxu0 0.0
        %3202 = vmatprep.subr.mxu0 0.0
        %3203 = vmatpush1.msra.mxu0 0.0
        %3204 = vmatprep.subr.mxu0 0.0
        %3205 = vmatpush1.msra.mxu0 0.0
        %3206 = vmatprep.subr.mxu0 0.0
        %3207 = vmatpush1.msra.mxu0 0.0
        %3208 = vmatprep.subr.mxu0 0.0
        %3209 = vmatpush1.msra.mxu0 0.0
        %3210 = vmatprep.subr.mxu0 0.0
        %3211 = vmatpush1.msra.mxu0 0.0
        %3212 = vmatprep.subr.mxu0 0.0
        %3213 = vmatpush1.msra.mxu0 0.0
        %3214 = vmatprep.subr.mxu0 0.0
        %3215 = vmatpush1.msra.mxu0 0.0
        %3216 = vmatprep.subr.mxu0 0.0
        %3217 = vmatpush1.msra.mxu0 0.0
        %3218 = vmatprep.subr.mxu0 0.0
        %3219 = vmatpush1.msra.mxu0 0.0
        %3220 = vmatprep.subr.mxu0 0.0
        %3221 = vmatpush1.msra.mxu0 0.0
        %3222 = vmatprep.subr.mxu0 0.0
        %3223 = vmatpush1.msra.mxu0 0.0
        %3224 = vmatprep.subr.mxu0 0.0
        %3225 = vmatpush1.msra.mxu0 0.0
        %3226 = vmatprep.subr.mxu0 0.0
        %3227 = vmatpush1.msra.mxu0 0.0
        %3228 = vmatprep.subr.mxu0 0.0
        %3229 = vmatpush1.msra.mxu0 0.0
        %3230 = vmatprep.mubr.f32.mxu0 0.0
        %3231 = vmatmul.mubr.f32.gmra.mrb[0].mxu0 %v3155
        %v3232 = vpop.f32.mrb[0].mxu0
        %v3233 = vadd.f32 %v3137, %v3232
        %v3234 = vpop.f32.mrb[0].mxu0
        %3235 = vmatprep.mubr.f32.mxu0 0.0
        %3236 = vmatmul.mubr.f32.gmra.mrb[0].mxu0 %v3158
        %v3237 = vpop.f32.mrb[0].mxu0
        %v3238 = vadd.f32 %v3142, %v3237
        %v3239 = vpop.f32.mrb[0].mxu0
        %3240 = vmatprep.mubr.f32.mxu0 0.0
        %3241 = vmatmul.mubr.f32.gmra.mrb[0].mxu0 %v3161
        %v3242 = vpop.f32.mrb[0].mxu0
        %v3243 = vadd.f32 %v3147, %v3242
        %v3244 = vpop.f32.mrb[0].mxu0
        %3245 = vmatprep.mubr.f32.mxu0 0.0
        %3246 = vmatmul.mubr.f32.gmra.mrb[0].mxu0 %v3164
        %v3247 = vpop.f32.mrb[0].mxu0
        %v3248 = vadd.f32 %v3152, %v3247
        %v3249 = vpop.f32.mrb[0].mxu0
        %3250 = vdwg.mxu0
        %v3251 = vmul.f32 %v3233, %v1679
        %v3252 = vmul.f32 %v3238, %v1679
        %v3253 = vmul.f32 %v3243, %v1679
        %v3254 = vmul.f32 %v3248, %v1679
        %v3255 = vmul.f32 %v3251, 0.8
        %v3256 = vmul.f32 %v3252, 0.8
        %v3257 = vmul.f32 %v3253, 0.8
        %v3258 = vmul.f32 %v3254, 0.8
        %v3259 = vadd.f32 %v3255, %v2417
        %v3260 = vadd.f32 %v3256, %v2418
        %v3261 = vadd.f32 %v3257, %v2419
        %v3262 = vadd.f32 %v3258, %v2420
        %s3263 = scalar_lea.vmem %s11, 32
        %v3264 = vld [vmem:[%s3263] sm:$0xff]
        %v3265 = vld [vmem:[%s3263 + $0x8] sm:$0xff]
        %v3266 = vld [vmem:[%s3263 + $0x10] sm:$0xff]
        %v3267 = vld [vmem:[%s3263 + $0x18] sm:$0xff]
        %v3269 = vsel %vm726, %v3264, 0
        %v3272 = vsel %vm726, %v3265, 0
        %v3275 = vsel %vm726, %v3266, 0
        %v3278 = vsel %vm726, %v3267, 0
        %3280 = vmatprep.subr.mxu0 0.0
        %3281 = vmatpush1.msra.mxu0 %v3259
        %3282 = vmatprep.subr.mxu0 0.0
        %3283 = vmatpush1.msra.mxu0 %v3260
        %3284 = vmatprep.subr.mxu0 0.0
        %3285 = vmatpush1.msra.mxu0 %v3261
        %3286 = vmatprep.subr.mxu0 0.0
        %3287 = vmatpush1.msra.mxu0 %v3262
        %3288 = vmatprep.subr.mxu0 0.0
        %3289 = vmatpush1.msra.mxu0 0.0
        %3290 = vmatprep.subr.mxu0 0.0
        %3291 = vmatpush1.msra.mxu0 0.0
        %3292 = vmatprep.subr.mxu0 0.0
        %3293 = vmatpush1.msra.mxu0 0.0
        %3294 = vmatprep.subr.mxu0 0.0
        %3295 = vmatpush1.msra.mxu0 0.0
        %3296 = vmatprep.subr.mxu0 0.0
        %3297 = vmatpush1.msra.mxu0 0.0
        %3298 = vmatprep.subr.mxu0 0.0
        %3299 = vmatpush1.msra.mxu0 0.0
        %3300 = vmatprep.subr.mxu0 0.0
        %3301 = vmatpush1.msra.mxu0 0.0
        %3302 = vmatprep.subr.mxu0 0.0
        %3303 = vmatpush1.msra.mxu0 0.0
        %3304 = vmatprep.subr.mxu0 0.0
        %3305 = vmatpush1.msra.mxu0 0.0
        %3306 = vmatprep.subr.mxu0 0.0
        %3307 = vmatpush1.msra.mxu0 0.0
        %3308 = vmatprep.subr.mxu0 0.0
        %3309 = vmatpush1.msra.mxu0 0.0
        %3310 = vmatprep.subr.mxu0 0.0
        %3311 = vmatpush1.msra.mxu0 0.0
        %3312 = vmatprep.subr.mxu0 0.0
        %3313 = vmatpush1.msra.mxu0 0.0
        %3314 = vmatprep.subr.mxu0 0.0
        %3315 = vmatpush1.msra.mxu0 0.0
        %3316 = vmatprep.subr.mxu0 0.0
        %3317 = vmatpush1.msra.mxu0 0.0
        %3318 = vmatprep.subr.mxu0 0.0
        %3319 = vmatpush1.msra.mxu0 0.0
        %3320 = vmatprep.subr.mxu0 0.0
        %3321 = vmatpush1.msra.mxu0 0.0
        %3322 = vmatprep.subr.mxu0 0.0
        %3323 = vmatpush1.msra.mxu0 0.0
        %3324 = vmatprep.subr.mxu0 0.0
        %3325 = vmatpush1.msra.mxu0 0.0
        %3326 = vmatprep.subr.mxu0 0.0
        %3327 = vmatpush1.msra.mxu0 0.0
        %3328 = vmatprep.subr.mxu0 0.0
        %3329 = vmatpush1.msra.mxu0 0.0
        %3330 = vmatprep.subr.mxu0 0.0
        %3331 = vmatpush1.msra.mxu0 0.0
        %3332 = vmatprep.subr.mxu0 0.0
        %3333 = vmatpush1.msra.mxu0 0.0
        %3334 = vmatprep.subr.mxu0 0.0
        %3335 = vmatpush1.msra.mxu0 0.0
        %3336 = vmatprep.subr.mxu0 0.0
        %3337 = vmatpush1.msra.mxu0 0.0
        %3338 = vmatprep.subr.mxu0 0.0
        %3339 = vmatpush1.msra.mxu0 0.0
        %3340 = vmatprep.subr.mxu0 0.0
        %3341 = vmatpush1.msra.mxu0 0.0
        %3342 = vmatprep.subr.mxu0 0.0
        %3343 = vmatpush1.msra.mxu0 0.0
        %3344 = vmatprep.mubr.f32.mxu0 0.0
        %3345 = vmatmul.mubr.f32.gmra.mrb[0].mxu0 %v3269
        %v3346 = vpop.f32.mrb[0].mxu0
        %v3347 = vadd.f32 0.0, %v3346
        %v3348 = vpop.f32.mrb[0].mxu0
        %3349 = vmatprep.mubr.f32.mxu0 0.0
        %3350 = vmatmul.mubr.f32.gmra.mrb[0].mxu0 %v3272
        %v3351 = vpop.f32.mrb[0].mxu0
        %v3352 = vadd.f32 0.0, %v3351
        %v3353 = vpop.f32.mrb[0].mxu0
        %3354 = vmatprep.mubr.f32.mxu0 0.0
        %3355 = vmatmul.mubr.f32.gmra.mrb[0].mxu0 %v3275
        %v3356 = vpop.f32.mrb[0].mxu0
        %v3357 = vadd.f32 0.0, %v3356
        %v3358 = vpop.f32.mrb[0].mxu0
        %3359 = vmatprep.mubr.f32.mxu0 0.0
        %3360 = vmatmul.mubr.f32.gmra.mrb[0].mxu0 %v3278
        %v3361 = vpop.f32.mrb[0].mxu0
        %v3362 = vadd.f32 0.0, %v3361
        %v3363 = vpop.f32.mrb[0].mxu0
        %3364 = vdwg.mxu0
        %v3365 = vadd.f32 %v2044, %v3347
        %v3366 = vadd.f32 %v2045, %v3352
        %v3367 = vadd.f32 %v2046, %v3357
        %v3368 = vadd.f32 %v2047, %v3362
        %s3369 = scalar_lea.vmem %s12, 32
        %v3370 = vld [vmem:[%s3369] sm:$0xff]
        %v3371 = vld [vmem:[%s3369 + $0x8] sm:$0xff]
        %v3372 = vld [vmem:[%s3369 + $0x10] sm:$0xff]
        %v3373 = vld [vmem:[%s3369 + $0x18] sm:$0xff]
        %3375 = vset.pattern.permute.xlu0 0
        %3376 = vperm.xlu0 %3375, %v3370
        %v3377 = vpop.permute.xlu0 %3376
        %3380 = vset.pattern.permute.xlu0 0
        %3381 = vperm.xlu0 %3380, %v3371
        %v3382 = vpop.permute.xlu0 %3381
        %3385 = vset.pattern.permute.xlu0 0
        %3386 = vperm.xlu0 %3385, %v3372
        %v3387 = vpop.permute.xlu0 %3386
        %3390 = vset.pattern.permute.xlu0 0
        %3391 = vperm.xlu0 %3390, %v3373
        %v3392 = vpop.permute.xlu0 %3391
        %v3394 = vadd.f32 %v3365, %v3377
        %v3395 = vadd.f32 %v3366, %v3382
        %v3396 = vadd.f32 %v3367, %v3387
        %v3397 = vadd.f32 %v3368, %v3392
        %v3398 = vmul.f32 %v3394, %v1679
        %v3399 = vmul.f32 %v3395, %v1679
        %v3400 = vmul.f32 %v3396, %v1679
        %v3401 = vmul.f32 %v3397, %v1679
        %3402 = vst [vmem:[%s541] sm:$0xff] %v3398
        %3403 = vst [vmem:[%s541 + $0x8] sm:$0xff] %v3399
        %3404 = vst [vmem:[%s541 + $0x10] sm:$0xff] %v3400
        %3405 = vst [vmem:[%s541 + $0x18] sm:$0xff] %v3401
        %v3406 = vld [vmem:[%s13] sm:$0x3f]
        %v3407 = vld [vmem:[%s14] sm:$0x3f]
        %3409 = vset.pattern.permute.xlu0 0
        %3410 = vperm.xlu0 %3409, %v3407
        %v3411 = vpop.permute.xlu0 %3410
        %v3414 = vsel %vm726, %v3406, 0
        %3416 = vmatprep.subr.mxu0 0.0
        %3417 = vmatpush1.msra.mxu0 %v3398
        %3418 = vmatprep.subr.mxu0 0.0
        %3419 = vmatpush1.msra.mxu0 %v3399
        %3420 = vmatprep.subr.mxu0 0.0
        %3421 = vmatpush1.msra.mxu0 %v3400
        %3422 = vmatprep.subr.mxu0 0.0
        %3423 = vmatpush1.msra.mxu0 %v3401
        %3424 = vmatprep.subr.mxu0 0.0
        %3425 = vmatpush1.msra.mxu0 0.0
        %3426 = vmatprep.subr.mxu0 0.0
        %3427 = vmatpush1.msra.mxu0 0.0
        %3428 = vmatprep.subr.mxu0 0.0
        %3429 = vmatpush1.msra.mxu0 0.0
        %3430 = vmatprep.subr.mxu0 0.0
        %3431 = vmatpush1.msra.mxu0 0.0
        %3432 = vmatprep.subr.mxu0 0.0
        %3433 = vmatpush1.msra.mxu0 0.0
        %3434 = vmatprep.subr.mxu0 0.0
        %3435 = vmatpush1.msra.mxu0 0.0
        %3436 = vmatprep.subr.mxu0 0.0
        %3437 = vmatpush1.msra.mxu0 0.0
        %3438 = vmatprep.subr.mxu0 0.0
        %3439 = vmatpush1.msra.mxu0 0.0
        %3440 = vmatprep.subr.mxu0 0.0
        %3441 = vmatpush1.msra.mxu0 0.0
        %3442 = vmatprep.subr.mxu0 0.0
        %3443 = vmatpush1.msra.mxu0 0.0
        %3444 = vmatprep.subr.mxu0 0.0
        %3445 = vmatpush1.msra.mxu0 0.0
        %3446 = vmatprep.subr.mxu0 0.0
        %3447 = vmatpush1.msra.mxu0 0.0
        %3448 = vmatprep.subr.mxu0 0.0
        %3449 = vmatpush1.msra.mxu0 0.0
        %3450 = vmatprep.subr.mxu0 0.0
        %3451 = vmatpush1.msra.mxu0 0.0
        %3452 = vmatprep.subr.mxu0 0.0
        %3453 = vmatpush1.msra.mxu0 0.0
        %3454 = vmatprep.subr.mxu0 0.0
        %3455 = vmatpush1.msra.mxu0 0.0
        %3456 = vmatprep.subr.mxu0 0.0
        %3457 = vmatpush1.msra.mxu0 0.0
        %3458 = vmatprep.subr.mxu0 0.0
        %3459 = vmatpush1.msra.mxu0 0.0
        %3460 = vmatprep.subr.mxu0 0.0
        %3461 = vmatpush1.msra.mxu0 0.0
        %3462 = vmatprep.subr.mxu0 0.0
        %3463 = vmatpush1.msra.mxu0 0.0
        %3464 = vmatprep.subr.mxu0 0.0
        %3465 = vmatpush1.msra.mxu0 0.0
        %3466 = vmatprep.subr.mxu0 0.0
        %3467 = vmatpush1.msra.mxu0 0.0
        %3468 = vmatprep.subr.mxu0 0.0
        %3469 = vmatpush1.msra.mxu0 0.0
        %3470 = vmatprep.subr.mxu0 0.0
        %3471 = vmatpush1.msra.mxu0 0.0
        %3472 = vmatprep.subr.mxu0 0.0
        %3473 = vmatpush1.msra.mxu0 0.0
        %3474 = vmatprep.subr.mxu0 0.0
        %3475 = vmatpush1.msra.mxu0 0.0
        %3476 = vmatprep.subr.mxu0 0.0
        %3477 = vmatpush1.msra.mxu0 0.0
        %3478 = vmatprep.subr.mxu0 0.0
        %3479 = vmatpush1.msra.mxu0 0.0
        %3480 = vmatprep.mubr.f32.mxu0 0.0
        %3481 = vmatmul.mubr.f32.gmra.mrb[0].mxu0 %v3414
        %v3482 = vpop.f32.mrb[0].mxu0
        %v3483 = vadd.f32 %v3411, %v3482
        %v3484 = vpop.f32.mrb[0].mxu0
        %3485 = vdwg.mxu0
        %v3486 = vmul.f32 %v3483, %v1679
        %3487 = vst [vmem:[%s555] sm:$0x3f] %v3486
        %p3488 = scmp.lt.s32.totalorder %s31, 1
        %s3489 = scalar_select %p3488, %s31, 1
        %s3490 = smul.addr %s3489, 8
        %s3491 = scalar_lea.vmem %s15, %s3490
        %s3492 = sand.u32 %s395, 1
        %s3493 = scalar_lea.sflag [#allocation3], %s3492
        %s3494 = sand.u32 %s395, 1
        %s3495 = smul.addr %s3494, 32
        %s3496 = scalar_lea.vmem [#allocation2], %s3495
        // Predicated region
        $region81: #{tpu_custom_call.1} parent=79 // pred_check
          %p3497 = pneg %p379
        $region82: #{tpu_custom_call.1} parent=79 // pred_check_branch
          %3499 = sbr.rel (%p3497) target = $region84
        $region83: #{tpu_custom_call.1} parent=79 // pred_region
          _
        $region84: #{tpu_custom_call.1} parent=79 // pred_fallthru
          _
        // Predicated region
        $region85: #{tpu_custom_call.1} parent=79 // pred_check
          %p3500 = pneg %p405
        $region86: #{tpu_custom_call.1} parent=79 // pred_check_branch
          %3502 = sbr.rel (%p3500) target = $region88
        $region87: #{tpu_custom_call.1} parent=79 // pred_region
          %s3504 = ssub.s32 512, 512
          %3505 = vsyncadd %s3493, %s3504
          %s3506 = smul.addr %s31, 4
          %s3507 = smul.addr %s3506, 128
          %s3508 = scalar_lea.hbm %s16, %s3507
          %s3509 = sshll.u32 %s3496, 4
          %s3510 = int_to_ptr.vmem [resolvable:$true] %s3509
          %3515 = dma.vmem_to_hbm [thread:$0]  %s3510, 512, %s3508, %s3493, 128, 128, 8
        $region88: #{tpu_custom_call.1} parent=79 // pred_fallthru
          _
      $region80: #{tpu_custom_call.1} parent=5 // pred_fallthru
        _
      %p3516 = scmp.le.s32.totalorder 2, %s26
      // Predicated region
      $region89: #{tpu_custom_call.1} parent=5 // pred_check
        %p3517 = pneg %p3516
      $region90: #{tpu_custom_call.1} parent=5 // pred_check_branch
        %3519 = sbr.rel (%p3517) target = $region92
      $region91: #{tpu_custom_call.1} parent=5 // pred_region
        %s3520 = ssub.s32 %s26, 2
        // Predicated region
        $region93: #{tpu_custom_call.1} parent=91 // pred_check
          %p3521 = pneg %p385
        $region94: #{tpu_custom_call.1} parent=91 // pred_check_branch
          %3523 = sbr.rel (%p3521) target = $region96
        $region95: #{tpu_custom_call.1} parent=91 // pred_region
          %p3524 = scmp.lt.s32.totalorder %s32, 1
          %s3525 = scalar_select %p3524, %s32, 1
          %s3526 = smul.addr %s3525, 8
          %s3527 = scalar_lea.vmem %s15, %s3526
        $region96: #{tpu_custom_call.1} parent=91 // pred_fallthru
          _
        // Predicated region
        $region97: #{tpu_custom_call.1} parent=91 // pred_check
          %p3528 = pneg %p411
        $region98: #{tpu_custom_call.1} parent=91 // pred_check_branch
          %3530 = sbr.rel (%p3528) target = $region100
        $region99: #{tpu_custom_call.1} parent=91 // pred_region
          %s3531 = sand.u32 %s396, 1
          %s3532 = scalar_lea.sflag [#allocation3], %s3531
          %s3533 = sand.u32 %s396, 1
          %s3534 = smul.addr %s3533, 32
          %s3535 = scalar_lea.vmem [#allocation2], %s3534
          %3536 = dma.done %s3532, 512
        $region100: #{tpu_custom_call.1} parent=91 // pred_fallthru
          _
      $region92: #{tpu_custom_call.1} parent=5 // pred_fallthru
        _
    $region6: #{tpu_custom_call.1} parent=1 // loop_footer
      %s30 = sadd.s32 1, %s26
    $region7: #{tpu_custom_call.1} parent=1 // loop_footer_branch
      %25 = sbr.rel target = $region3
    $region8: #{tpu_custom_call.1} parent=1 // loop_exit
      _
    %3537 = vsyncpa [#allocation3], 1
    %s3538 = scalar_lea.sflag [#allocation3], 1
    %3539 = vsyncpa %s3538, 1

</llo_original>
